<compile_context>
chip_gen: v7x
topology: tpu7x:2x2x1
jax: 0.10.0
libtpu: 0.0.40
codegen_flags: <defaults>
</compile_context>

<pallas_src>
import numpy as np
import jax
import jax.numpy as jnp
from jax import lax
from jax.experimental import pallas as pl
from jax.experimental.pallas import tpu as pltpu


# ------------------------- constant gather matrix --------------------------- #

def _conv2_gather_matrix():
    """(256, 2304) 0/1 matrix.  Row q = conv1-pooled position (q//14, q%14) of the
    14x14x32 map h1 (rows 196..255 are the padded/junk h1 columns -> all zero).
    Column = t*256 + ab*64 + p with tap t=3*dh+dw, pool phase ab=2*a+b, pooled
    output position p=7*ph+pw (p in [49,64) padded -> zero columns)."""
    R = np.zeros((256, 9 * 256), dtype=np.float32)
    for dh in range(3):
        for dw in range(3):
            t = 3 * dh + dw
            for a in range(2):
                for b in range(2):
                    ab = 2 * a + b
                    for ph in range(7):
                        for pw in range(7):
                            y = 2 * ph + a + dh - 1   # conv2 input row in h1
                            x = 2 * pw + b + dw - 1   # conv2 input col in h1
                            if 0 <= y < 14 and 0 <= x < 14:
                                R[14 * y + x, t * 256 + ab * 64 + 7 * ph + pw] = 1.0
    return R


# ----------------------------- Pallas kernels ------------------------------- #

def _conv_stack_kernel(p1_ref, w1t_ref, b1_ref, g_ref, w2t_ref, b2_ref, o_ref):
    # p1:  (1, 9, 1024) bf16  conv1 patches, taps x (4 phases * 256 pooled positions)
    # w1t: (32, 9) bf16       conv1 weights (cout, tap)
    # b1:  (32, 1) f32
    # g:   (256, 2304) bf16   constant conv2 im2col gather matrix
    # w2t: (9, 64, 32) bf16   conv2 weights per tap (cout, cin)
    # b2:  (64, 1) f32
    # o:   (1, 64, 64) bf16   pooled conv2 map (cout, 7*7 positions padded to 64)
    #
    # conv1 + bias + ReLU for all 4 pool phases in one matmul.
    y1 = jnp.dot(w1t_ref[...], p1_ref[0], preferred_element_type=jnp.float32)
    y1 = jnp.maximum(y1 + b1_ref[...], 0.0)                          # (32, 1024)
    # 2x2/2 max-pool = max over the four aligned 256-lane phase blocks.
    h1 = jnp.maximum(jnp.maximum(y1[:, 0:256], y1[:, 256:512]),
                     jnp.maximum(y1[:, 512:768], y1[:, 768:1024]))   # (32, 256)
    # In-kernel im2col for conv2: one MXU matmul against the 0/1 gather matrix.
    pat = jnp.dot(h1.astype(jnp.bfloat16), g_ref[...],
                  preferred_element_type=jnp.float32)                # (32, 2304)
    pat = pat.astype(jnp.bfloat16)
    # conv2 as 9 accumulated tap matmuls, f32 accumulator.
    acc = jnp.zeros((64, 256), jnp.float32)
    for t in range(9):
        acc = acc + jnp.dot(w2t_ref[t], pat[:, t * 256:(t + 1) * 256],
                            preferred_element_type=jnp.float32)
    y2 = jnp.maximum(acc + b2_ref[...], 0.0)                         # (64, 256)
    # 2x2/2 max-pool over the four 64-lane phase blocks.
    h2 = jnp.maximum(jnp.maximum(y2[:, 0:64], y2[:, 64:128]),
                     jnp.maximum(y2[:, 128:192], y2[:, 192:256]))    # (64, 64)
    o_ref[0] = h2.astype(jnp.bfloat16)


def conv_stack(p1, pk):
    B = p1.shape[0]
    return pl.pallas_call(
        _conv_stack_kernel,
        out_shape=jax.ShapeDtypeStruct((B, 64, 64), jnp.bfloat16),
        grid=(B,),
        in_specs=[
            pl.BlockSpec((1, 9, 1024), lambda b: (b, 0, 0)),
            pl.BlockSpec((32, 9),      lambda b: (0, 0)),
            pl.BlockSpec((32, 1),      lambda b: (0, 0)),
            pl.BlockSpec((256, 2304),  lambda b: (0, 0)),
            pl.BlockSpec((9, 64, 32),  lambda b: (0, 0, 0)),
            pl.BlockSpec((64, 1),      lambda b: (0, 0)),
        ],
        out_specs=pl.BlockSpec((1, 64, 64), lambda b: (b, 0, 0)),
        compiler_params=pltpu.CompilerParams(dimension_semantics=("parallel",)),
    )(p1, pk["w1t"], pk["b1c"], pk["R"], pk["w2t"], pk["b2c"])


def _mlp_kernel(x_ref, w1_ref, b1_ref, w2_ref, b2_ref, o_ref):
    # x: (B, 4096) bf16 flattened pooled conv2 map (flatten permutation + position
    # padding already folded into w1); w1: (4096,128) bf16; w2: (128,10) bf16.
    x = x_ref[...]
    h = jnp.dot(x, w1_ref[...], preferred_element_type=jnp.float32) + b1_ref[...]
    h = jnp.maximum(h, 0.0)                                          # ReLU
    # TODO(synk): Dropout(p=0.5) is identity in eval mode; train-mode torch-RNG
    # parity is not implemented.
    logits = jnp.dot(h.astype(jnp.bfloat16), w2_ref[...],
                     preferred_element_type=jnp.float32) + b2_ref[...]
    m = jnp.max(logits, axis=-1, keepdims=True)                      # stable log_softmax
    s = logits - m
    lse = jnp.log(jnp.sum(jnp.exp(s), axis=-1, keepdims=True))
    o_ref[...] = s - lse


def mlp_head(flat, pk):
    B = flat.shape[0]
    return pl.pallas_call(
        _mlp_kernel,
        out_shape=jax.ShapeDtypeStruct((B, 10), jnp.float32),
    )(flat, pk["wfc1"], pk["bfc1"], pk["wfc2"], pk["bfc2"])


# ------------------------------ JAX glue ------------------------------------ #

def pack_params(params):
    """One-time host-side repacking of the PyTorch-layout weights."""
    f32, bf16 = jnp.float32, jnp.bfloat16
    # fc1: torch flatten order is (c, h, w) -> row c*49 + p ; our kernel-1 output is
    # (c, p) with p padded to 64, so pad the position axis 49->64 with zero rows.
    wfc1 = jnp.pad(params["wfc1"].reshape(64, 49, 128),
                   ((0, 0), (0, 15), (0, 0))).reshape(4096, 128)
    return {
        "w1t":  jnp.asarray(params["w1"].reshape(9, 32).T, bf16),                 # (32,9)
        "b1c":  jnp.asarray(params["b1"].reshape(32, 1), f32),
        "w2t":  jnp.asarray(jnp.transpose(params["w2"].reshape(9, 32, 64),
                                          (0, 2, 1)), bf16),                      # (9,64,32)
        "b2c":  jnp.asarray(params["b2"].reshape(64, 1), f32),
        "R":    jnp.asarray(_conv2_gather_matrix(), bf16),                        # (256,2304)
        "wfc1": jnp.asarray(wfc1, bf16),                                          # (4096,128)
        "bfc1": jnp.asarray(params["bfc1"].reshape(1, 128), f32),
        "wfc2": jnp.asarray(params["wfc2"], bf16),                                # (128,10)
        "bfc2": jnp.asarray(params["bfc2"].reshape(1, 10), f32),
    }


def _conv1_patches(x_img):
    """(B,28,28) image -> (B, 9, 1024) bf16 conv1 patches with pooled positions on
    the lane axis: column layout = phase(2*pa+pb)*256 + (14*qh+qw), zero-padded."""
    B = x_img.shape[0]
    xp = jnp.pad(x_img, ((0, 0), (1, 3), (1, 3)))                     # (B,32,32)
    tap_blocks = []
    for dh in range(3):
        for dw in range(3):
            phase_cols = []
            for pa in range(2):
                for pb in range(2):
                    s = xp[:, pa + dh: pa + dh + 28: 2,
                           pb + dw: pb + dw + 28: 2]                  # (B,14,14)
                    s = s.reshape(B, 196)
                    phase_cols.append(jnp.pad(s, ((0, 0), (0, 60))))  # (B,256)
            tap_blocks.append(jnp.concatenate(phase_cols, axis=-1))   # (B,1024)
    return jnp.stack(tap_blocks, axis=1).astype(jnp.bfloat16)         # (B,9,1024)


def mynet_forward(x_nchw, packed):
    B = x_nchw.shape[0]
    p1 = _conv1_patches(x_nchw.reshape(B, 28, 28))
    h2 = conv_stack(p1, packed)                 # (B, 64, 64) bf16 (Pallas kernel 1)
    flat = h2.reshape(B, 64 * 64)               # free reshape, torch (c,h,w) order
    return mlp_head(flat, packed)               # (B, 10) f32   (Pallas kernel 2)


def mynet_reference(x_nchw, params):
    """Pure-JAX f32 reference (lax.conv / reduce_window)."""
    x = jnp.transpose(x_nchw, (0, 2, 3, 1))
    dn = ("NHWC", "HWIO", "NHWC")

    def conv_relu(h, w, b):
        y = lax.conv_general_dilated(h, w, (1, 1), "SAME", dimension_numbers=dn)
        return jnp.maximum(y + b, 0.0)

    def pool(h):
        return lax.reduce_window(h, -jnp.inf, lax.max,
                                 (1, 2, 2, 1), (1, 2, 2, 1), "VALID")

    h = pool(conv_relu(x, params["w1"], params["b1"]))
    h = pool(conv_relu(h, params["w2"], params["b2"]))
    flat = jnp.transpose(h, (0, 3, 1, 2)).reshape(x.shape[0], -1)
    hh = jnp.maximum(flat @ params["wfc1"] + params["bfc1"], 0.0)
    logits = hh @ params["wfc2"] + params["bfc2"]
    return jax.nn.log_softmax(logits, axis=1)


def init_params(key):
    def unif(k, shape, fan_in):
        bound = 1.0 / (fan_in ** 0.5)
        return jax.random.uniform(k, shape, jnp.float32, -bound, bound)

    ks = jax.random.split(key, 8)
    return {
        # conv weights stored HWIO (kh, kw, cin, cout)
        "w1": unif(ks[0], (3, 3, 1, 32), 9 * 1),
        "b1": unif(ks[1], (32,), 9 * 1),
        "w2": unif(ks[2], (3, 3, 32, 64), 9 * 32),
        "b2": unif(ks[3], (64,), 9 * 32),
        # fc weights stored (in, out), i.e. torch weight transposed
        "wfc1": unif(ks[4], (3136, 128), 3136),
        "bfc1": unif(ks[5], (128,), 3136),
        "wfc2": unif(ks[6], (128, 10), 128),
        "bfc2": unif(ks[7], (10,), 128),
    }


if __name__ == "__main__":
    key = jax.random.PRNGKey(0)
    k_x, k_p = jax.random.split(key)
    # MNIST-style MyNet input: NCHW (B=2, C=1, H=W=28) so fc1 sees 3136 features.
    x = jax.random.normal(k_x, (2, 1, 28, 28), dtype=jnp.float32)
    params = init_params(k_p)
    packed = pack_params(params)

    fwd = jax.jit(mynet_forward)
    out = jax.block_until_ready(fwd(x, packed))
    ref = jax.block_until_ready(mynet_reference(x, params))

    assert out.shape == (2, 10), out.shape
    assert jnp.allclose(out, ref, atol=5e-2, rtol=5e-2), (
        f"max abs diff = {jnp.max(jnp.abs(out - ref))}")
    print("KERNEL_OK")
</pallas_src>

<mosaic_0001>
module attributes {stable_mosaic.version = 11 : i64} {
  func.func @_conv_stack_kernel(%arg0: i32, %arg1: memref<1x9x1024xbf16, #tpu.memory_space<vmem>>, %arg2: memref<32x9xbf16, #tpu.memory_space<vmem>>, %arg3: memref<32x1xf32, #tpu.memory_space<vmem>>, %arg4: memref<256x2304xbf16, #tpu.memory_space<vmem>>, %arg5: memref<9x64x32xbf16, #tpu.memory_space<vmem>>, %arg6: memref<64x1xf32, #tpu.memory_space<vmem>>, %arg7: memref<1x64x64xbf16, #tpu.memory_space<vmem>>) attributes {dimension_semantics = [#tpu.dimension_semantics<parallel>], iteration_bounds = array<i64: 2>, scalar_prefetch = 0 : i64, scratch_operands = 0 : i64, tpu.core_type = #tpu.core_type<tc>, window_params = [{transform_indices = @transform_0, window_bounds = array<i64: 1, 9, 1024>}, {pipeline_mode = #tpu.pipeline_mode<synchronous>, transform_indices = @transform_1, window_bounds = array<i64: 32, 9>}, {pipeline_mode = #tpu.pipeline_mode<synchronous>, transform_indices = @transform_2, window_bounds = array<i64: 32, 1>}, {pipeline_mode = #tpu.pipeline_mode<synchronous>, transform_indices = @transform_3, window_bounds = array<i64: 256, 2304>}, {pipeline_mode = #tpu.pipeline_mode<synchronous>, transform_indices = @transform_4, window_bounds = array<i64: 9, 64, 32>}, {pipeline_mode = #tpu.pipeline_mode<synchronous>, transform_indices = @transform_5, window_bounds = array<i64: 64, 1>}, {transform_indices = @transform_6, window_bounds = array<i64: 1, 64, 64>}]} {
    %c0 = arith.constant 0 : index
    %c0_0 = arith.constant 0 : index
    %0 = vector.load %arg2[%c0, %c0_0] : memref<32x9xbf16, #tpu.memory_space<vmem>>, vector<32x9xbf16>
    %c0_1 = arith.constant 0 : index
    %c0_2 = arith.constant 0 : index
    %c0_3 = arith.constant 0 : index
    %1 = vector.load %arg1[%c0_1, %c0_2, %c0_3] : memref<1x9x1024xbf16, #tpu.memory_space<vmem>>, vector<1x9x1024xbf16>
    %2 = vector.shape_cast %1 : vector<1x9x1024xbf16> to vector<9x1024xbf16>
    %cst = arith.constant dense<0.000000e+00> : vector<32x1024xf32>
    %3 = tpu.matmul %0, %2, %cst {dimension_numbers = #tpu.dot_dimension_numbers<[1], [0], [0], [1], [0, 0, 1, 1], [], []>} : vector<32x9xbf16>, vector<9x1024xbf16>, vector<32x1024xf32> -> vector<32x1024xf32>
    %c0_4 = arith.constant 0 : index
    %c0_5 = arith.constant 0 : index
    %4 = vector.load %arg3[%c0_4, %c0_5] : memref<32x1xf32, #tpu.memory_space<vmem>>, vector<32x1xf32>
    %5 = vector.broadcast %4 : vector<32x1xf32> to vector<32x1024xf32>
    %6 = arith.addf %3, %5 : vector<32x1024xf32>
    %cst_6 = arith.constant 0.000000e+00 : f32
    %7 = vector.broadcast %cst_6 : f32 to vector<32x1024xf32>
    %8 = arith.maximumf %6, %7 : vector<32x1024xf32>
    %9 = vector.extract_strided_slice %8 {offsets = [0, 0], sizes = [32, 256], strides = [1, 1]} : vector<32x1024xf32> to vector<32x256xf32>
    %10 = vector.extract_strided_slice %8 {offsets = [0, 256], sizes = [32, 256], strides = [1, 1]} : vector<32x1024xf32> to vector<32x256xf32>
    %11 = arith.maximumf %9, %10 : vector<32x256xf32>
    %12 = vector.extract_strided_slice %8 {offsets = [0, 512], sizes = [32, 256], strides = [1, 1]} : vector<32x1024xf32> to vector<32x256xf32>
    %13 = vector.extract_strided_slice %8 {offsets = [0, 768], sizes = [32, 256], strides = [1, 1]} : vector<32x1024xf32> to vector<32x256xf32>
    %14 = arith.maximumf %12, %13 : vector<32x256xf32>
    %15 = arith.maximumf %11, %14 : vector<32x256xf32>
    %16 = arith.truncf %15 : vector<32x256xf32> to vector<32x256xbf16>
    %c0_7 = arith.constant 0 : index
    %c0_8 = arith.constant 0 : index
    %17 = vector.load %arg4[%c0_7, %c0_8] : memref<256x2304xbf16, #tpu.memory_space<vmem>>, vector<256x2304xbf16>
    %cst_9 = arith.constant dense<0.000000e+00> : vector<32x2304xf32>
    %18 = tpu.matmul %16, %17, %cst_9 {dimension_numbers = #tpu.dot_dimension_numbers<[1], [0], [0], [1], [0, 0, 1, 1], [], []>} : vector<32x256xbf16>, vector<256x2304xbf16>, vector<32x2304xf32> -> vector<32x2304xf32>
    %19 = arith.truncf %18 : vector<32x2304xf32> to vector<32x2304xbf16>
    %cst_10 = arith.constant 0.000000e+00 : f32
    %20 = vector.broadcast %cst_10 : f32 to vector<64x256xf32>
    %c0_11 = arith.constant 0 : index
    %c0_12 = arith.constant 0 : index
    %c0_13 = arith.constant 0 : index
    %21 = vector.load %arg5[%c0_11, %c0_12, %c0_13] : memref<9x64x32xbf16, #tpu.memory_space<vmem>>, vector<1x64x32xbf16>
    %22 = vector.shape_cast %21 : vector<1x64x32xbf16> to vector<64x32xbf16>
    %23 = vector.extract_strided_slice %19 {offsets = [0, 0], sizes = [32, 256], strides = [1, 1]} : vector<32x2304xbf16> to vector<32x256xbf16>
    %cst_14 = arith.constant dense<0.000000e+00> : vector<64x256xf32>
    %24 = tpu.matmul %22, %23, %cst_14 {dimension_numbers = #tpu.dot_dimension_numbers<[1], [0], [0], [1], [0, 0, 1, 1], [], []>} : vector<64x32xbf16>, vector<32x256xbf16>, vector<64x256xf32> -> vector<64x256xf32>
    %25 = arith.addf %20, %24 : vector<64x256xf32>
    %c1 = arith.constant 1 : index
    %c0_15 = arith.constant 0 : index
    %c0_16 = arith.constant 0 : index
    %26 = vector.load %arg5[%c1, %c0_15, %c0_16] : memref<9x64x32xbf16, #tpu.memory_space<vmem>>, vector<1x64x32xbf16>
    %27 = vector.shape_cast %26 : vector<1x64x32xbf16> to vector<64x32xbf16>
    %28 = vector.extract_strided_slice %19 {offsets = [0, 256], sizes = [32, 256], strides = [1, 1]} : vector<32x2304xbf16> to vector<32x256xbf16>
    %cst_17 = arith.constant dense<0.000000e+00> : vector<64x256xf32>
    %29 = tpu.matmul %27, %28, %cst_17 {dimension_numbers = #tpu.dot_dimension_numbers<[1], [0], [0], [1], [0, 0, 1, 1], [], []>} : vector<64x32xbf16>, vector<32x256xbf16>, vector<64x256xf32> -> vector<64x256xf32>
    %30 = arith.addf %25, %29 : vector<64x256xf32>
    %c2 = arith.constant 2 : index
    %c0_18 = arith.constant 0 : index
    %c0_19 = arith.constant 0 : index
    %31 = vector.load %arg5[%c2, %c0_18, %c0_19] : memref<9x64x32xbf16, #tpu.memory_space<vmem>>, vector<1x64x32xbf16>
    %32 = vector.shape_cast %31 : vector<1x64x32xbf16> to vector<64x32xbf16>
    %33 = vector.extract_strided_slice %19 {offsets = [0, 512], sizes = [32, 256], strides = [1, 1]} : vector<32x2304xbf16> to vector<32x256xbf16>
    %cst_20 = arith.constant dense<0.000000e+00> : vector<64x256xf32>
    %34 = tpu.matmul %32, %33, %cst_20 {dimension_numbers = #tpu.dot_dimension_numbers<[1], [0], [0], [1], [0, 0, 1, 1], [], []>} : vector<64x32xbf16>, vector<32x256xbf16>, vector<64x256xf32> -> vector<64x256xf32>
    %35 = arith.addf %30, %34 : vector<64x256xf32>
    %c3 = arith.constant 3 : index
    %c0_21 = arith.constant 0 : index
    %c0_22 = arith.constant 0 : index
    %36 = vector.load %arg5[%c3, %c0_21, %c0_22] : memref<9x64x32xbf16, #tpu.memory_space<vmem>>, vector<1x64x32xbf16>
    %37 = vector.shape_cast %36 : vector<1x64x32xbf16> to vector<64x32xbf16>
    %38 = vector.extract_strided_slice %19 {offsets = [0, 768], sizes = [32, 256], strides = [1, 1]} : vector<32x2304xbf16> to vector<32x256xbf16>
    %cst_23 = arith.constant dense<0.000000e+00> : vector<64x256xf32>
    %39 = tpu.matmul %37, %38, %cst_23 {dimension_numbers = #tpu.dot_dimension_numbers<[1], [0], [0], [1], [0, 0, 1, 1], [], []>} : vector<64x32xbf16>, vector<32x256xbf16>, vector<64x256xf32> -> vector<64x256xf32>
    %40 = arith.addf %35, %39 : vector<64x256xf32>
    %c4 = arith.constant 4 : index
    %c0_24 = arith.constant 0 : index
    %c0_25 = arith.constant 0 : index
    %41 = vector.load %arg5[%c4, %c0_24, %c0_25] : memref<9x64x32xbf16, #tpu.memory_space<vmem>>, vector<1x64x32xbf16>
    %42 = vector.shape_cast %41 : vector<1x64x32xbf16> to vector<64x32xbf16>
    %43 = vector.extract_strided_slice %19 {offsets = [0, 1024], sizes = [32, 256], strides = [1, 1]} : vector<32x2304xbf16> to vector<32x256xbf16>
    %cst_26 = arith.constant dense<0.000000e+00> : vector<64x256xf32>
    %44 = tpu.matmul %42, %43, %cst_26 {dimension_numbers = #tpu.dot_dimension_numbers<[1], [0], [0], [1], [0, 0, 1, 1], [], []>} : vector<64x32xbf16>, vector<32x256xbf16>, vector<64x256xf32> -> vector<64x256xf32>
    %45 = arith.addf %40, %44 : vector<64x256xf32>
    %c5 = arith.constant 5 : index
    %c0_27 = arith.constant 0 : index
    %c0_28 = arith.constant 0 : index
    %46 = vector.load %arg5[%c5, %c0_27, %c0_28] : memref<9x64x32xbf16, #tpu.memory_space<vmem>>, vector<1x64x32xbf16>
    %47 = vector.shape_cast %46 : vector<1x64x32xbf16> to vector<64x32xbf16>
    %48 = vector.extract_strided_slice %19 {offsets = [0, 1280], sizes = [32, 256], strides = [1, 1]} : vector<32x2304xbf16> to vector<32x256xbf16>
    %cst_29 = arith.constant dense<0.000000e+00> : vector<64x256xf32>
    %49 = tpu.matmul %47, %48, %cst_29 {dimension_numbers = #tpu.dot_dimension_numbers<[1], [0], [0], [1], [0, 0, 1, 1], [], []>} : vector<64x32xbf16>, vector<32x256xbf16>, vector<64x256xf32> -> vector<64x256xf32>
    %50 = arith.addf %45, %49 : vector<64x256xf32>
    %c6 = arith.constant 6 : index
    %c0_30 = arith.constant 0 : index
    %c0_31 = arith.constant 0 : index
    %51 = vector.load %arg5[%c6, %c0_30, %c0_31] : memref<9x64x32xbf16, #tpu.memory_space<vmem>>, vector<1x64x32xbf16>
    %52 = vector.shape_cast %51 : vector<1x64x32xbf16> to vector<64x32xbf16>
    %53 = vector.extract_strided_slice %19 {offsets = [0, 1536], sizes = [32, 256], strides = [1, 1]} : vector<32x2304xbf16> to vector<32x256xbf16>
    %cst_32 = arith.constant dense<0.000000e+00> : vector<64x256xf32>
    %54 = tpu.matmul %52, %53, %cst_32 {dimension_numbers = #tpu.dot_dimension_numbers<[1], [0], [0], [1], [0, 0, 1, 1], [], []>} : vector<64x32xbf16>, vector<32x256xbf16>, vector<64x256xf32> -> vector<64x256xf32>
    %55 = arith.addf %50, %54 : vector<64x256xf32>
    %c7 = arith.constant 7 : index
    %c0_33 = arith.constant 0 : index
    %c0_34 = arith.constant 0 : index
    %56 = vector.load %arg5[%c7, %c0_33, %c0_34] : memref<9x64x32xbf16, #tpu.memory_space<vmem>>, vector<1x64x32xbf16>
    %57 = vector.shape_cast %56 : vector<1x64x32xbf16> to vector<64x32xbf16>
    %58 = vector.extract_strided_slice %19 {offsets = [0, 1792], sizes = [32, 256], strides = [1, 1]} : vector<32x2304xbf16> to vector<32x256xbf16>
    %cst_35 = arith.constant dense<0.000000e+00> : vector<64x256xf32>
    %59 = tpu.matmul %57, %58, %cst_35 {dimension_numbers = #tpu.dot_dimension_numbers<[1], [0], [0], [1], [0, 0, 1, 1], [], []>} : vector<64x32xbf16>, vector<32x256xbf16>, vector<64x256xf32> -> vector<64x256xf32>
    %60 = arith.addf %55, %59 : vector<64x256xf32>
    %c8 = arith.constant 8 : index
    %c0_36 = arith.constant 0 : index
    %c0_37 = arith.constant 0 : index
    %61 = vector.load %arg5[%c8, %c0_36, %c0_37] : memref<9x64x32xbf16, #tpu.memory_space<vmem>>, vector<1x64x32xbf16>
    %62 = vector.shape_cast %61 : vector<1x64x32xbf16> to vector<64x32xbf16>
    %63 = vector.extract_strided_slice %19 {offsets = [0, 2048], sizes = [32, 256], strides = [1, 1]} : vector<32x2304xbf16> to vector<32x256xbf16>
    %cst_38 = arith.constant dense<0.000000e+00> : vector<64x256xf32>
    %64 = tpu.matmul %62, %63, %cst_38 {dimension_numbers = #tpu.dot_dimension_numbers<[1], [0], [0], [1], [0, 0, 1, 1], [], []>} : vector<64x32xbf16>, vector<32x256xbf16>, vector<64x256xf32> -> vector<64x256xf32>
    %65 = arith.addf %60, %64 : vector<64x256xf32>
    %c0_39 = arith.constant 0 : index
    %c0_40 = arith.constant 0 : index
    %66 = vector.load %arg6[%c0_39, %c0_40] : memref<64x1xf32, #tpu.memory_space<vmem>>, vector<64x1xf32>
    %67 = vector.broadcast %66 : vector<64x1xf32> to vector<64x256xf32>
    %68 = arith.addf %65, %67 : vector<64x256xf32>
    %cst_41 = arith.constant 0.000000e+00 : f32
    %69 = vector.broadcast %cst_41 : f32 to vector<64x256xf32>
    %70 = arith.maximumf %68, %69 : vector<64x256xf32>
    %71 = vector.extract_strided_slice %70 {offsets = [0, 0], sizes = [64, 64], strides = [1, 1]} : vector<64x256xf32> to vector<64x64xf32>
    %72 = vector.extract_strided_slice %70 {offsets = [0, 64], sizes = [64, 64], strides = [1, 1]} : vector<64x256xf32> to vector<64x64xf32>
    %73 = arith.maximumf %71, %72 : vector<64x64xf32>
    %74 = vector.extract_strided_slice %70 {offsets = [0, 128], sizes = [64, 64], strides = [1, 1]} : vector<64x256xf32> to vector<64x64xf32>
    %75 = vector.extract_strided_slice %70 {offsets = [0, 192], sizes = [64, 64], strides = [1, 1]} : vector<64x256xf32> to vector<64x64xf32>
    %76 = arith.maximumf %74, %75 : vector<64x64xf32>
    %77 = arith.maximumf %73, %76 : vector<64x64xf32>
    %78 = arith.truncf %77 : vector<64x64xf32> to vector<64x64xbf16>
    %c0_42 = arith.constant 0 : index
    %c0_43 = arith.constant 0 : index
    %c0_44 = arith.constant 0 : index
    %79 = vector.load %arg7[%c0_42, %c0_43, %c0_44] : memref<1x64x64xbf16, #tpu.memory_space<vmem>>, vector<1x64x64xbf16>
    %80 = vector.shape_cast %79 : vector<1x64x64xbf16> to vector<64x64xbf16>
    %81 = vector.shape_cast %78 : vector<64x64xbf16> to vector<1x64x64xbf16>
    tpu.vector_store %arg7[%c0_42, %c0_43, %c0_44], %81 {strides = array<i32>} : memref<1x64x64xbf16, #tpu.memory_space<vmem>>, vector<1x64x64xbf16>,
    return
  }
  func.func @transform_0(%arg0: i32) -> (i32, i32, i32) {
    %c0_i32 = arith.constant 0 : i32
    %c0_i32_0 = arith.constant 0 : i32
    %c0_i32_1 = arith.constant 0 : i32
    return %arg0, %c0_i32, %c0_i32_0 : i32, i32, i32
  }
  func.func @transform_1(%arg0: i32) -> (i32, i32) {
    %c0_i32 = arith.constant 0 : i32
    %c0_i32_0 = arith.constant 0 : i32
    %c0_i32_1 = arith.constant 0 : i32
    return %c0_i32, %c0_i32_0 : i32, i32
  }
  func.func @transform_2(%arg0: i32) -> (i32, i32) {
    %c0_i32 = arith.constant 0 : i32
    %c0_i32_0 = arith.constant 0 : i32
    %c0_i32_1 = arith.constant 0 : i32
    return %c0_i32, %c0_i32_0 : i32, i32
  }
  func.func @transform_3(%arg0: i32) -> (i32, i32) {
    %c0_i32 = arith.constant 0 : i32
    %c0_i32_0 = arith.constant 0 : i32
    %c0_i32_1 = arith.constant 0 : i32
    return %c0_i32, %c0_i32_0 : i32, i32
  }
  func.func @transform_4(%arg0: i32) -> (i32, i32, i32) {
    %c0_i32 = arith.constant 0 : i32
    %c0_i32_0 = arith.constant 0 : i32
    %c0_i32_1 = arith.constant 0 : i32
    %c0_i32_2 = arith.constant 0 : i32
    return %c0_i32, %c0_i32_0, %c0_i32_1 : i32, i32, i32
  }
  func.func @transform_5(%arg0: i32) -> (i32, i32) {
    %c0_i32 = arith.constant 0 : i32
    %c0_i32_0 = arith.constant 0 : i32
    %c0_i32_1 = arith.constant 0 : i32
    return %c0_i32, %c0_i32_0 : i32, i32
  }
  func.func @transform_6(%arg0: i32) -> (i32, i32, i32) {
    %c0_i32 = arith.constant 0 : i32
    %c0_i32_0 = arith.constant 0 : i32
    %c0_i32_1 = arith.constant 0 : i32
    return %arg0, %c0_i32, %c0_i32_0 : i32, i32, i32
  }
}

module attributes {stable_mosaic.version = 11 : i64} {
  func.func @_mlp_kernel(%arg0: memref<2x4096xbf16, #tpu.memory_space<vmem>>, %arg1: memref<4096x128xbf16, #tpu.memory_space<vmem>>, %arg2: memref<1x128xf32, #tpu.memory_space<vmem>>, %arg3: memref<128x10xbf16, #tpu.memory_space<vmem>>, %arg4: memref<1x10xf32, #tpu.memory_space<vmem>>, %arg5: memref<2x10xf32, #tpu.memory_space<vmem>>) attributes {dimension_semantics = [], scalar_prefetch = 0 : i64, scratch_operands = 0 : i64, tpu.core_type = #tpu.core_type<tc>} {
    %c0 = arith.constant 0 : index
    %c0_0 = arith.constant 0 : index
    %0 = vector.load %arg0[%c0, %c0_0] : memref<2x4096xbf16, #tpu.memory_space<vmem>>, vector<2x4096xbf16>
    %c0_1 = arith.constant 0 : index
    %c0_2 = arith.constant 0 : index
    %1 = vector.load %arg1[%c0_1, %c0_2] : memref<4096x128xbf16, #tpu.memory_space<vmem>>, vector<4096x128xbf16>
    %cst = arith.constant dense<0.000000e+00> : vector<2x128xf32>
    %2 = tpu.matmul %0, %1, %cst {dimension_numbers = #tpu.dot_dimension_numbers<[1], [0], [0], [1], [0, 0, 1, 1], [], []>} : vector<2x4096xbf16>, vector<4096x128xbf16>, vector<2x128xf32> -> vector<2x128xf32>
    %c0_3 = arith.constant 0 : index
    %c0_4 = arith.constant 0 : index
    %3 = vector.load %arg2[%c0_3, %c0_4] : memref<1x128xf32, #tpu.memory_space<vmem>>, vector<1x128xf32>
    %4 = vector.broadcast %3 : vector<1x128xf32> to vector<2x128xf32>
    %5 = arith.addf %2, %4 : vector<2x128xf32>
    %cst_5 = arith.constant 0.000000e+00 : f32
    %6 = vector.broadcast %cst_5 : f32 to vector<2x128xf32>
    %7 = arith.maximumf %5, %6 : vector<2x128xf32>
    %8 = arith.truncf %7 : vector<2x128xf32> to vector<2x128xbf16>
    %c0_6 = arith.constant 0 : index
    %c0_7 = arith.constant 0 : index
    %9 = vector.load %arg3[%c0_6, %c0_7] : memref<128x10xbf16, #tpu.memory_space<vmem>>, vector<128x10xbf16>
    %cst_8 = arith.constant dense<0.000000e+00> : vector<2x10xf32>
    %10 = tpu.matmul %8, %9, %cst_8 {dimension_numbers = #tpu.dot_dimension_numbers<[1], [0], [0], [1], [0, 0, 1, 1], [], []>} : vector<2x128xbf16>, vector<128x10xbf16>, vector<2x10xf32> -> vector<2x10xf32>
    %c0_9 = arith.constant 0 : index
    %c0_10 = arith.constant 0 : index
    %11 = vector.load %arg4[%c0_9, %c0_10] : memref<1x10xf32, #tpu.memory_space<vmem>>, vector<1x10xf32>
    %12 = vector.broadcast %11 : vector<1x10xf32> to vector<2x10xf32>
    %13 = arith.addf %10, %12 : vector<2x10xf32>
    %cst_11 = arith.constant dense<0xFF800000> : vector<2xf32>
    %14 = vector.multi_reduction <maximumf>, %13, %cst_11 [1] : vector<2x10xf32> to vector<2xf32>
    %15 = vector.shape_cast %14 : vector<2xf32> to vector<2x1xf32>
    %16 = vector.broadcast %15 : vector<2x1xf32> to vector<2x10xf32>
    %17 = arith.subf %13, %16 : vector<2x10xf32>
    %18 = math.exp %17 : vector<2x10xf32>
    %cst_12 = arith.constant dense<0.000000e+00> : vector<2xf32>
    %19 = vector.multi_reduction <add>, %18, %cst_12 [1] : vector<2x10xf32> to vector<2xf32>
    %20 = vector.shape_cast %19 : vector<2xf32> to vector<2x1xf32>
    %21 = math.log %20 : vector<2x1xf32>
    %22 = vector.broadcast %21 : vector<2x1xf32> to vector<2x10xf32>
    %23 = arith.subf %17, %22 : vector<2x10xf32>
    %c0_13 = arith.constant 0 : index
    %c0_14 = arith.constant 0 : index
    %24 = vector.load %arg5[%c0_13, %c0_14] : memref<2x10xf32, #tpu.memory_space<vmem>>, vector<2x10xf32>
    tpu.vector_store %arg5[%c0_13, %c0_14], %23 {strides = array<i32>} : memref<2x10xf32, #tpu.memory_space<vmem>>, vector<2x10xf32>,
    return
  }
}

</mosaic_0001>

<llo_original>
// kernel: mynet_forward.3
$region0: #{mynet_forward.3}
  #allocation0 [shape = 'u32[]', space=smem, size = 0x4, offset = 0x4, fixed_abs, tag = 'smem constant byte address 0x4 - core index']
  #allocation1 [shape = 'u32[144,128]{1,0:T(1,128)}', space=vmem, size = 0x12000, scoped, tag = 'internal scratch']
  %s0 = inlined_call_operand.vmem [shape: bf16[2,4096], index: 0, kind: input, shape index: {}]
  %s1 = inlined_call_operand.vmem [shape: bf16[4096,128], index: 1, kind: input, shape index: {}]
  %s2 = inlined_call_operand.vmem [shape: f32[1,128], index: 2, kind: input, shape index: {}]
  %s3 = inlined_call_operand.vmem [shape: bf16[128,10], index: 3, kind: input, shape index: {}]
  %s4 = inlined_call_operand.vmem [shape: f32[1,10], index: 4, kind: input, shape index: {}]
  %s5 = inlined_call_operand.hbm [shape: f32[2,10], index: 5, kind: output, shape index: {}]
  %s6 = sld [smem:[#allocation0]]
  $region30: #{mynet_forward.3} parent=0
    _
  %s8 = ssub.s32 1, %s6
  %s9 = scalar_select 0, %s8, %s6
  $region1: #{mynet_forward.3} parent=0
    #allocation2 [shape = 'u8[1024]{0}', space=vmem, size = 0x400, scoped, tag = 'output window, operand 0, single buffered']
    #allocation3 [shape = 's32[1]{0}', space=sflag, size = 0x4, scoped, tag = 'scoped memory for mynet_forward.3']
    %10 = vsyncpa [#allocation3], 0
    // Predicated region
    $region2: #{mynet_forward.3} parent=1 // pred_check
      _
    $region3: #{mynet_forward.3} parent=1 // pred_check_branch
      %12 = sbr.rel (0) target = $region5
    $region4: #{mynet_forward.3} parent=1 // pred_region
      _
    $region5: #{mynet_forward.3} parent=1 // pred_fallthru
      _
    // Predicated region
    $region6: #{mynet_forward.3} parent=1 // pred_check
      _
    $region7: #{mynet_forward.3} parent=1 // pred_check_branch
      %14 = sbr.rel (0) target = $region9
    $region8: #{mynet_forward.3} parent=1 // pred_region
      _
    $region9: #{mynet_forward.3} parent=1 // pred_fallthru
      _
    // Predicated region
    $region10: #{mynet_forward.3} parent=1 // pred_check
      _
    $region11: #{mynet_forward.3} parent=1 // pred_check_branch
      %16 = sbr.rel (0) target = $region13
    $region12: #{mynet_forward.3} parent=1 // pred_region
      _
    $region13: #{mynet_forward.3} parent=1 // pred_fallthru
      _
    // Predicated region
    $region14: #{mynet_forward.3} parent=1 // pred_check
      _
    $region15: #{mynet_forward.3} parent=1 // pred_check_branch
      %18 = sbr.rel (0) target = $region17
    $region16: #{mynet_forward.3} parent=1 // pred_region
      _
    $region17: #{mynet_forward.3} parent=1 // pred_fallthru
      _
    // Predicated region
    $region18: #{mynet_forward.3} parent=1 // pred_check
      _
    $region19: #{mynet_forward.3} parent=1 // pred_check_branch
      %20 = sbr.rel (0) target = $region21
    $region20: #{mynet_forward.3} parent=1 // pred_region
      _
    $region21: #{mynet_forward.3} parent=1 // pred_fallthru
      _
    %v22 = vld [vmem:[%s0] sm:$0xff]
    %v23 = vld [vmem:[%s0 + $0x8] sm:$0xff]
    %v24 = vld [vmem:[%s0 + $0x10] sm:$0xff]
    %v25 = vld [vmem:[%s0 + $0x18] sm:$0xff]
    %v26 = vld [vmem:[%s1] sm:$0xf]
    %v27 = vld [vmem:[%s1 + $0x4] sm:$0xf]
    %v28 = vld [vmem:[%s1 + $0x8] sm:$0xf]
    %v29 = vld [vmem:[%s1 + $0xc] sm:$0xf]
    %v30 = vld [vmem:[%s1 + $0x10] sm:$0xf]
    %v31 = vld [vmem:[%s1 + $0x14] sm:$0xf]
    %v32 = vld [vmem:[%s1 + $0x18] sm:$0xf]
    %v33 = vld [vmem:[%s1 + $0x1c] sm:$0xf]
    %v34 = vld [vmem:[%s1 + $0x20] sm:$0xf]
    %v35 = vld [vmem:[%s1 + $0x24] sm:$0xf]
    %v36 = vld [vmem:[%s1 + $0x28] sm:$0xf]
    %v37 = vld [vmem:[%s1 + $0x2c] sm:$0xf]
    %v38 = vld [vmem:[%s1 + $0x30] sm:$0xf]
    %v39 = vld [vmem:[%s1 + $0x34] sm:$0xf]
    %v40 = vld [vmem:[%s1 + $0x38] sm:$0xf]
    %v41 = vld [vmem:[%s1 + $0x3c] sm:$0xf]
    %v42 = vld [vmem:[%s1 + $0x40] sm:$0xf]
    %v43 = vld [vmem:[%s1 + $0x44] sm:$0xf]
    %v44 = vld [vmem:[%s1 + $0x48] sm:$0xf]
    %v45 = vld [vmem:[%s1 + $0x4c] sm:$0xf]
    %v46 = vld [vmem:[%s1 + $0x50] sm:$0xf]
    %v47 = vld [vmem:[%s1 + $0x54] sm:$0xf]
    %v48 = vld [vmem:[%s1 + $0x58] sm:$0xf]
    %v49 = vld [vmem:[%s1 + $0x5c] sm:$0xf]
    %v50 = vld [vmem:[%s1 + $0x60] sm:$0xf]
    %v51 = vld [vmem:[%s1 + $0x64] sm:$0xf]
    %v52 = vld [vmem:[%s1 + $0x68] sm:$0xf]
    %v53 = vld [vmem:[%s1 + $0x6c] sm:$0xf]
    %v54 = vld [vmem:[%s1 + $0x70] sm:$0xf]
    %v55 = vld [vmem:[%s1 + $0x74] sm:$0xf]
    %v56 = vld [vmem:[%s1 + $0x78] sm:$0xf]
    %v57 = vld [vmem:[%s1 + $0x7c] sm:$0xf]
    %v58 = vld [vmem:[%s1 + $0x80] sm:$0xf]
    %v59 = vld [vmem:[%s1 + $0x84] sm:$0xf]
    %v60 = vld [vmem:[%s1 + $0x88] sm:$0xf]
    %v61 = vld [vmem:[%s1 + $0x8c] sm:$0xf]
    %v62 = vld [vmem:[%s1 + $0x90] sm:$0xf]
    %v63 = vld [vmem:[%s1 + $0x94] sm:$0xf]
    %v64 = vld [vmem:[%s1 + $0x98] sm:$0xf]
    %v65 = vld [vmem:[%s1 + $0x9c] sm:$0xf]
    %v66 = vld [vmem:[%s1 + $0xa0] sm:$0xf]
    %v67 = vld [vmem:[%s1 + $0xa4] sm:$0xf]
    %v68 = vld [vmem:[%s1 + $0xa8] sm:$0xf]
    %v69 = vld [vmem:[%s1 + $0xac] sm:$0xf]
    %v70 = vld [vmem:[%s1 + $0xb0] sm:$0xf]
    %v71 = vld [vmem:[%s1 + $0xb4] sm:$0xf]
    %v72 = vld [vmem:[%s1 + $0xb8] sm:$0xf]
    %v73 = vld [vmem:[%s1 + $0xbc] sm:$0xf]
    %v74 = vld [vmem:[%s1 + $0xc0] sm:$0xf]
    %v75 = vld [vmem:[%s1 + $0xc4] sm:$0xf]
    %v76 = vld [vmem:[%s1 + $0xc8] sm:$0xf]
    %v77 = vld [vmem:[%s1 + $0xcc] sm:$0xf]
    %v78 = vld [vmem:[%s1 + $0xd0] sm:$0xf]
    %v79 = vld [vmem:[%s1 + $0xd4] sm:$0xf]
    %v80 = vld [vmem:[%s1 + $0xd8] sm:$0xf]
    %v81 = vld [vmem:[%s1 + $0xdc] sm:$0xf]
    %v82 = vld [vmem:[%s1 + $0xe0] sm:$0xf]
    %v83 = vld [vmem:[%s1 + $0xe4] sm:$0xf]
    %v84 = vld [vmem:[%s1 + $0xe8] sm:$0xf]
    %v85 = vld [vmem:[%s1 + $0xec] sm:$0xf]
    %v86 = vld [vmem:[%s1 + $0xf0] sm:$0xf]
    %v87 = vld [vmem:[%s1 + $0xf4] sm:$0xf]
    %v88 = vld [vmem:[%s1 + $0xf8] sm:$0xf]
    %v89 = vld [vmem:[%s1 + $0xfc] sm:$0xf]
    %v90 = vld [vmem:[%s1 + $0x100] sm:$0xf]
    %v91 = vld [vmem:[%s1 + $0x104] sm:$0xf]
    %v92 = vld [vmem:[%s1 + $0x108] sm:$0xf]
    %v93 = vld [vmem:[%s1 + $0x10c] sm:$0xf]
    %v94 = vld [vmem:[%s1 + $0x110] sm:$0xf]
    %v95 = vld [vmem:[%s1 + $0x114] sm:$0xf]
    %v96 = vld [vmem:[%s1 + $0x118] sm:$0xf]
    %v97 = vld [vmem:[%s1 + $0x11c] sm:$0xf]
    %v98 = vld [vmem:[%s1 + $0x120] sm:$0xf]
    %v99 = vld [vmem:[%s1 + $0x124] sm:$0xf]
    %v100 = vld [vmem:[%s1 + $0x128] sm:$0xf]
    %v101 = vld [vmem:[%s1 + $0x12c] sm:$0xf]
    %v102 = vld [vmem:[%s1 + $0x130] sm:$0xf]
    %v103 = vld [vmem:[%s1 + $0x134] sm:$0xf]
    %v104 = vld [vmem:[%s1 + $0x138] sm:$0xf]
    %v105 = vld [vmem:[%s1 + $0x13c] sm:$0xf]
    %v106 = vld [vmem:[%s1 + $0x140] sm:$0xf]
    %v107 = vld [vmem:[%s1 + $0x144] sm:$0xf]
    %v108 = vld [vmem:[%s1 + $0x148] sm:$0xf]
    %v109 = vld [vmem:[%s1 + $0x14c] sm:$0xf]
    %v110 = vld [vmem:[%s1 + $0x150] sm:$0xf]
    %v111 = vld [vmem:[%s1 + $0x154] sm:$0xf]
    %v112 = vld [vmem:[%s1 + $0x158] sm:$0xf]
    %v113 = vld [vmem:[%s1 + $0x15c] sm:$0xf]
    %v114 = vld [vmem:[%s1 + $0x160] sm:$0xf]
    %v115 = vld [vmem:[%s1 + $0x164] sm:$0xf]
    %v116 = vld [vmem:[%s1 + $0x168] sm:$0xf]
    %v117 = vld [vmem:[%s1 + $0x16c] sm:$0xf]
    %v118 = vld [vmem:[%s1 + $0x170] sm:$0xf]
    %v119 = vld [vmem:[%s1 + $0x174] sm:$0xf]
    %v120 = vld [vmem:[%s1 + $0x178] sm:$0xf]
    %v121 = vld [vmem:[%s1 + $0x17c] sm:$0xf]
    %v122 = vld [vmem:[%s1 + $0x180] sm:$0xf]
    %v123 = vld [vmem:[%s1 + $0x184] sm:$0xf]
    %v124 = vld [vmem:[%s1 + $0x188] sm:$0xf]
    %v125 = vld [vmem:[%s1 + $0x18c] sm:$0xf]
    %v126 = vld [vmem:[%s1 + $0x190] sm:$0xf]
    %v127 = vld [vmem:[%s1 + $0x194] sm:$0xf]
    %v128 = vld [vmem:[%s1 + $0x198] sm:$0xf]
    %v129 = vld [vmem:[%s1 + $0x19c] sm:$0xf]
    %v130 = vld [vmem:[%s1 + $0x1a0] sm:$0xf]
    %v131 = vld [vmem:[%s1 + $0x1a4] sm:$0xf]
    %v132 = vld [vmem:[%s1 + $0x1a8] sm:$0xf]
    %v133 = vld [vmem:[%s1 + $0x1ac] sm:$0xf]
    %v134 = vld [vmem:[%s1 + $0x1b0] sm:$0xf]
    %v135 = vld [vmem:[%s1 + $0x1b4] sm:$0xf]
    %v136 = vld [vmem:[%s1 + $0x1b8] sm:$0xf]
    %v137 = vld [vmem:[%s1 + $0x1bc] sm:$0xf]
    %v138 = vld [vmem:[%s1 + $0x1c0] sm:$0xf]
    %v139 = vld [vmem:[%s1 + $0x1c4] sm:$0xf]
    %v140 = vld [vmem:[%s1 + $0x1c8] sm:$0xf]
    %v141 = vld [vmem:[%s1 + $0x1cc] sm:$0xf]
    %v142 = vld [vmem:[%s1 + $0x1d0] sm:$0xf]
    %v143 = vld [vmem:[%s1 + $0x1d4] sm:$0xf]
    %v144 = vld [vmem:[%s1 + $0x1d8] sm:$0xf]
    %v145 = vld [vmem:[%s1 + $0x1dc] sm:$0xf]
    %v146 = vld [vmem:[%s1 + $0x1e0] sm:$0xf]
    %v147 = vld [vmem:[%s1 + $0x1e4] sm:$0xf]
    %v148 = vld [vmem:[%s1 + $0x1e8] sm:$0xf]
    %v149 = vld [vmem:[%s1 + $0x1ec] sm:$0xf]
    %v150 = vld [vmem:[%s1 + $0x1f0] sm:$0xf]
    %v151 = vld [vmem:[%s1 + $0x1f4] sm:$0xf]
    %v152 = vld [vmem:[%s1 + $0x1f8] sm:$0xf]
    %v153 = vld [vmem:[%s1 + $0x1fc] sm:$0xf]
    %v154 = vld [vmem:[%s1 + $0x200] sm:$0xf]
    %v155 = vld [vmem:[%s1 + $0x204] sm:$0xf]
    %v156 = vld [vmem:[%s1 + $0x208] sm:$0xf]
    %v157 = vld [vmem:[%s1 + $0x20c] sm:$0xf]
    %v158 = vld [vmem:[%s1 + $0x210] sm:$0xf]
    %v159 = vld [vmem:[%s1 + $0x214] sm:$0xf]
    %v160 = vld [vmem:[%s1 + $0x218] sm:$0xf]
    %v161 = vld [vmem:[%s1 + $0x21c] sm:$0xf]
    %v162 = vld [vmem:[%s1 + $0x220] sm:$0xf]
    %v163 = vld [vmem:[%s1 + $0x224] sm:$0xf]
    %v164 = vld [vmem:[%s1 + $0x228] sm:$0xf]
    %v165 = vld [vmem:[%s1 + $0x22c] sm:$0xf]
    %v166 = vld [vmem:[%s1 + $0x230] sm:$0xf]
    %v167 = vld [vmem:[%s1 + $0x234] sm:$0xf]
    %v168 = vld [vmem:[%s1 + $0x238] sm:$0xf]
    %v169 = vld [vmem:[%s1 + $0x23c] sm:$0xf]
    %v170 = vld [vmem:[%s1 + $0x240] sm:$0xf]
    %v171 = vld [vmem:[%s1 + $0x244] sm:$0xf]
    %v172 = vld [vmem:[%s1 + $0x248] sm:$0xf]
    %v173 = vld [vmem:[%s1 + $0x24c] sm:$0xf]
    %v174 = vld [vmem:[%s1 + $0x250] sm:$0xf]
    %v175 = vld [vmem:[%s1 + $0x254] sm:$0xf]
    %v176 = vld [vmem:[%s1 + $0x258] sm:$0xf]
    %v177 = vld [vmem:[%s1 + $0x25c] sm:$0xf]
    %v178 = vld [vmem:[%s1 + $0x260] sm:$0xf]
    %v179 = vld [vmem:[%s1 + $0x264] sm:$0xf]
    %v180 = vld [vmem:[%s1 + $0x268] sm:$0xf]
    %v181 = vld [vmem:[%s1 + $0x26c] sm:$0xf]
    %v182 = vld [vmem:[%s1 + $0x270] sm:$0xf]
    %v183 = vld [vmem:[%s1 + $0x274] sm:$0xf]
    %v184 = vld [vmem:[%s1 + $0x278] sm:$0xf]
    %v185 = vld [vmem:[%s1 + $0x27c] sm:$0xf]
    %v186 = vld [vmem:[%s1 + $0x280] sm:$0xf]
    %v187 = vld [vmem:[%s1 + $0x284] sm:$0xf]
    %v188 = vld [vmem:[%s1 + $0x288] sm:$0xf]
    %v189 = vld [vmem:[%s1 + $0x28c] sm:$0xf]
    %v190 = vld [vmem:[%s1 + $0x290] sm:$0xf]
    %v191 = vld [vmem:[%s1 + $0x294] sm:$0xf]
    %v192 = vld [vmem:[%s1 + $0x298] sm:$0xf]
    %v193 = vld [vmem:[%s1 + $0x29c] sm:$0xf]
    %v194 = vld [vmem:[%s1 + $0x2a0] sm:$0xf]
    %v195 = vld [vmem:[%s1 + $0x2a4] sm:$0xf]
    %v196 = vld [vmem:[%s1 + $0x2a8] sm:$0xf]
    %v197 = vld [vmem:[%s1 + $0x2ac] sm:$0xf]
    %v198 = vld [vmem:[%s1 + $0x2b0] sm:$0xf]
    %v199 = vld [vmem:[%s1 + $0x2b4] sm:$0xf]
    %v200 = vld [vmem:[%s1 + $0x2b8] sm:$0xf]
    %v201 = vld [vmem:[%s1 + $0x2bc] sm:$0xf]
    %v202 = vld [vmem:[%s1 + $0x2c0] sm:$0xf]
    %v203 = vld [vmem:[%s1 + $0x2c4] sm:$0xf]
    %v204 = vld [vmem:[%s1 + $0x2c8] sm:$0xf]
    %v205 = vld [vmem:[%s1 + $0x2cc] sm:$0xf]
    %v206 = vld [vmem:[%s1 + $0x2d0] sm:$0xf]
    %v207 = vld [vmem:[%s1 + $0x2d4] sm:$0xf]
    %v208 = vld [vmem:[%s1 + $0x2d8] sm:$0xf]
    %v209 = vld [vmem:[%s1 + $0x2dc] sm:$0xf]
    %v210 = vld [vmem:[%s1 + $0x2e0] sm:$0xf]
    %v211 = vld [vmem:[%s1 + $0x2e4] sm:$0xf]
    %v212 = vld [vmem:[%s1 + $0x2e8] sm:$0xf]
    %v213 = vld [vmem:[%s1 + $0x2ec] sm:$0xf]
    %v214 = vld [vmem:[%s1 + $0x2f0] sm:$0xf]
    %v215 = vld [vmem:[%s1 + $0x2f4] sm:$0xf]
    %v216 = vld [vmem:[%s1 + $0x2f8] sm:$0xf]
    %v217 = vld [vmem:[%s1 + $0x2fc] sm:$0xf]
    %v218 = vld [vmem:[%s1 + $0x300] sm:$0xf]
    %v219 = vld [vmem:[%s1 + $0x304] sm:$0xf]
    %v220 = vld [vmem:[%s1 + $0x308] sm:$0xf]
    %v221 = vld [vmem:[%s1 + $0x30c] sm:$0xf]
    %v222 = vld [vmem:[%s1 + $0x310] sm:$0xf]
    %v223 = vld [vmem:[%s1 + $0x314] sm:$0xf]
    %v224 = vld [vmem:[%s1 + $0x318] sm:$0xf]
    %v225 = vld [vmem:[%s1 + $0x31c] sm:$0xf]
    %v226 = vld [vmem:[%s1 + $0x320] sm:$0xf]
    %v227 = vld [vmem:[%s1 + $0x324] sm:$0xf]
    %v228 = vld [vmem:[%s1 + $0x328] sm:$0xf]
    %v229 = vld [vmem:[%s1 + $0x32c] sm:$0xf]
    %v230 = vld [vmem:[%s1 + $0x330] sm:$0xf]
    %v231 = vld [vmem:[%s1 + $0x334] sm:$0xf]
    %v232 = vld [vmem:[%s1 + $0x338] sm:$0xf]
    %v233 = vld [vmem:[%s1 + $0x33c] sm:$0xf]
    %v234 = vld [vmem:[%s1 + $0x340] sm:$0xf]
    %v235 = vld [vmem:[%s1 + $0x344] sm:$0xf]
    %v236 = vld [vmem:[%s1 + $0x348] sm:$0xf]
    %v237 = vld [vmem:[%s1 + $0x34c] sm:$0xf]
    %v238 = vld [vmem:[%s1 + $0x350] sm:$0xf]
    %v239 = vld [vmem:[%s1 + $0x354] sm:$0xf]
    %v240 = vld [vmem:[%s1 + $0x358] sm:$0xf]
    %v241 = vld [vmem:[%s1 + $0x35c] sm:$0xf]
    %v242 = vld [vmem:[%s1 + $0x360] sm:$0xf]
    %v243 = vld [vmem:[%s1 + $0x364] sm:$0xf]
    %v244 = vld [vmem:[%s1 + $0x368] sm:$0xf]
    %v245 = vld [vmem:[%s1 + $0x36c] sm:$0xf]
    %v246 = vld [vmem:[%s1 + $0x370] sm:$0xf]
    %v247 = vld [vmem:[%s1 + $0x374] sm:$0xf]
    %v248 = vld [vmem:[%s1 + $0x378] sm:$0xf]
    %v249 = vld [vmem:[%s1 + $0x37c] sm:$0xf]
    %v250 = vld [vmem:[%s1 + $0x380] sm:$0xf]
    %v251 = vld [vmem:[%s1 + $0x384] sm:$0xf]
    %v252 = vld [vmem:[%s1 + $0x388] sm:$0xf]
    %v253 = vld [vmem:[%s1 + $0x38c] sm:$0xf]
    %v254 = vld [vmem:[%s1 + $0x390] sm:$0xf]
    %v255 = vld [vmem:[%s1 + $0x394] sm:$0xf]
    %v256 = vld [vmem:[%s1 + $0x398] sm:$0xf]
    %v257 = vld [vmem:[%s1 + $0x39c] sm:$0xf]
    %v258 = vld [vmem:[%s1 + $0x3a0] sm:$0xf]
    %v259 = vld [vmem:[%s1 + $0x3a4] sm:$0xf]
    %v260 = vld [vmem:[%s1 + $0x3a8] sm:$0xf]
    %v261 = vld [vmem:[%s1 + $0x3ac] sm:$0xf]
    %v262 = vld [vmem:[%s1 + $0x3b0] sm:$0xf]
    %v263 = vld [vmem:[%s1 + $0x3b4] sm:$0xf]
    %v264 = vld [vmem:[%s1 + $0x3b8] sm:$0xf]
    %v265 = vld [vmem:[%s1 + $0x3bc] sm:$0xf]
    %v266 = vld [vmem:[%s1 + $0x3c0] sm:$0xf]
    %v267 = vld [vmem:[%s1 + $0x3c4] sm:$0xf]
    %v268 = vld [vmem:[%s1 + $0x3c8] sm:$0xf]
    %v269 = vld [vmem:[%s1 + $0x3cc] sm:$0xf]
    %v270 = vld [vmem:[%s1 + $0x3d0] sm:$0xf]
    %v271 = vld [vmem:[%s1 + $0x3d4] sm:$0xf]
    %v272 = vld [vmem:[%s1 + $0x3d8] sm:$0xf]
    %v273 = vld [vmem:[%s1 + $0x3dc] sm:$0xf]
    %v274 = vld [vmem:[%s1 + $0x3e0] sm:$0xf]
    %v275 = vld [vmem:[%s1 + $0x3e4] sm:$0xf]
    %v276 = vld [vmem:[%s1 + $0x3e8] sm:$0xf]
    %v277 = vld [vmem:[%s1 + $0x3ec] sm:$0xf]
    %v278 = vld [vmem:[%s1 + $0x3f0] sm:$0xf]
    %v279 = vld [vmem:[%s1 + $0x3f4] sm:$0xf]
    %v280 = vld [vmem:[%s1 + $0x3f8] sm:$0xf]
    %v281 = vld [vmem:[%s1 + $0x3fc] sm:$0xf]
    %v282 = vld [vmem:[%s1 + $0x400] sm:$0xf]
    %v283 = vld [vmem:[%s1 + $0x404] sm:$0xf]
    %v284 = vld [vmem:[%s1 + $0x408] sm:$0xf]
    %v285 = vld [vmem:[%s1 + $0x40c] sm:$0xf]
    %v286 = vld [vmem:[%s1 + $0x410] sm:$0xf]
    %v287 = vld [vmem:[%s1 + $0x414] sm:$0xf]
    %v288 = vld [vmem:[%s1 + $0x418] sm:$0xf]
    %v289 = vld [vmem:[%s1 + $0x41c] sm:$0xf]
    %v290 = vld [vmem:[%s1 + $0x420] sm:$0xf]
    %v291 = vld [vmem:[%s1 + $0x424] sm:$0xf]
    %v292 = vld [vmem:[%s1 + $0x428] sm:$0xf]
    %v293 = vld [vmem:[%s1 + $0x42c] sm:$0xf]
    %v294 = vld [vmem:[%s1 + $0x430] sm:$0xf]
    %v295 = vld [vmem:[%s1 + $0x434] sm:$0xf]
    %v296 = vld [vmem:[%s1 + $0x438] sm:$0xf]
    %v297 = vld [vmem:[%s1 + $0x43c] sm:$0xf]
    %v298 = vld [vmem:[%s1 + $0x440] sm:$0xf]
    %v299 = vld [vmem:[%s1 + $0x444] sm:$0xf]
    %v300 = vld [vmem:[%s1 + $0x448] sm:$0xf]
    %v301 = vld [vmem:[%s1 + $0x44c] sm:$0xf]
    %v302 = vld [vmem:[%s1 + $0x450] sm:$0xf]
    %v303 = vld [vmem:[%s1 + $0x454] sm:$0xf]
    %v304 = vld [vmem:[%s1 + $0x458] sm:$0xf]
    %v305 = vld [vmem:[%s1 + $0x45c] sm:$0xf]
    %v306 = vld [vmem:[%s1 + $0x460] sm:$0xf]
    %v307 = vld [vmem:[%s1 + $0x464] sm:$0xf]
    %v308 = vld [vmem:[%s1 + $0x468] sm:$0xf]
    %v309 = vld [vmem:[%s1 + $0x46c] sm:$0xf]
    %v310 = vld [vmem:[%s1 + $0x470] sm:$0xf]
    %v311 = vld [vmem:[%s1 + $0x474] sm:$0xf]
    %v312 = vld [vmem:[%s1 + $0x478] sm:$0xf]
    %v313 = vld [vmem:[%s1 + $0x47c] sm:$0xf]
    %v314 = vld [vmem:[%s1 + $0x480] sm:$0xf]
    %v315 = vld [vmem:[%s1 + $0x484] sm:$0xf]
    %v316 = vld [vmem:[%s1 + $0x488] sm:$0xf]
    %v317 = vld [vmem:[%s1 + $0x48c] sm:$0xf]
    %v318 = vld [vmem:[%s1 + $0x490] sm:$0xf]
    %v319 = vld [vmem:[%s1 + $0x494] sm:$0xf]
    %v320 = vld [vmem:[%s1 + $0x498] sm:$0xf]
    %v321 = vld [vmem:[%s1 + $0x49c] sm:$0xf]
    %v322 = vld [vmem:[%s1 + $0x4a0] sm:$0xf]
    %v323 = vld [vmem:[%s1 + $0x4a4] sm:$0xf]
    %v324 = vld [vmem:[%s1 + $0x4a8] sm:$0xf]
    %v325 = vld [vmem:[%s1 + $0x4ac] sm:$0xf]
    %v326 = vld [vmem:[%s1 + $0x4b0] sm:$0xf]
    %v327 = vld [vmem:[%s1 + $0x4b4] sm:$0xf]
    %v328 = vld [vmem:[%s1 + $0x4b8] sm:$0xf]
    %v329 = vld [vmem:[%s1 + $0x4bc] sm:$0xf]
    %v330 = vld [vmem:[%s1 + $0x4c0] sm:$0xf]
    %v331 = vld [vmem:[%s1 + $0x4c4] sm:$0xf]
    %v332 = vld [vmem:[%s1 + $0x4c8] sm:$0xf]
    %v333 = vld [vmem:[%s1 + $0x4cc] sm:$0xf]
    %v334 = vld [vmem:[%s1 + $0x4d0] sm:$0xf]
    %v335 = vld [vmem:[%s1 + $0x4d4] sm:$0xf]
    %v336 = vld [vmem:[%s1 + $0x4d8] sm:$0xf]
    %v337 = vld [vmem:[%s1 + $0x4dc] sm:$0xf]
    %v338 = vld [vmem:[%s1 + $0x4e0] sm:$0xf]
    %v339 = vld [vmem:[%s1 + $0x4e4] sm:$0xf]
    %v340 = vld [vmem:[%s1 + $0x4e8] sm:$0xf]
    %v341 = vld [vmem:[%s1 + $0x4ec] sm:$0xf]
    %v342 = vld [vmem:[%s1 + $0x4f0] sm:$0xf]
    %v343 = vld [vmem:[%s1 + $0x4f4] sm:$0xf]
    %v344 = vld [vmem:[%s1 + $0x4f8] sm:$0xf]
    %v345 = vld [vmem:[%s1 + $0x4fc] sm:$0xf]
    %v346 = vld [vmem:[%s1 + $0x500] sm:$0xf]
    %v347 = vld [vmem:[%s1 + $0x504] sm:$0xf]
    %v348 = vld [vmem:[%s1 + $0x508] sm:$0xf]
    %v349 = vld [vmem:[%s1 + $0x50c] sm:$0xf]
    %v350 = vld [vmem:[%s1 + $0x510] sm:$0xf]
    %v351 = vld [vmem:[%s1 + $0x514] sm:$0xf]
    %v352 = vld [vmem:[%s1 + $0x518] sm:$0xf]
    %v353 = vld [vmem:[%s1 + $0x51c] sm:$0xf]
    %v354 = vld [vmem:[%s1 + $0x520] sm:$0xf]
    %v355 = vld [vmem:[%s1 + $0x524] sm:$0xf]
    %v356 = vld [vmem:[%s1 + $0x528] sm:$0xf]
    %v357 = vld [vmem:[%s1 + $0x52c] sm:$0xf]
    %v358 = vld [vmem:[%s1 + $0x530] sm:$0xf]
    %v359 = vld [vmem:[%s1 + $0x534] sm:$0xf]
    %v360 = vld [vmem:[%s1 + $0x538] sm:$0xf]
    %v361 = vld [vmem:[%s1 + $0x53c] sm:$0xf]
    %v362 = vld [vmem:[%s1 + $0x540] sm:$0xf]
    %v363 = vld [vmem:[%s1 + $0x544] sm:$0xf]
    %v364 = vld [vmem:[%s1 + $0x548] sm:$0xf]
    %v365 = vld [vmem:[%s1 + $0x54c] sm:$0xf]
    %v366 = vld [vmem:[%s1 + $0x550] sm:$0xf]
    %v367 = vld [vmem:[%s1 + $0x554] sm:$0xf]
    %v368 = vld [vmem:[%s1 + $0x558] sm:$0xf]
    %v369 = vld [vmem:[%s1 + $0x55c] sm:$0xf]
    %v370 = vld [vmem:[%s1 + $0x560] sm:$0xf]
    %v371 = vld [vmem:[%s1 + $0x564] sm:$0xf]
    %v372 = vld [vmem:[%s1 + $0x568] sm:$0xf]
    %v373 = vld [vmem:[%s1 + $0x56c] sm:$0xf]
    %v374 = vld [vmem:[%s1 + $0x570] sm:$0xf]
    %v375 = vld [vmem:[%s1 + $0x574] sm:$0xf]
    %v376 = vld [vmem:[%s1 + $0x578] sm:$0xf]
    %v377 = vld [vmem:[%s1 + $0x57c] sm:$0xf]
    %v378 = vld [vmem:[%s1 + $0x580] sm:$0xf]
    %v379 = vld [vmem:[%s1 + $0x584] sm:$0xf]
    %v380 = vld [vmem:[%s1 + $0x588] sm:$0xf]
    %v381 = vld [vmem:[%s1 + $0x58c] sm:$0xf]
    %v382 = vld [vmem:[%s1 + $0x590] sm:$0xf]
    %v383 = vld [vmem:[%s1 + $0x594] sm:$0xf]
    %v384 = vld [vmem:[%s1 + $0x598] sm:$0xf]
    %v385 = vld [vmem:[%s1 + $0x59c] sm:$0xf]
    %v386 = vld [vmem:[%s1 + $0x5a0] sm:$0xf]
    %v387 = vld [vmem:[%s1 + $0x5a4] sm:$0xf]
    %v388 = vld [vmem:[%s1 + $0x5a8] sm:$0xf]
    %v389 = vld [vmem:[%s1 + $0x5ac] sm:$0xf]
    %v390 = vld [vmem:[%s1 + $0x5b0] sm:$0xf]
    %v391 = vld [vmem:[%s1 + $0x5b4] sm:$0xf]
    %v392 = vld [vmem:[%s1 + $0x5b8] sm:$0xf]
    %v393 = vld [vmem:[%s1 + $0x5bc] sm:$0xf]
    %v394 = vld [vmem:[%s1 + $0x5c0] sm:$0xf]
    %v395 = vld [vmem:[%s1 + $0x5c4] sm:$0xf]
    %v396 = vld [vmem:[%s1 + $0x5c8] sm:$0xf]
    %v397 = vld [vmem:[%s1 + $0x5cc] sm:$0xf]
    %v398 = vld [vmem:[%s1 + $0x5d0] sm:$0xf]
    %v399 = vld [vmem:[%s1 + $0x5d4] sm:$0xf]
    %v400 = vld [vmem:[%s1 + $0x5d8] sm:$0xf]
    %v401 = vld [vmem:[%s1 + $0x5dc] sm:$0xf]
    %v402 = vld [vmem:[%s1 + $0x5e0] sm:$0xf]
    %v403 = vld [vmem:[%s1 + $0x5e4] sm:$0xf]
    %v404 = vld [vmem:[%s1 + $0x5e8] sm:$0xf]
    %v405 = vld [vmem:[%s1 + $0x5ec] sm:$0xf]
    %v406 = vld [vmem:[%s1 + $0x5f0] sm:$0xf]
    %v407 = vld [vmem:[%s1 + $0x5f4] sm:$0xf]
    %v408 = vld [vmem:[%s1 + $0x5f8] sm:$0xf]
    %v409 = vld [vmem:[%s1 + $0x5fc] sm:$0xf]
    %v410 = vld [vmem:[%s1 + $0x600] sm:$0xf]
    %v411 = vld [vmem:[%s1 + $0x604] sm:$0xf]
    %v412 = vld [vmem:[%s1 + $0x608] sm:$0xf]
    %v413 = vld [vmem:[%s1 + $0x60c] sm:$0xf]
    %v414 = vld [vmem:[%s1 + $0x610] sm:$0xf]
    %v415 = vld [vmem:[%s1 + $0x614] sm:$0xf]
    %v416 = vld [vmem:[%s1 + $0x618] sm:$0xf]
    %v417 = vld [vmem:[%s1 + $0x61c] sm:$0xf]
    %v418 = vld [vmem:[%s1 + $0x620] sm:$0xf]
    %v419 = vld [vmem:[%s1 + $0x624] sm:$0xf]
    %v420 = vld [vmem:[%s1 + $0x628] sm:$0xf]
    %v421 = vld [vmem:[%s1 + $0x62c] sm:$0xf]
    %v422 = vld [vmem:[%s1 + $0x630] sm:$0xf]
    %v423 = vld [vmem:[%s1 + $0x634] sm:$0xf]
    %v424 = vld [vmem:[%s1 + $0x638] sm:$0xf]
    %v425 = vld [vmem:[%s1 + $0x63c] sm:$0xf]
    %v426 = vld [vmem:[%s1 + $0x640] sm:$0xf]
    %v427 = vld [vmem:[%s1 + $0x644] sm:$0xf]
    %v428 = vld [vmem:[%s1 + $0x648] sm:$0xf]
    %v429 = vld [vmem:[%s1 + $0x64c] sm:$0xf]
    %v430 = vld [vmem:[%s1 + $0x650] sm:$0xf]
    %v431 = vld [vmem:[%s1 + $0x654] sm:$0xf]
    %v432 = vld [vmem:[%s1 + $0x658] sm:$0xf]
    %v433 = vld [vmem:[%s1 + $0x65c] sm:$0xf]
    %v434 = vld [vmem:[%s1 + $0x660] sm:$0xf]
    %v435 = vld [vmem:[%s1 + $0x664] sm:$0xf]
    %v436 = vld [vmem:[%s1 + $0x668] sm:$0xf]
    %v437 = vld [vmem:[%s1 + $0x66c] sm:$0xf]
    %v438 = vld [vmem:[%s1 + $0x670] sm:$0xf]
    %v439 = vld [vmem:[%s1 + $0x674] sm:$0xf]
    %v440 = vld [vmem:[%s1 + $0x678] sm:$0xf]
    %v441 = vld [vmem:[%s1 + $0x67c] sm:$0xf]
    %v442 = vld [vmem:[%s1 + $0x680] sm:$0xf]
    %v443 = vld [vmem:[%s1 + $0x684] sm:$0xf]
    %v444 = vld [vmem:[%s1 + $0x688] sm:$0xf]
    %v445 = vld [vmem:[%s1 + $0x68c] sm:$0xf]
    %v446 = vld [vmem:[%s1 + $0x690] sm:$0xf]
    %v447 = vld [vmem:[%s1 + $0x694] sm:$0xf]
    %v448 = vld [vmem:[%s1 + $0x698] sm:$0xf]
    %v449 = vld [vmem:[%s1 + $0x69c] sm:$0xf]
    %v450 = vld [vmem:[%s1 + $0x6a0] sm:$0xf]
    %v451 = vld [vmem:[%s1 + $0x6a4] sm:$0xf]
    %v452 = vld [vmem:[%s1 + $0x6a8] sm:$0xf]
    %v453 = vld [vmem:[%s1 + $0x6ac] sm:$0xf]
    %v454 = vld [vmem:[%s1 + $0x6b0] sm:$0xf]
    %v455 = vld [vmem:[%s1 + $0x6b4] sm:$0xf]
    %v456 = vld [vmem:[%s1 + $0x6b8] sm:$0xf]
    %v457 = vld [vmem:[%s1 + $0x6bc] sm:$0xf]
    %v458 = vld [vmem:[%s1 + $0x6c0] sm:$0xf]
    %v459 = vld [vmem:[%s1 + $0x6c4] sm:$0xf]
    %v460 = vld [vmem:[%s1 + $0x6c8] sm:$0xf]
    %v461 = vld [vmem:[%s1 + $0x6cc] sm:$0xf]
    %v462 = vld [vmem:[%s1 + $0x6d0] sm:$0xf]
    %v463 = vld [vmem:[%s1 + $0x6d4] sm:$0xf]
    %v464 = vld [vmem:[%s1 + $0x6d8] sm:$0xf]
    %v465 = vld [vmem:[%s1 + $0x6dc] sm:$0xf]
    %v466 = vld [vmem:[%s1 + $0x6e0] sm:$0xf]
    %v467 = vld [vmem:[%s1 + $0x6e4] sm:$0xf]
    %v468 = vld [vmem:[%s1 + $0x6e8] sm:$0xf]
    %v469 = vld [vmem:[%s1 + $0x6ec] sm:$0xf]
    %v470 = vld [vmem:[%s1 + $0x6f0] sm:$0xf]
    %v471 = vld [vmem:[%s1 + $0x6f4] sm:$0xf]
    %v472 = vld [vmem:[%s1 + $0x6f8] sm:$0xf]
    %v473 = vld [vmem:[%s1 + $0x6fc] sm:$0xf]
    %v474 = vld [vmem:[%s1 + $0x700] sm:$0xf]
    %v475 = vld [vmem:[%s1 + $0x704] sm:$0xf]
    %v476 = vld [vmem:[%s1 + $0x708] sm:$0xf]
    %v477 = vld [vmem:[%s1 + $0x70c] sm:$0xf]
    %v478 = vld [vmem:[%s1 + $0x710] sm:$0xf]
    %v479 = vld [vmem:[%s1 + $0x714] sm:$0xf]
    %v480 = vld [vmem:[%s1 + $0x718] sm:$0xf]
    %v481 = vld [vmem:[%s1 + $0x71c] sm:$0xf]
    %v482 = vld [vmem:[%s1 + $0x720] sm:$0xf]
    %v483 = vld [vmem:[%s1 + $0x724] sm:$0xf]
    %v484 = vld [vmem:[%s1 + $0x728] sm:$0xf]
    %v485 = vld [vmem:[%s1 + $0x72c] sm:$0xf]
    %v486 = vld [vmem:[%s1 + $0x730] sm:$0xf]
    %v487 = vld [vmem:[%s1 + $0x734] sm:$0xf]
    %v488 = vld [vmem:[%s1 + $0x738] sm:$0xf]
    %v489 = vld [vmem:[%s1 + $0x73c] sm:$0xf]
    %v490 = vld [vmem:[%s1 + $0x740] sm:$0xf]
    %v491 = vld [vmem:[%s1 + $0x744] sm:$0xf]
    %v492 = vld [vmem:[%s1 + $0x748] sm:$0xf]
    %v493 = vld [vmem:[%s1 + $0x74c] sm:$0xf]
    %v494 = vld [vmem:[%s1 + $0x750] sm:$0xf]
    %v495 = vld [vmem:[%s1 + $0x754] sm:$0xf]
    %v496 = vld [vmem:[%s1 + $0x758] sm:$0xf]
    %v497 = vld [vmem:[%s1 + $0x75c] sm:$0xf]
    %v498 = vld [vmem:[%s1 + $0x760] sm:$0xf]
    %v499 = vld [vmem:[%s1 + $0x764] sm:$0xf]
    %v500 = vld [vmem:[%s1 + $0x768] sm:$0xf]
    %v501 = vld [vmem:[%s1 + $0x76c] sm:$0xf]
    %v502 = vld [vmem:[%s1 + $0x770] sm:$0xf]
    %v503 = vld [vmem:[%s1 + $0x774] sm:$0xf]
    %v504 = vld [vmem:[%s1 + $0x778] sm:$0xf]
    %v505 = vld [vmem:[%s1 + $0x77c] sm:$0xf]
    %v506 = vld [vmem:[%s1 + $0x780] sm:$0xf]
    %v507 = vld [vmem:[%s1 + $0x784] sm:$0xf]
    %v508 = vld [vmem:[%s1 + $0x788] sm:$0xf]
    %v509 = vld [vmem:[%s1 + $0x78c] sm:$0xf]
    %v510 = vld [vmem:[%s1 + $0x790] sm:$0xf]
    %v511 = vld [vmem:[%s1 + $0x794] sm:$0xf]
    %v512 = vld [vmem:[%s1 + $0x798] sm:$0xf]
    %v513 = vld [vmem:[%s1 + $0x79c] sm:$0xf]
    %v514 = vld [vmem:[%s1 + $0x7a0] sm:$0xf]
    %v515 = vld [vmem:[%s1 + $0x7a4] sm:$0xf]
    %v516 = vld [vmem:[%s1 + $0x7a8] sm:$0xf]
    %v517 = vld [vmem:[%s1 + $0x7ac] sm:$0xf]
    %v518 = vld [vmem:[%s1 + $0x7b0] sm:$0xf]
    %v519 = vld [vmem:[%s1 + $0x7b4] sm:$0xf]
    %v520 = vld [vmem:[%s1 + $0x7b8] sm:$0xf]
    %v521 = vld [vmem:[%s1 + $0x7bc] sm:$0xf]
    %v522 = vld [vmem:[%s1 + $0x7c0] sm:$0xf]
    %v523 = vld [vmem:[%s1 + $0x7c4] sm:$0xf]
    %v524 = vld [vmem:[%s1 + $0x7c8] sm:$0xf]
    %v525 = vld [vmem:[%s1 + $0x7cc] sm:$0xf]
    %v526 = vld [vmem:[%s1 + $0x7d0] sm:$0xf]
    %v527 = vld [vmem:[%s1 + $0x7d4] sm:$0xf]
    %v528 = vld [vmem:[%s1 + $0x7d8] sm:$0xf]
    %v529 = vld [vmem:[%s1 + $0x7dc] sm:$0xf]
    %v530 = vld [vmem:[%s1 + $0x7e0] sm:$0xf]
    %v531 = vld [vmem:[%s1 + $0x7e4] sm:$0xf]
    %v532 = vld [vmem:[%s1 + $0x7e8] sm:$0xf]
    %v533 = vld [vmem:[%s1 + $0x7ec] sm:$0xf]
    %v534 = vld [vmem:[%s1 + $0x7f0] sm:$0xf]
    %v535 = vld [vmem:[%s1 + $0x7f4] sm:$0xf]
    %v536 = vld [vmem:[%s1 + $0x7f8] sm:$0xf]
    %v537 = vld [vmem:[%s1 + $0x7fc] sm:$0xf]
    %v538 = vld [vmem:[%s2] sm:$0x1]
    %v540 = vlaneseq
    %v541 = vshrl.u32 %v540, 7
    %v542 = vsub.s32 0, %v541
    %v543 = vrot.slane %v538, %v542
    %v549 = vcombine.high %v22, %v22
    %v551 = vunpack.c.l.s4 1966171168
    %v552 = vunpack.c.0.s8 %v551
    %v553 = vlaneseq
    %v554 = vshrl.u32 %v553, 7
    %v555 = vsub.s32 %v552, %v554
    %v556 = vrot.slane %v22, %v555
    %v558 = vunpack.c.l.s4 1966171168
    %v559 = vunpack.c.0.s8 %v558
    %v560 = vlaneseq
    %v561 = vshrl.u32 %v560, 7
    %v562 = vsub.s32 %v559, %v561
    %v563 = vrot.slane %v549, %v562
    %v564 = vcombine.high %v556, %v556
    %v565 = vcombine.high %v563, %v563
    %v567 = vunpack.c.l.s4 1966171168
    %v568 = vunpack.c.0.s8 %v567
    %v569 = vlaneseq
    %v570 = vshrl.u32 %v569, 7
    %v571 = vsub.s32 %v568, %v570
    %v572 = vrot.slane %v556, %v571
    %v574 = vunpack.c.l.s4 1966171168
    %v575 = vunpack.c.0.s8 %v574
    %v576 = vlaneseq
    %v577 = vshrl.u32 %v576, 7
    %v578 = vsub.s32 %v575, %v577
    %v579 = vrot.slane %v563, %v578
    %v581 = vunpack.c.l.s4 1966171168
    %v582 = vunpack.c.0.s8 %v581
    %v583 = vlaneseq
    %v584 = vshrl.u32 %v583, 7
    %v585 = vsub.s32 %v582, %v584
    %v586 = vrot.slane %v564, %v585
    %v588 = vunpack.c.l.s4 1966171168
    %v589 = vunpack.c.0.s8 %v588
    %v590 = vlaneseq
    %v591 = vshrl.u32 %v590, 7
    %v592 = vsub.s32 %v589, %v591
    %v593 = vrot.slane %v565, %v592
    %v594 = vcombine.high %v572, %v572
    %v595 = vcombine.high %v579, %v579
    %v596 = vcombine.high %v586, %v586
    %v597 = vcombine.high %v593, %v593
    %v598 = vcombine.high %v23, %v23
    %v600 = vunpack.c.l.s4 1966171168
    %v601 = vunpack.c.0.s8 %v600
    %v602 = vlaneseq
    %v603 = vshrl.u32 %v602, 7
    %v604 = vsub.s32 %v601, %v603
    %v605 = vrot.slane %v23, %v604
    %v607 = vunpack.c.l.s4 1966171168
    %v608 = vunpack.c.0.s8 %v607
    %v609 = vlaneseq
    %v610 = vshrl.u32 %v609, 7
    %v611 = vsub.s32 %v608, %v610
    %v612 = vrot.slane %v598, %v611
    %v613 = vcombine.high %v605, %v605
    %v614 = vcombine.high %v612, %v612
    %v616 = vunpack.c.l.s4 1966171168
    %v617 = vunpack.c.0.s8 %v616
    %v618 = vlaneseq
    %v619 = vshrl.u32 %v618, 7
    %v620 = vsub.s32 %v617, %v619
    %v621 = vrot.slane %v605, %v620
    %v623 = vunpack.c.l.s4 1966171168
    %v624 = vunpack.c.0.s8 %v623
    %v625 = vlaneseq
    %v626 = vshrl.u32 %v625, 7
    %v627 = vsub.s32 %v624, %v626
    %v628 = vrot.slane %v612, %v627
    %v630 = vunpack.c.l.s4 1966171168
    %v631 = vunpack.c.0.s8 %v630
    %v632 = vlaneseq
    %v633 = vshrl.u32 %v632, 7
    %v634 = vsub.s32 %v631, %v633
    %v635 = vrot.slane %v613, %v634
    %v637 = vunpack.c.l.s4 1966171168
    %v638 = vunpack.c.0.s8 %v637
    %v639 = vlaneseq
    %v640 = vshrl.u32 %v639, 7
    %v641 = vsub.s32 %v638, %v640
    %v642 = vrot.slane %v614, %v641
    %v643 = vcombine.high %v621, %v621
    %v644 = vcombine.high %v628, %v628
    %v645 = vcombine.high %v635, %v635
    %v646 = vcombine.high %v642, %v642
    %v647 = vcombine.high %v24, %v24
    %v649 = vunpack.c.l.s4 1966171168
    %v650 = vunpack.c.0.s8 %v649
    %v651 = vlaneseq
    %v652 = vshrl.u32 %v651, 7
    %v653 = vsub.s32 %v650, %v652
    %v654 = vrot.slane %v24, %v653
    %v656 = vunpack.c.l.s4 1966171168
    %v657 = vunpack.c.0.s8 %v656
    %v658 = vlaneseq
    %v659 = vshrl.u32 %v658, 7
    %v660 = vsub.s32 %v657, %v659
    %v661 = vrot.slane %v647, %v660
    %v662 = vcombine.high %v654, %v654
    %v663 = vcombine.high %v661, %v661
    %v665 = vunpack.c.l.s4 1966171168
    %v666 = vunpack.c.0.s8 %v665
    %v667 = vlaneseq
    %v668 = vshrl.u32 %v667, 7
    %v669 = vsub.s32 %v666, %v668
    %v670 = vrot.slane %v654, %v669
    %v672 = vunpack.c.l.s4 1966171168
    %v673 = vunpack.c.0.s8 %v672
    %v674 = vlaneseq
    %v675 = vshrl.u32 %v674, 7
    %v676 = vsub.s32 %v673, %v675
    %v677 = vrot.slane %v661, %v676
    %v679 = vunpack.c.l.s4 1966171168
    %v680 = vunpack.c.0.s8 %v679
    %v681 = vlaneseq
    %v682 = vshrl.u32 %v681, 7
    %v683 = vsub.s32 %v680, %v682
    %v684 = vrot.slane %v662, %v683
    %v686 = vunpack.c.l.s4 1966171168
    %v687 = vunpack.c.0.s8 %v686
    %v688 = vlaneseq
    %v689 = vshrl.u32 %v688, 7
    %v690 = vsub.s32 %v687, %v689
    %v691 = vrot.slane %v663, %v690
    %v692 = vcombine.high %v670, %v670
    %v693 = vcombine.high %v677, %v677
    %v694 = vcombine.high %v684, %v684
    %v695 = vcombine.high %v691, %v691
    %v696 = vcombine.high %v25, %v25
    %v698 = vunpack.c.l.s4 1966171168
    %v699 = vunpack.c.0.s8 %v698
    %v700 = vlaneseq
    %v701 = vshrl.u32 %v700, 7
    %v702 = vsub.s32 %v699, %v701
    %v703 = vrot.slane %v25, %v702
    %v705 = vunpack.c.l.s4 1966171168
    %v706 = vunpack.c.0.s8 %v705
    %v707 = vlaneseq
    %v708 = vshrl.u32 %v707, 7
    %v709 = vsub.s32 %v706, %v708
    %v710 = vrot.slane %v696, %v709
    %v711 = vcombine.high %v703, %v703
    %v712 = vcombine.high %v710, %v710
    %v714 = vunpack.c.l.s4 1966171168
    %v715 = vunpack.c.0.s8 %v714
    %v716 = vlaneseq
    %v717 = vshrl.u32 %v716, 7
    %v718 = vsub.s32 %v715, %v717
    %v719 = vrot.slane %v703, %v718
    %v721 = vunpack.c.l.s4 1966171168
    %v722 = vunpack.c.0.s8 %v721
    %v723 = vlaneseq
    %v724 = vshrl.u32 %v723, 7
    %v725 = vsub.s32 %v722, %v724
    %v726 = vrot.slane %v710, %v725
    %v728 = vunpack.c.l.s4 1966171168
    %v729 = vunpack.c.0.s8 %v728
    %v730 = vlaneseq
    %v731 = vshrl.u32 %v730, 7
    %v732 = vsub.s32 %v729, %v731
    %v733 = vrot.slane %v711, %v732
    %v735 = vunpack.c.l.s4 1966171168
    %v736 = vunpack.c.0.s8 %v735
    %v737 = vlaneseq
    %v738 = vshrl.u32 %v737, 7
    %v739 = vsub.s32 %v736, %v738
    %v740 = vrot.slane %v712, %v739
    %v741 = vcombine.high %v719, %v719
    %v742 = vcombine.high %v726, %v726
    %v743 = vcombine.high %v733, %v733
    %v744 = vcombine.high %v740, %v740
    %v1289 = vunpack.c.l.b16 %v26
    %v1290 = vunpack.c.l.b16 %v27
    %v1291 = vunpack.c.l.b16 %v28
    %v1292 = vunpack.c.l.b16 %v29
    %v1293 = vunpack.c.l.b16 %v30
    %v1294 = vunpack.c.l.b16 %v31
    %v1295 = vunpack.c.l.b16 %v32
    %v1296 = vunpack.c.l.b16 %v33
    %v1297 = vunpack.c.l.b16 %v34
    %v1298 = vunpack.c.l.b16 %v35
    %v1299 = vunpack.c.l.b16 %v36
    %v1300 = vunpack.c.l.b16 %v37
    %v1301 = vunpack.c.l.b16 %v38
    %v1302 = vunpack.c.l.b16 %v39
    %v1303 = vunpack.c.l.b16 %v40
    %v1304 = vunpack.c.l.b16 %v41
    %v1305 = vunpack.c.l.b16 %v42
    %v1306 = vunpack.c.l.b16 %v43
    %v1307 = vunpack.c.l.b16 %v44
    %v1308 = vunpack.c.l.b16 %v45
    %v1309 = vunpack.c.l.b16 %v46
    %v1310 = vunpack.c.l.b16 %v47
    %v1311 = vunpack.c.l.b16 %v48
    %v1312 = vunpack.c.l.b16 %v49
    %v1313 = vunpack.c.l.b16 %v50
    %v1314 = vunpack.c.l.b16 %v51
    %v1315 = vunpack.c.l.b16 %v52
    %v1316 = vunpack.c.l.b16 %v53
    %v1317 = vunpack.c.l.b16 %v54
    %v1318 = vunpack.c.l.b16 %v55
    %v1319 = vunpack.c.l.b16 %v56
    %v1320 = vunpack.c.l.b16 %v57
    %v1321 = vunpack.c.l.b16 %v58
    %v1322 = vunpack.c.l.b16 %v59
    %v1323 = vunpack.c.l.b16 %v60
    %v1324 = vunpack.c.l.b16 %v61
    %v1325 = vunpack.c.l.b16 %v62
    %v1326 = vunpack.c.l.b16 %v63
    %v1327 = vunpack.c.l.b16 %v64
    %v1328 = vunpack.c.l.b16 %v65
    %v1329 = vunpack.c.l.b16 %v66
    %v1330 = vunpack.c.l.b16 %v67
    %v1331 = vunpack.c.l.b16 %v68
    %v1332 = vunpack.c.l.b16 %v69
    %v1333 = vunpack.c.l.b16 %v70
    %v1334 = vunpack.c.l.b16 %v71
    %v1335 = vunpack.c.l.b16 %v72
    %v1336 = vunpack.c.l.b16 %v73
    %v1337 = vunpack.c.l.b16 %v74
    %v1338 = vunpack.c.l.b16 %v75
    %v1339 = vunpack.c.l.b16 %v76
    %v1340 = vunpack.c.l.b16 %v77
    %v1341 = vunpack.c.l.b16 %v78
    %v1342 = vunpack.c.l.b16 %v79
    %v1343 = vunpack.c.l.b16 %v80
    %v1344 = vunpack.c.l.b16 %v81
    %v1345 = vunpack.c.l.b16 %v82
    %v1346 = vunpack.c.l.b16 %v83
    %v1347 = vunpack.c.l.b16 %v84
    %v1348 = vunpack.c.l.b16 %v85
    %v1349 = vunpack.c.l.b16 %v86
    %v1350 = vunpack.c.l.b16 %v87
    %v1351 = vunpack.c.l.b16 %v88
    %v1352 = vunpack.c.l.b16 %v89
    %v1353 = vunpack.c.l.b16 %v90
    %v1354 = vunpack.c.l.b16 %v91
    %v1355 = vunpack.c.l.b16 %v92
    %v1356 = vunpack.c.l.b16 %v93
    %v1357 = vunpack.c.l.b16 %v94
    %v1358 = vunpack.c.l.b16 %v95
    %v1359 = vunpack.c.l.b16 %v96
    %v1360 = vunpack.c.l.b16 %v97
    %v1361 = vunpack.c.l.b16 %v98
    %v1362 = vunpack.c.l.b16 %v99
    %v1363 = vunpack.c.l.b16 %v100
    %v1364 = vunpack.c.l.b16 %v101
    %v1365 = vunpack.c.l.b16 %v102
    %v1366 = vunpack.c.l.b16 %v103
    %v1367 = vunpack.c.l.b16 %v104
    %v1368 = vunpack.c.l.b16 %v105
    %v1369 = vunpack.c.l.b16 %v106
    %v1370 = vunpack.c.l.b16 %v107
    %v1371 = vunpack.c.l.b16 %v108
    %v1372 = vunpack.c.l.b16 %v109
    %v1373 = vunpack.c.l.b16 %v110
    %v1374 = vunpack.c.l.b16 %v111
    %v1375 = vunpack.c.l.b16 %v112
    %v1376 = vunpack.c.l.b16 %v113
    %v1377 = vunpack.c.l.b16 %v114
    %v1378 = vunpack.c.l.b16 %v115
    %v1379 = vunpack.c.l.b16 %v116
    %v1380 = vunpack.c.l.b16 %v117
    %v1381 = vunpack.c.l.b16 %v118
    %v1382 = vunpack.c.l.b16 %v119
    %v1383 = vunpack.c.l.b16 %v120
    %v1384 = vunpack.c.l.b16 %v121
    %v1385 = vunpack.c.l.b16 %v122
    %v1386 = vunpack.c.l.b16 %v123
    %v1387 = vunpack.c.l.b16 %v124
    %v1388 = vunpack.c.l.b16 %v125
    %v1389 = vunpack.c.l.b16 %v126
    %v1390 = vunpack.c.l.b16 %v127
    %v1391 = vunpack.c.l.b16 %v128
    %v1392 = vunpack.c.l.b16 %v129
    %v1393 = vunpack.c.l.b16 %v130
    %v1394 = vunpack.c.l.b16 %v131
    %v1395 = vunpack.c.l.b16 %v132
    %v1396 = vunpack.c.l.b16 %v133
    %v1397 = vunpack.c.l.b16 %v134
    %v1398 = vunpack.c.l.b16 %v135
    %v1399 = vunpack.c.l.b16 %v136
    %v1400 = vunpack.c.l.b16 %v137
    %v1401 = vunpack.c.l.b16 %v138
    %v1402 = vunpack.c.l.b16 %v139
    %v1403 = vunpack.c.l.b16 %v140
    %v1404 = vunpack.c.l.b16 %v141
    %v1405 = vunpack.c.l.b16 %v142
    %v1406 = vunpack.c.l.b16 %v143
    %v1407 = vunpack.c.l.b16 %v144
    %v1408 = vunpack.c.l.b16 %v145
    %v1409 = vunpack.c.l.b16 %v146
    %v1410 = vunpack.c.l.b16 %v147
    %v1411 = vunpack.c.l.b16 %v148
    %v1412 = vunpack.c.l.b16 %v149
    %v1413 = vunpack.c.l.b16 %v150
    %v1414 = vunpack.c.l.b16 %v151
    %v1415 = vunpack.c.l.b16 %v152
    %v1416 = vunpack.c.l.b16 %v153
    %v1417 = vunpack.c.l.b16 %v154
    %v1418 = vunpack.c.l.b16 %v155
    %v1419 = vunpack.c.l.b16 %v156
    %v1420 = vunpack.c.l.b16 %v157
    %v1421 = vunpack.c.l.b16 %v158
    %v1422 = vunpack.c.l.b16 %v159
    %v1423 = vunpack.c.l.b16 %v160
    %v1424 = vunpack.c.l.b16 %v161
    %v1425 = vunpack.c.l.b16 %v162
    %v1426 = vunpack.c.l.b16 %v163
    %v1427 = vunpack.c.l.b16 %v164
    %v1428 = vunpack.c.l.b16 %v165
    %v1429 = vunpack.c.l.b16 %v166
    %v1430 = vunpack.c.l.b16 %v167
    %v1431 = vunpack.c.l.b16 %v168
    %v1432 = vunpack.c.l.b16 %v169
    %v1433 = vunpack.c.l.b16 %v170
    %v1434 = vunpack.c.l.b16 %v171
    %v1435 = vunpack.c.l.b16 %v172
    %v1436 = vunpack.c.l.b16 %v173
    %v1437 = vunpack.c.l.b16 %v174
    %v1438 = vunpack.c.l.b16 %v175
    %v1439 = vunpack.c.l.b16 %v176
    %v1440 = vunpack.c.l.b16 %v177
    %v1441 = vunpack.c.l.b16 %v178
    %v1442 = vunpack.c.l.b16 %v179
    %v1443 = vunpack.c.l.b16 %v180
    %v1444 = vunpack.c.l.b16 %v181
    %v1445 = vunpack.c.l.b16 %v182
    %v1446 = vunpack.c.l.b16 %v183
    %v1447 = vunpack.c.l.b16 %v184
    %v1448 = vunpack.c.l.b16 %v185
    %v1449 = vunpack.c.l.b16 %v186
    %v1450 = vunpack.c.l.b16 %v187
    %v1451 = vunpack.c.l.b16 %v188
    %v1452 = vunpack.c.l.b16 %v189
    %v1453 = vunpack.c.l.b16 %v190
    %v1454 = vunpack.c.l.b16 %v191
    %v1455 = vunpack.c.l.b16 %v192
    %v1456 = vunpack.c.l.b16 %v193
    %v1457 = vunpack.c.l.b16 %v194
    %v1458 = vunpack.c.l.b16 %v195
    %v1459 = vunpack.c.l.b16 %v196
    %v1460 = vunpack.c.l.b16 %v197
    %v1461 = vunpack.c.l.b16 %v198
    %v1462 = vunpack.c.l.b16 %v199
    %v1463 = vunpack.c.l.b16 %v200
    %v1464 = vunpack.c.l.b16 %v201
    %v1465 = vunpack.c.l.b16 %v202
    %v1466 = vunpack.c.l.b16 %v203
    %v1467 = vunpack.c.l.b16 %v204
    %v1468 = vunpack.c.l.b16 %v205
    %v1469 = vunpack.c.l.b16 %v206
    %v1470 = vunpack.c.l.b16 %v207
    %v1471 = vunpack.c.l.b16 %v208
    %v1472 = vunpack.c.l.b16 %v209
    %v1473 = vunpack.c.l.b16 %v210
    %v1474 = vunpack.c.l.b16 %v211
    %v1475 = vunpack.c.l.b16 %v212
    %v1476 = vunpack.c.l.b16 %v213
    %v1477 = vunpack.c.l.b16 %v214
    %v1478 = vunpack.c.l.b16 %v215
    %v1479 = vunpack.c.l.b16 %v216
    %v1480 = vunpack.c.l.b16 %v217
    %v1481 = vunpack.c.l.b16 %v218
    %v1482 = vunpack.c.l.b16 %v219
    %v1483 = vunpack.c.l.b16 %v220
    %v1484 = vunpack.c.l.b16 %v221
    %v1485 = vunpack.c.l.b16 %v222
    %v1486 = vunpack.c.l.b16 %v223
    %v1487 = vunpack.c.l.b16 %v224
    %v1488 = vunpack.c.l.b16 %v225
    %v1489 = vunpack.c.l.b16 %v226
    %v1490 = vunpack.c.l.b16 %v227
    %v1491 = vunpack.c.l.b16 %v228
    %v1492 = vunpack.c.l.b16 %v229
    %v1493 = vunpack.c.l.b16 %v230
    %v1494 = vunpack.c.l.b16 %v231
    %v1495 = vunpack.c.l.b16 %v232
    %v1496 = vunpack.c.l.b16 %v233
    %v1497 = vunpack.c.l.b16 %v234
    %v1498 = vunpack.c.l.b16 %v235
    %v1499 = vunpack.c.l.b16 %v236
    %v1500 = vunpack.c.l.b16 %v237
    %v1501 = vunpack.c.l.b16 %v238
    %v1502 = vunpack.c.l.b16 %v239
    %v1503 = vunpack.c.l.b16 %v240
    %v1504 = vunpack.c.l.b16 %v241
    %v1505 = vunpack.c.l.b16 %v242
    %v1506 = vunpack.c.l.b16 %v243
    %v1507 = vunpack.c.l.b16 %v244
    %v1508 = vunpack.c.l.b16 %v245
    %v1509 = vunpack.c.l.b16 %v246
    %v1510 = vunpack.c.l.b16 %v247
    %v1511 = vunpack.c.l.b16 %v248
    %v1512 = vunpack.c.l.b16 %v249
    %v1513 = vunpack.c.l.b16 %v250
    %v1514 = vunpack.c.l.b16 %v251
    %v1515 = vunpack.c.l.b16 %v252
    %v1516 = vunpack.c.l.b16 %v253
    %v1517 = vunpack.c.l.b16 %v254
    %v1518 = vunpack.c.l.b16 %v255
    %v1519 = vunpack.c.l.b16 %v256
    %v1520 = vunpack.c.l.b16 %v257
    %v1521 = vunpack.c.l.b16 %v258
    %v1522 = vunpack.c.l.b16 %v259
    %v1523 = vunpack.c.l.b16 %v260
    %v1524 = vunpack.c.l.b16 %v261
    %v1525 = vunpack.c.l.b16 %v262
    %v1526 = vunpack.c.l.b16 %v263
    %v1527 = vunpack.c.l.b16 %v264
    %v1528 = vunpack.c.l.b16 %v265
    %v1529 = vunpack.c.l.b16 %v266
    %v1530 = vunpack.c.l.b16 %v267
    %v1531 = vunpack.c.l.b16 %v268
    %v1532 = vunpack.c.l.b16 %v269
    %v1533 = vunpack.c.l.b16 %v270
    %v1534 = vunpack.c.l.b16 %v271
    %v1535 = vunpack.c.l.b16 %v272
    %v1536 = vunpack.c.l.b16 %v273
    %v1537 = vunpack.c.l.b16 %v274
    %v1538 = vunpack.c.l.b16 %v275
    %v1539 = vunpack.c.l.b16 %v276
    %v1540 = vunpack.c.l.b16 %v277
    %v1541 = vunpack.c.l.b16 %v278
    %v1542 = vunpack.c.l.b16 %v279
    %v1543 = vunpack.c.l.b16 %v280
    %v1544 = vunpack.c.l.b16 %v281
    %v1545 = vunpack.c.l.b16 %v282
    %v1546 = vunpack.c.l.b16 %v283
    %v1547 = vunpack.c.l.b16 %v284
    %v1548 = vunpack.c.l.b16 %v285
    %v1549 = vunpack.c.l.b16 %v286
    %v1550 = vunpack.c.l.b16 %v287
    %v1551 = vunpack.c.l.b16 %v288
    %v1552 = vunpack.c.l.b16 %v289
    %v1553 = vunpack.c.l.b16 %v290
    %v1554 = vunpack.c.l.b16 %v291
    %v1555 = vunpack.c.l.b16 %v292
    %v1556 = vunpack.c.l.b16 %v293
    %v1557 = vunpack.c.l.b16 %v294
    %v1558 = vunpack.c.l.b16 %v295
    %v1559 = vunpack.c.l.b16 %v296
    %v1560 = vunpack.c.l.b16 %v297
    %v1561 = vunpack.c.l.b16 %v298
    %v1562 = vunpack.c.l.b16 %v299
    %v1563 = vunpack.c.l.b16 %v300
    %v1564 = vunpack.c.l.b16 %v301
    %v1565 = vunpack.c.l.b16 %v302
    %v1566 = vunpack.c.l.b16 %v303
    %v1567 = vunpack.c.l.b16 %v304
    %v1568 = vunpack.c.l.b16 %v305
    %v1569 = vunpack.c.l.b16 %v306
    %v1570 = vunpack.c.l.b16 %v307
    %v1571 = vunpack.c.l.b16 %v308
    %v1572 = vunpack.c.l.b16 %v309
    %v1573 = vunpack.c.l.b16 %v310
    %v1574 = vunpack.c.l.b16 %v311
    %v1575 = vunpack.c.l.b16 %v312
    %v1576 = vunpack.c.l.b16 %v313
    %v1577 = vunpack.c.l.b16 %v314
    %v1578 = vunpack.c.l.b16 %v315
    %v1579 = vunpack.c.l.b16 %v316
    %v1580 = vunpack.c.l.b16 %v317
    %v1581 = vunpack.c.l.b16 %v318
    %v1582 = vunpack.c.l.b16 %v319
    %v1583 = vunpack.c.l.b16 %v320
    %v1584 = vunpack.c.l.b16 %v321
    %v1585 = vunpack.c.l.b16 %v322
    %v1586 = vunpack.c.l.b16 %v323
    %v1587 = vunpack.c.l.b16 %v324
    %v1588 = vunpack.c.l.b16 %v325
    %v1589 = vunpack.c.l.b16 %v326
    %v1590 = vunpack.c.l.b16 %v327
    %v1591 = vunpack.c.l.b16 %v328
    %v1592 = vunpack.c.l.b16 %v329
    %v1593 = vunpack.c.l.b16 %v330
    %v1594 = vunpack.c.l.b16 %v331
    %v1595 = vunpack.c.l.b16 %v332
    %v1596 = vunpack.c.l.b16 %v333
    %v1597 = vunpack.c.l.b16 %v334
    %v1598 = vunpack.c.l.b16 %v335
    %v1599 = vunpack.c.l.b16 %v336
    %v1600 = vunpack.c.l.b16 %v337
    %v1601 = vunpack.c.l.b16 %v338
    %v1602 = vunpack.c.l.b16 %v339
    %v1603 = vunpack.c.l.b16 %v340
    %v1604 = vunpack.c.l.b16 %v341
    %v1605 = vunpack.c.l.b16 %v342
    %v1606 = vunpack.c.l.b16 %v343
    %v1607 = vunpack.c.l.b16 %v344
    %v1608 = vunpack.c.l.b16 %v345
    %v1609 = vunpack.c.l.b16 %v346
    %v1610 = vunpack.c.l.b16 %v347
    %v1611 = vunpack.c.l.b16 %v348
    %v1612 = vunpack.c.l.b16 %v349
    %v1613 = vunpack.c.l.b16 %v350
    %v1614 = vunpack.c.l.b16 %v351
    %v1615 = vunpack.c.l.b16 %v352
    %v1616 = vunpack.c.l.b16 %v353
    %v1617 = vunpack.c.l.b16 %v354
    %v1618 = vunpack.c.l.b16 %v355
    %v1619 = vunpack.c.l.b16 %v356
    %v1620 = vunpack.c.l.b16 %v357
    %v1621 = vunpack.c.l.b16 %v358
    %v1622 = vunpack.c.l.b16 %v359
    %v1623 = vunpack.c.l.b16 %v360
    %v1624 = vunpack.c.l.b16 %v361
    %v1625 = vunpack.c.l.b16 %v362
    %v1626 = vunpack.c.l.b16 %v363
    %v1627 = vunpack.c.l.b16 %v364
    %v1628 = vunpack.c.l.b16 %v365
    %v1629 = vunpack.c.l.b16 %v366
    %v1630 = vunpack.c.l.b16 %v367
    %v1631 = vunpack.c.l.b16 %v368
    %v1632 = vunpack.c.l.b16 %v369
    %v1633 = vunpack.c.l.b16 %v370
    %v1634 = vunpack.c.l.b16 %v371
    %v1635 = vunpack.c.l.b16 %v372
    %v1636 = vunpack.c.l.b16 %v373
    %v1637 = vunpack.c.l.b16 %v374
    %v1638 = vunpack.c.l.b16 %v375
    %v1639 = vunpack.c.l.b16 %v376
    %v1640 = vunpack.c.l.b16 %v377
    %v1641 = vunpack.c.l.b16 %v378
    %v1642 = vunpack.c.l.b16 %v379
    %v1643 = vunpack.c.l.b16 %v380
    %v1644 = vunpack.c.l.b16 %v381
    %v1645 = vunpack.c.l.b16 %v382
    %v1646 = vunpack.c.l.b16 %v383
    %v1647 = vunpack.c.l.b16 %v384
    %v1648 = vunpack.c.l.b16 %v385
    %v1649 = vunpack.c.l.b16 %v386
    %v1650 = vunpack.c.l.b16 %v387
    %v1651 = vunpack.c.l.b16 %v388
    %v1652 = vunpack.c.l.b16 %v389
    %v1653 = vunpack.c.l.b16 %v390
    %v1654 = vunpack.c.l.b16 %v391
    %v1655 = vunpack.c.l.b16 %v392
    %v1656 = vunpack.c.l.b16 %v393
    %v1657 = vunpack.c.l.b16 %v394
    %v1658 = vunpack.c.l.b16 %v395
    %v1659 = vunpack.c.l.b16 %v396
    %v1660 = vunpack.c.l.b16 %v397
    %v1661 = vunpack.c.l.b16 %v398
    %v1662 = vunpack.c.l.b16 %v399
    %v1663 = vunpack.c.l.b16 %v400
    %v1664 = vunpack.c.l.b16 %v401
    %v1665 = vunpack.c.l.b16 %v402
    %v1666 = vunpack.c.l.b16 %v403
    %v1667 = vunpack.c.l.b16 %v404
    %v1668 = vunpack.c.l.b16 %v405
    %v1669 = vunpack.c.l.b16 %v406
    %v1670 = vunpack.c.l.b16 %v407
    %v1671 = vunpack.c.l.b16 %v408
    %v1672 = vunpack.c.l.b16 %v409
    %v1673 = vunpack.c.l.b16 %v410
    %v1674 = vunpack.c.l.b16 %v411
    %v1675 = vunpack.c.l.b16 %v412
    %v1676 = vunpack.c.l.b16 %v413
    %v1677 = vunpack.c.l.b16 %v414
    %v1678 = vunpack.c.l.b16 %v415
    %v1679 = vunpack.c.l.b16 %v416
    %v1680 = vunpack.c.l.b16 %v417
    %v1681 = vunpack.c.l.b16 %v418
    %v1682 = vunpack.c.l.b16 %v419
    %v1683 = vunpack.c.l.b16 %v420
    %v1684 = vunpack.c.l.b16 %v421
    %v1685 = vunpack.c.l.b16 %v422
    %v1686 = vunpack.c.l.b16 %v423
    %v1687 = vunpack.c.l.b16 %v424
    %v1688 = vunpack.c.l.b16 %v425
    %v1689 = vunpack.c.l.b16 %v426
    %v1690 = vunpack.c.l.b16 %v427
    %v1691 = vunpack.c.l.b16 %v428
    %v1692 = vunpack.c.l.b16 %v429
    %v1693 = vunpack.c.l.b16 %v430
    %v1694 = vunpack.c.l.b16 %v431
    %v1695 = vunpack.c.l.b16 %v432
    %v1696 = vunpack.c.l.b16 %v433
    %v1697 = vunpack.c.l.b16 %v434
    %v1698 = vunpack.c.l.b16 %v435
    %v1699 = vunpack.c.l.b16 %v436
    %v1700 = vunpack.c.l.b16 %v437
    %v1701 = vunpack.c.l.b16 %v438
    %v1702 = vunpack.c.l.b16 %v439
    %v1703 = vunpack.c.l.b16 %v440
    %v1704 = vunpack.c.l.b16 %v441
    %v1705 = vunpack.c.l.b16 %v442
    %v1706 = vunpack.c.l.b16 %v443
    %v1707 = vunpack.c.l.b16 %v444
    %v1708 = vunpack.c.l.b16 %v445
    %v1709 = vunpack.c.l.b16 %v446
    %v1710 = vunpack.c.l.b16 %v447
    %v1711 = vunpack.c.l.b16 %v448
    %v1712 = vunpack.c.l.b16 %v449
    %v1713 = vunpack.c.l.b16 %v450
    %v1714 = vunpack.c.l.b16 %v451
    %v1715 = vunpack.c.l.b16 %v452
    %v1716 = vunpack.c.l.b16 %v453
    %v1717 = vunpack.c.l.b16 %v454
    %v1718 = vunpack.c.l.b16 %v455
    %v1719 = vunpack.c.l.b16 %v456
    %v1720 = vunpack.c.l.b16 %v457
    %v1721 = vunpack.c.l.b16 %v458
    %v1722 = vunpack.c.l.b16 %v459
    %v1723 = vunpack.c.l.b16 %v460
    %v1724 = vunpack.c.l.b16 %v461
    %v1725 = vunpack.c.l.b16 %v462
    %v1726 = vunpack.c.l.b16 %v463
    %v1727 = vunpack.c.l.b16 %v464
    %v1728 = vunpack.c.l.b16 %v465
    %v1729 = vunpack.c.l.b16 %v466
    %v1730 = vunpack.c.l.b16 %v467
    %v1731 = vunpack.c.l.b16 %v468
    %v1732 = vunpack.c.l.b16 %v469
    %v1733 = vunpack.c.l.b16 %v470
    %v1734 = vunpack.c.l.b16 %v471
    %v1735 = vunpack.c.l.b16 %v472
    %v1736 = vunpack.c.l.b16 %v473
    %v1737 = vunpack.c.l.b16 %v474
    %v1738 = vunpack.c.l.b16 %v475
    %v1739 = vunpack.c.l.b16 %v476
    %v1740 = vunpack.c.l.b16 %v477
    %v1741 = vunpack.c.l.b16 %v478
    %v1742 = vunpack.c.l.b16 %v479
    %v1743 = vunpack.c.l.b16 %v480
    %v1744 = vunpack.c.l.b16 %v481
    %v1745 = vunpack.c.l.b16 %v482
    %v1746 = vunpack.c.l.b16 %v483
    %v1747 = vunpack.c.l.b16 %v484
    %v1748 = vunpack.c.l.b16 %v485
    %v1749 = vunpack.c.l.b16 %v486
    %v1750 = vunpack.c.l.b16 %v487
    %v1751 = vunpack.c.l.b16 %v488
    %v1752 = vunpack.c.l.b16 %v489
    %v1753 = vunpack.c.l.b16 %v490
    %v1754 = vunpack.c.l.b16 %v491
    %v1755 = vunpack.c.l.b16 %v492
    %v1756 = vunpack.c.l.b16 %v493
    %v1757 = vunpack.c.l.b16 %v494
    %v1758 = vunpack.c.l.b16 %v495
    %v1759 = vunpack.c.l.b16 %v496
    %v1760 = vunpack.c.l.b16 %v497
    %v1761 = vunpack.c.l.b16 %v498
    %v1762 = vunpack.c.l.b16 %v499
    %v1763 = vunpack.c.l.b16 %v500
    %v1764 = vunpack.c.l.b16 %v501
    %v1765 = vunpack.c.l.b16 %v502
    %v1766 = vunpack.c.l.b16 %v503
    %v1767 = vunpack.c.l.b16 %v504
    %v1768 = vunpack.c.l.b16 %v505
    %v1769 = vunpack.c.l.b16 %v506
    %v1770 = vunpack.c.l.b16 %v507
    %v1771 = vunpack.c.l.b16 %v508
    %v1772 = vunpack.c.l.b16 %v509
    %v1773 = vunpack.c.l.b16 %v510
    %v1774 = vunpack.c.l.b16 %v511
    %v1775 = vunpack.c.l.b16 %v512
    %v1776 = vunpack.c.l.b16 %v513
    %v1777 = vunpack.c.l.b16 %v514
    %v1778 = vunpack.c.l.b16 %v515
    %v1779 = vunpack.c.l.b16 %v516
    %v1780 = vunpack.c.l.b16 %v517
    %v1781 = vunpack.c.l.b16 %v518
    %v1782 = vunpack.c.l.b16 %v519
    %v1783 = vunpack.c.l.b16 %v520
    %v1784 = vunpack.c.l.b16 %v521
    %v1785 = vunpack.c.l.b16 %v522
    %v1786 = vunpack.c.l.b16 %v523
    %v1787 = vunpack.c.l.b16 %v524
    %v1788 = vunpack.c.l.b16 %v525
    %v1789 = vunpack.c.l.b16 %v526
    %v1790 = vunpack.c.l.b16 %v527
    %v1791 = vunpack.c.l.b16 %v528
    %v1792 = vunpack.c.l.b16 %v529
    %v1793 = vunpack.c.l.b16 %v530
    %v1794 = vunpack.c.l.b16 %v531
    %v1795 = vunpack.c.l.b16 %v532
    %v1796 = vunpack.c.l.b16 %v533
    %v1797 = vunpack.c.l.b16 %v534
    %v1798 = vunpack.c.l.b16 %v535
    %v1799 = vunpack.c.l.b16 %v536
    %v1800 = vunpack.c.l.b16 %v537
    %v1801 = vpack.c.b16 %v1290, %v1289
    %v1802 = vpack.c.b16 %v1292, %v1291
    %v1803 = vpack.c.b16 %v1294, %v1293
    %v1804 = vpack.c.b16 %v1296, %v1295
    %v1805 = vpack.c.b16 %v1298, %v1297
    %v1806 = vpack.c.b16 %v1300, %v1299
    %v1807 = vpack.c.b16 %v1302, %v1301
    %v1808 = vpack.c.b16 %v1304, %v1303
    %v1809 = vpack.c.b16 %v1306, %v1305
    %v1810 = vpack.c.b16 %v1308, %v1307
    %v1811 = vpack.c.b16 %v1310, %v1309
    %v1812 = vpack.c.b16 %v1312, %v1311
    %v1813 = vpack.c.b16 %v1314, %v1313
    %v1814 = vpack.c.b16 %v1316, %v1315
    %v1815 = vpack.c.b16 %v1318, %v1317
    %v1816 = vpack.c.b16 %v1320, %v1319
    %v1817 = vpack.c.b16 %v1322, %v1321
    %v1818 = vpack.c.b16 %v1324, %v1323
    %v1819 = vpack.c.b16 %v1326, %v1325
    %v1820 = vpack.c.b16 %v1328, %v1327
    %v1821 = vpack.c.b16 %v1330, %v1329
    %v1822 = vpack.c.b16 %v1332, %v1331
    %v1823 = vpack.c.b16 %v1334, %v1333
    %v1824 = vpack.c.b16 %v1336, %v1335
    %v1825 = vpack.c.b16 %v1338, %v1337
    %v1826 = vpack.c.b16 %v1340, %v1339
    %v1827 = vpack.c.b16 %v1342, %v1341
    %v1828 = vpack.c.b16 %v1344, %v1343
    %v1829 = vpack.c.b16 %v1346, %v1345
    %v1830 = vpack.c.b16 %v1348, %v1347
    %v1831 = vpack.c.b16 %v1350, %v1349
    %v1832 = vpack.c.b16 %v1352, %v1351
    %v1833 = vpack.c.b16 %v1354, %v1353
    %v1834 = vpack.c.b16 %v1356, %v1355
    %v1835 = vpack.c.b16 %v1358, %v1357
    %v1836 = vpack.c.b16 %v1360, %v1359
    %v1837 = vpack.c.b16 %v1362, %v1361
    %v1838 = vpack.c.b16 %v1364, %v1363
    %v1839 = vpack.c.b16 %v1366, %v1365
    %v1840 = vpack.c.b16 %v1368, %v1367
    %v1841 = vpack.c.b16 %v1370, %v1369
    %v1842 = vpack.c.b16 %v1372, %v1371
    %v1843 = vpack.c.b16 %v1374, %v1373
    %v1844 = vpack.c.b16 %v1376, %v1375
    %v1845 = vpack.c.b16 %v1378, %v1377
    %v1846 = vpack.c.b16 %v1380, %v1379
    %v1847 = vpack.c.b16 %v1382, %v1381
    %v1848 = vpack.c.b16 %v1384, %v1383
    %v1849 = vpack.c.b16 %v1386, %v1385
    %v1850 = vpack.c.b16 %v1388, %v1387
    %v1851 = vpack.c.b16 %v1390, %v1389
    %v1852 = vpack.c.b16 %v1392, %v1391
    %v1853 = vpack.c.b16 %v1394, %v1393
    %v1854 = vpack.c.b16 %v1396, %v1395
    %v1855 = vpack.c.b16 %v1398, %v1397
    %v1856 = vpack.c.b16 %v1400, %v1399
    %v1857 = vpack.c.b16 %v1402, %v1401
    %v1858 = vpack.c.b16 %v1404, %v1403
    %v1859 = vpack.c.b16 %v1406, %v1405
    %v1860 = vpack.c.b16 %v1408, %v1407
    %v1861 = vpack.c.b16 %v1410, %v1409
    %v1862 = vpack.c.b16 %v1412, %v1411
    %v1863 = vpack.c.b16 %v1414, %v1413
    %v1864 = vpack.c.b16 %v1416, %v1415
    %v1865 = vpack.c.b16 %v1418, %v1417
    %v1866 = vpack.c.b16 %v1420, %v1419
    %v1867 = vpack.c.b16 %v1422, %v1421
    %v1868 = vpack.c.b16 %v1424, %v1423
    %v1869 = vpack.c.b16 %v1426, %v1425
    %v1870 = vpack.c.b16 %v1428, %v1427
    %v1871 = vpack.c.b16 %v1430, %v1429
    %v1872 = vpack.c.b16 %v1432, %v1431
    %v1873 = vpack.c.b16 %v1434, %v1433
    %v1874 = vpack.c.b16 %v1436, %v1435
    %v1875 = vpack.c.b16 %v1438, %v1437
    %v1876 = vpack.c.b16 %v1440, %v1439
    %v1877 = vpack.c.b16 %v1442, %v1441
    %v1878 = vpack.c.b16 %v1444, %v1443
    %v1879 = vpack.c.b16 %v1446, %v1445
    %v1880 = vpack.c.b16 %v1448, %v1447
    %v1881 = vpack.c.b16 %v1450, %v1449
    %v1882 = vpack.c.b16 %v1452, %v1451
    %v1883 = vpack.c.b16 %v1454, %v1453
    %v1884 = vpack.c.b16 %v1456, %v1455
    %v1885 = vpack.c.b16 %v1458, %v1457
    %v1886 = vpack.c.b16 %v1460, %v1459
    %v1887 = vpack.c.b16 %v1462, %v1461
    %v1888 = vpack.c.b16 %v1464, %v1463
    %v1889 = vpack.c.b16 %v1466, %v1465
    %v1890 = vpack.c.b16 %v1468, %v1467
    %v1891 = vpack.c.b16 %v1470, %v1469
    %v1892 = vpack.c.b16 %v1472, %v1471
    %v1893 = vpack.c.b16 %v1474, %v1473
    %v1894 = vpack.c.b16 %v1476, %v1475
    %v1895 = vpack.c.b16 %v1478, %v1477
    %v1896 = vpack.c.b16 %v1480, %v1479
    %v1897 = vpack.c.b16 %v1482, %v1481
    %v1898 = vpack.c.b16 %v1484, %v1483
    %v1899 = vpack.c.b16 %v1486, %v1485
    %v1900 = vpack.c.b16 %v1488, %v1487
    %v1901 = vpack.c.b16 %v1490, %v1489
    %v1902 = vpack.c.b16 %v1492, %v1491
    %v1903 = vpack.c.b16 %v1494, %v1493
    %v1904 = vpack.c.b16 %v1496, %v1495
    %v1905 = vpack.c.b16 %v1498, %v1497
    %v1906 = vpack.c.b16 %v1500, %v1499
    %v1907 = vpack.c.b16 %v1502, %v1501
    %v1908 = vpack.c.b16 %v1504, %v1503
    %v1909 = vpack.c.b16 %v1506, %v1505
    %v1910 = vpack.c.b16 %v1508, %v1507
    %v1911 = vpack.c.b16 %v1510, %v1509
    %v1912 = vpack.c.b16 %v1512, %v1511
    %v1913 = vpack.c.b16 %v1514, %v1513
    %v1914 = vpack.c.b16 %v1516, %v1515
    %v1915 = vpack.c.b16 %v1518, %v1517
    %v1916 = vpack.c.b16 %v1520, %v1519
    %v1917 = vpack.c.b16 %v1522, %v1521
    %v1918 = vpack.c.b16 %v1524, %v1523
    %v1919 = vpack.c.b16 %v1526, %v1525
    %v1920 = vpack.c.b16 %v1528, %v1527
    %v1921 = vpack.c.b16 %v1530, %v1529
    %v1922 = vpack.c.b16 %v1532, %v1531
    %v1923 = vpack.c.b16 %v1534, %v1533
    %v1924 = vpack.c.b16 %v1536, %v1535
    %v1925 = vpack.c.b16 %v1538, %v1537
    %v1926 = vpack.c.b16 %v1540, %v1539
    %v1927 = vpack.c.b16 %v1542, %v1541
    %v1928 = vpack.c.b16 %v1544, %v1543
    %v1929 = vpack.c.b16 %v1546, %v1545
    %v1930 = vpack.c.b16 %v1548, %v1547
    %v1931 = vpack.c.b16 %v1550, %v1549
    %v1932 = vpack.c.b16 %v1552, %v1551
    %v1933 = vpack.c.b16 %v1554, %v1553
    %v1934 = vpack.c.b16 %v1556, %v1555
    %v1935 = vpack.c.b16 %v1558, %v1557
    %v1936 = vpack.c.b16 %v1560, %v1559
    %v1937 = vpack.c.b16 %v1562, %v1561
    %v1938 = vpack.c.b16 %v1564, %v1563
    %v1939 = vpack.c.b16 %v1566, %v1565
    %v1940 = vpack.c.b16 %v1568, %v1567
    %v1941 = vpack.c.b16 %v1570, %v1569
    %v1942 = vpack.c.b16 %v1572, %v1571
    %v1943 = vpack.c.b16 %v1574, %v1573
    %v1944 = vpack.c.b16 %v1576, %v1575
    %v1945 = vpack.c.b16 %v1578, %v1577
    %v1946 = vpack.c.b16 %v1580, %v1579
    %v1947 = vpack.c.b16 %v1582, %v1581
    %v1948 = vpack.c.b16 %v1584, %v1583
    %v1949 = vpack.c.b16 %v1586, %v1585
    %v1950 = vpack.c.b16 %v1588, %v1587
    %v1951 = vpack.c.b16 %v1590, %v1589
    %v1952 = vpack.c.b16 %v1592, %v1591
    %v1953 = vpack.c.b16 %v1594, %v1593
    %v1954 = vpack.c.b16 %v1596, %v1595
    %v1955 = vpack.c.b16 %v1598, %v1597
    %v1956 = vpack.c.b16 %v1600, %v1599
    %v1957 = vpack.c.b16 %v1602, %v1601
    %v1958 = vpack.c.b16 %v1604, %v1603
    %v1959 = vpack.c.b16 %v1606, %v1605
    %v1960 = vpack.c.b16 %v1608, %v1607
    %v1961 = vpack.c.b16 %v1610, %v1609
    %v1962 = vpack.c.b16 %v1612, %v1611
    %v1963 = vpack.c.b16 %v1614, %v1613
    %v1964 = vpack.c.b16 %v1616, %v1615
    %v1965 = vpack.c.b16 %v1618, %v1617
    %v1966 = vpack.c.b16 %v1620, %v1619
    %v1967 = vpack.c.b16 %v1622, %v1621
    %v1968 = vpack.c.b16 %v1624, %v1623
    %v1969 = vpack.c.b16 %v1626, %v1625
    %v1970 = vpack.c.b16 %v1628, %v1627
    %v1971 = vpack.c.b16 %v1630, %v1629
    %v1972 = vpack.c.b16 %v1632, %v1631
    %v1973 = vpack.c.b16 %v1634, %v1633
    %v1974 = vpack.c.b16 %v1636, %v1635
    %v1975 = vpack.c.b16 %v1638, %v1637
    %v1976 = vpack.c.b16 %v1640, %v1639
    %v1977 = vpack.c.b16 %v1642, %v1641
    %v1978 = vpack.c.b16 %v1644, %v1643
    %v1979 = vpack.c.b16 %v1646, %v1645
    %v1980 = vpack.c.b16 %v1648, %v1647
    %v1981 = vpack.c.b16 %v1650, %v1649
    %v1982 = vpack.c.b16 %v1652, %v1651
    %v1983 = vpack.c.b16 %v1654, %v1653
    %v1984 = vpack.c.b16 %v1656, %v1655
    %v1985 = vpack.c.b16 %v1658, %v1657
    %v1986 = vpack.c.b16 %v1660, %v1659
    %v1987 = vpack.c.b16 %v1662, %v1661
    %v1988 = vpack.c.b16 %v1664, %v1663
    %v1989 = vpack.c.b16 %v1666, %v1665
    %v1990 = vpack.c.b16 %v1668, %v1667
    %v1991 = vpack.c.b16 %v1670, %v1669
    %v1992 = vpack.c.b16 %v1672, %v1671
    %v1993 = vpack.c.b16 %v1674, %v1673
    %v1994 = vpack.c.b16 %v1676, %v1675
    %v1995 = vpack.c.b16 %v1678, %v1677
    %v1996 = vpack.c.b16 %v1680, %v1679
    %v1997 = vpack.c.b16 %v1682, %v1681
    %v1998 = vpack.c.b16 %v1684, %v1683
    %v1999 = vpack.c.b16 %v1686, %v1685
    %v2000 = vpack.c.b16 %v1688, %v1687
    %v2001 = vpack.c.b16 %v1690, %v1689
    %v2002 = vpack.c.b16 %v1692, %v1691
    %v2003 = vpack.c.b16 %v1694, %v1693
    %v2004 = vpack.c.b16 %v1696, %v1695
    %v2005 = vpack.c.b16 %v1698, %v1697
    %v2006 = vpack.c.b16 %v1700, %v1699
    %v2007 = vpack.c.b16 %v1702, %v1701
    %v2008 = vpack.c.b16 %v1704, %v1703
    %v2009 = vpack.c.b16 %v1706, %v1705
    %v2010 = vpack.c.b16 %v1708, %v1707
    %v2011 = vpack.c.b16 %v1710, %v1709
    %v2012 = vpack.c.b16 %v1712, %v1711
    %v2013 = vpack.c.b16 %v1714, %v1713
    %v2014 = vpack.c.b16 %v1716, %v1715
    %v2015 = vpack.c.b16 %v1718, %v1717
    %v2016 = vpack.c.b16 %v1720, %v1719
    %v2017 = vpack.c.b16 %v1722, %v1721
    %v2018 = vpack.c.b16 %v1724, %v1723
    %v2019 = vpack.c.b16 %v1726, %v1725
    %v2020 = vpack.c.b16 %v1728, %v1727
    %v2021 = vpack.c.b16 %v1730, %v1729
    %v2022 = vpack.c.b16 %v1732, %v1731
    %v2023 = vpack.c.b16 %v1734, %v1733
    %v2024 = vpack.c.b16 %v1736, %v1735
    %v2025 = vpack.c.b16 %v1738, %v1737
    %v2026 = vpack.c.b16 %v1740, %v1739
    %v2027 = vpack.c.b16 %v1742, %v1741
    %v2028 = vpack.c.b16 %v1744, %v1743
    %v2029 = vpack.c.b16 %v1746, %v1745
    %v2030 = vpack.c.b16 %v1748, %v1747
    %v2031 = vpack.c.b16 %v1750, %v1749
    %v2032 = vpack.c.b16 %v1752, %v1751
    %v2033 = vpack.c.b16 %v1754, %v1753
    %v2034 = vpack.c.b16 %v1756, %v1755
    %v2035 = vpack.c.b16 %v1758, %v1757
    %v2036 = vpack.c.b16 %v1760, %v1759
    %v2037 = vpack.c.b16 %v1762, %v1761
    %v2038 = vpack.c.b16 %v1764, %v1763
    %v2039 = vpack.c.b16 %v1766, %v1765
    %v2040 = vpack.c.b16 %v1768, %v1767
    %v2041 = vpack.c.b16 %v1770, %v1769
    %v2042 = vpack.c.b16 %v1772, %v1771
    %v2043 = vpack.c.b16 %v1774, %v1773
    %v2044 = vpack.c.b16 %v1776, %v1775
    %v2045 = vpack.c.b16 %v1778, %v1777
    %v2046 = vpack.c.b16 %v1780, %v1779
    %v2047 = vpack.c.b16 %v1782, %v1781
    %v2048 = vpack.c.b16 %v1784, %v1783
    %v2049 = vpack.c.b16 %v1786, %v1785
    %v2050 = vpack.c.b16 %v1788, %v1787
    %v2051 = vpack.c.b16 %v1790, %v1789
    %v2052 = vpack.c.b16 %v1792, %v1791
    %v2053 = vpack.c.b16 %v1794, %v1793
    %v2054 = vpack.c.b16 %v1796, %v1795
    %v2055 = vpack.c.b16 %v1798, %v1797
    %v2056 = vpack.c.b16 %v1800, %v1799
    %2313 = vmatprep.subr.bf16.mxu0 0
    %2314 = vmatpush1.bf16.msra.mxu0 %v1801
    %2315 = vmatprep.subr.bf16.mxu0 0
    %2316 = vmatpush1.bf16.msra.mxu0 %v1802
    %2317 = vmatprep.subr.bf16.mxu0 0
    %2318 = vmatpush1.bf16.msra.mxu0 %v1803
    %2319 = vmatprep.subr.bf16.mxu0 0
    %2320 = vmatpush1.bf16.msra.mxu0 %v1804
    %2321 = vmatprep.subr.bf16.mxu0 0
    %2322 = vmatpush1.bf16.msra.mxu0 %v1805
    %2323 = vmatprep.subr.bf16.mxu0 0
    %2324 = vmatpush1.bf16.msra.mxu0 %v1806
    %2325 = vmatprep.subr.bf16.mxu0 0
    %2326 = vmatpush1.bf16.msra.mxu0 %v1807
    %2327 = vmatprep.subr.bf16.mxu0 0
    %2328 = vmatpush1.bf16.msra.mxu0 %v1808
    %2329 = vmatprep.subr.bf16.mxu0 0
    %2330 = vmatpush1.bf16.msra.mxu0 %v1809
    %2331 = vmatprep.subr.bf16.mxu0 0
    %2332 = vmatpush1.bf16.msra.mxu0 %v1810
    %2333 = vmatprep.subr.bf16.mxu0 0
    %2334 = vmatpush1.bf16.msra.mxu0 %v1811
    %2335 = vmatprep.subr.bf16.mxu0 0
    %2336 = vmatpush1.bf16.msra.mxu0 %v1812
    %2337 = vmatprep.subr.bf16.mxu0 0
    %2338 = vmatpush1.bf16.msra.mxu0 %v1813
    %2339 = vmatprep.subr.bf16.mxu0 0
    %2340 = vmatpush1.bf16.msra.mxu0 %v1814
    %2341 = vmatprep.subr.bf16.mxu0 0
    %2342 = vmatpush1.bf16.msra.mxu0 %v1815
    %2343 = vmatprep.subr.bf16.mxu0 0
    %2344 = vmatpush1.bf16.msra.mxu0 %v1816
    %2345 = vmatprep.mubr.bf16.mxu0 %v586
    %2346 = vmatmul.mubr.bf16.gmra.mrb[0].mxu0 %v572
    %v2347 = vpop.f32.mrb[0].mxu0
    %v2348 = vadd.f32 %v543, %v2347
    %v2349 = vpop.f32.mrb[0].mxu0
    %v2350 = vpop.f32.mrb[0].mxu0
    %v2351 = vpop.f32.mrb[0].mxu0
    %2352 = vdwg.mxu0
    %2353 = vmatprep.subr.bf16.mxu0 0
    %2354 = vmatpush1.bf16.msra.mxu0 %v1817
    %2355 = vmatprep.subr.bf16.mxu0 0
    %2356 = vmatpush1.bf16.msra.mxu0 %v1818
    %2357 = vmatprep.subr.bf16.mxu0 0
    %2358 = vmatpush1.bf16.msra.mxu0 %v1819
    %2359 = vmatprep.subr.bf16.mxu0 0
    %2360 = vmatpush1.bf16.msra.mxu0 %v1820
    %2361 = vmatprep.subr.bf16.mxu0 0
    %2362 = vmatpush1.bf16.msra.mxu0 %v1821
    %2363 = vmatprep.subr.bf16.mxu0 0
    %2364 = vmatpush1.bf16.msra.mxu0 %v1822
    %2365 = vmatprep.subr.bf16.mxu0 0
    %2366 = vmatpush1.bf16.msra.mxu0 %v1823
    %2367 = vmatprep.subr.bf16.mxu0 0
    %2368 = vmatpush1.bf16.msra.mxu0 %v1824
    %2369 = vmatprep.subr.bf16.mxu0 0
    %2370 = vmatpush1.bf16.msra.mxu0 %v1825
    %2371 = vmatprep.subr.bf16.mxu0 0
    %2372 = vmatpush1.bf16.msra.mxu0 %v1826
    %2373 = vmatprep.subr.bf16.mxu0 0
    %2374 = vmatpush1.bf16.msra.mxu0 %v1827
    %2375 = vmatprep.subr.bf16.mxu0 0
    %2376 = vmatpush1.bf16.msra.mxu0 %v1828
    %2377 = vmatprep.subr.bf16.mxu0 0
    %2378 = vmatpush1.bf16.msra.mxu0 %v1829
    %2379 = vmatprep.subr.bf16.mxu0 0
    %2380 = vmatpush1.bf16.msra.mxu0 %v1830
    %2381 = vmatprep.subr.bf16.mxu0 0
    %2382 = vmatpush1.bf16.msra.mxu0 %v1831
    %2383 = vmatprep.subr.bf16.mxu0 0
    %2384 = vmatpush1.bf16.msra.mxu0 %v1832
    %2385 = vmatprep.mubr.bf16.mxu0 %v596
    %2386 = vmatmul.mubr.bf16.gmra.mrb[0].mxu0 %v594
    %v2387 = vpop.f32.mrb[0].mxu0
    %v2388 = vadd.f32 %v2348, %v2387
    %v2389 = vpop.f32.mrb[0].mxu0
    %v2390 = vpop.f32.mrb[0].mxu0
    %v2391 = vpop.f32.mrb[0].mxu0
    %2392 = vdwg.mxu0
    %2393 = vmatprep.subr.bf16.mxu0 0
    %2394 = vmatpush1.bf16.msra.mxu0 %v1833
    %2395 = vmatprep.subr.bf16.mxu0 0
    %2396 = vmatpush1.bf16.msra.mxu0 %v1834
    %2397 = vmatprep.subr.bf16.mxu0 0
    %2398 = vmatpush1.bf16.msra.mxu0 %v1835
    %2399 = vmatprep.subr.bf16.mxu0 0
    %2400 = vmatpush1.bf16.msra.mxu0 %v1836
    %2401 = vmatprep.subr.bf16.mxu0 0
    %2402 = vmatpush1.bf16.msra.mxu0 %v1837
    %2403 = vmatprep.subr.bf16.mxu0 0
    %2404 = vmatpush1.bf16.msra.mxu0 %v1838
    %2405 = vmatprep.subr.bf16.mxu0 0
    %2406 = vmatpush1.bf16.msra.mxu0 %v1839
    %2407 = vmatprep.subr.bf16.mxu0 0
    %2408 = vmatpush1.bf16.msra.mxu0 %v1840
    %2409 = vmatprep.subr.bf16.mxu0 0
    %2410 = vmatpush1.bf16.msra.mxu0 %v1841
    %2411 = vmatprep.subr.bf16.mxu0 0
    %2412 = vmatpush1.bf16.msra.mxu0 %v1842
    %2413 = vmatprep.subr.bf16.mxu0 0
    %2414 = vmatpush1.bf16.msra.mxu0 %v1843
    %2415 = vmatprep.subr.bf16.mxu0 0
    %2416 = vmatpush1.bf16.msra.mxu0 %v1844
    %2417 = vmatprep.subr.bf16.mxu0 0
    %2418 = vmatpush1.bf16.msra.mxu0 %v1845
    %2419 = vmatprep.subr.bf16.mxu0 0
    %2420 = vmatpush1.bf16.msra.mxu0 %v1846
    %2421 = vmatprep.subr.bf16.mxu0 0
    %2422 = vmatpush1.bf16.msra.mxu0 %v1847
    %2423 = vmatprep.subr.bf16.mxu0 0
    %2424 = vmatpush1.bf16.msra.mxu0 %v1848
    %2425 = vmatprep.mubr.bf16.mxu0 %v593
    %2426 = vmatmul.mubr.bf16.gmra.mrb[0].mxu0 %v579
    %v2427 = vpop.f32.mrb[0].mxu0
    %v2428 = vadd.f32 %v2388, %v2427
    %v2429 = vpop.f32.mrb[0].mxu0
    %v2430 = vpop.f32.mrb[0].mxu0
    %v2431 = vpop.f32.mrb[0].mxu0
    %2432 = vdwg.mxu0
    %2433 = vmatprep.subr.bf16.mxu0 0
    %2434 = vmatpush1.bf16.msra.mxu0 %v1849
    %2435 = vmatprep.subr.bf16.mxu0 0
    %2436 = vmatpush1.bf16.msra.mxu0 %v1850
    %2437 = vmatprep.subr.bf16.mxu0 0
    %2438 = vmatpush1.bf16.msra.mxu0 %v1851
    %2439 = vmatprep.subr.bf16.mxu0 0
    %2440 = vmatpush1.bf16.msra.mxu0 %v1852
    %2441 = vmatprep.subr.bf16.mxu0 0
    %2442 = vmatpush1.bf16.msra.mxu0 %v1853
    %2443 = vmatprep.subr.bf16.mxu0 0
    %2444 = vmatpush1.bf16.msra.mxu0 %v1854
    %2445 = vmatprep.subr.bf16.mxu0 0
    %2446 = vmatpush1.bf16.msra.mxu0 %v1855
    %2447 = vmatprep.subr.bf16.mxu0 0
    %2448 = vmatpush1.bf16.msra.mxu0 %v1856
    %2449 = vmatprep.subr.bf16.mxu0 0
    %2450 = vmatpush1.bf16.msra.mxu0 %v1857
    %2451 = vmatprep.subr.bf16.mxu0 0
    %2452 = vmatpush1.bf16.msra.mxu0 %v1858
    %2453 = vmatprep.subr.bf16.mxu0 0
    %2454 = vmatpush1.bf16.msra.mxu0 %v1859
    %2455 = vmatprep.subr.bf16.mxu0 0
    %2456 = vmatpush1.bf16.msra.mxu0 %v1860
    %2457 = vmatprep.subr.bf16.mxu0 0
    %2458 = vmatpush1.bf16.msra.mxu0 %v1861
    %2459 = vmatprep.subr.bf16.mxu0 0
    %2460 = vmatpush1.bf16.msra.mxu0 %v1862
    %2461 = vmatprep.subr.bf16.mxu0 0
    %2462 = vmatpush1.bf16.msra.mxu0 %v1863
    %2463 = vmatprep.subr.bf16.mxu0 0
    %2464 = vmatpush1.bf16.msra.mxu0 %v1864
    %2465 = vmatprep.mubr.bf16.mxu0 %v597
    %2466 = vmatmul.mubr.bf16.gmra.mrb[0].mxu0 %v595
    %v2467 = vpop.f32.mrb[0].mxu0
    %v2468 = vadd.f32 %v2428, %v2467
    %v2469 = vpop.f32.mrb[0].mxu0
    %v2470 = vpop.f32.mrb[0].mxu0
    %v2471 = vpop.f32.mrb[0].mxu0
    %2472 = vdwg.mxu0
    %2473 = vmatprep.subr.bf16.mxu0 0
    %2474 = vmatpush1.bf16.msra.mxu0 %v1865
    %2475 = vmatprep.subr.bf16.mxu0 0
    %2476 = vmatpush1.bf16.msra.mxu0 %v1866
    %2477 = vmatprep.subr.bf16.mxu0 0
    %2478 = vmatpush1.bf16.msra.mxu0 %v1867
    %2479 = vmatprep.subr.bf16.mxu0 0
    %2480 = vmatpush1.bf16.msra.mxu0 %v1868
    %2481 = vmatprep.subr.bf16.mxu0 0
    %2482 = vmatpush1.bf16.msra.mxu0 %v1869
    %2483 = vmatprep.subr.bf16.mxu0 0
    %2484 = vmatpush1.bf16.msra.mxu0 %v1870
    %2485 = vmatprep.subr.bf16.mxu0 0
    %2486 = vmatpush1.bf16.msra.mxu0 %v1871
    %2487 = vmatprep.subr.bf16.mxu0 0
    %2488 = vmatpush1.bf16.msra.mxu0 %v1872
    %2489 = vmatprep.subr.bf16.mxu0 0
    %2490 = vmatpush1.bf16.msra.mxu0 %v1873
    %2491 = vmatprep.subr.bf16.mxu0 0
    %2492 = vmatpush1.bf16.msra.mxu0 %v1874
    %2493 = vmatprep.subr.bf16.mxu0 0
    %2494 = vmatpush1.bf16.msra.mxu0 %v1875
    %2495 = vmatprep.subr.bf16.mxu0 0
    %2496 = vmatpush1.bf16.msra.mxu0 %v1876
    %2497 = vmatprep.subr.bf16.mxu0 0
    %2498 = vmatpush1.bf16.msra.mxu0 %v1877
    %2499 = vmatprep.subr.bf16.mxu0 0
    %2500 = vmatpush1.bf16.msra.mxu0 %v1878
    %2501 = vmatprep.subr.bf16.mxu0 0
    %2502 = vmatpush1.bf16.msra.mxu0 %v1879
    %2503 = vmatprep.subr.bf16.mxu0 0
    %2504 = vmatpush1.bf16.msra.mxu0 %v1880
    %2505 = vmatprep.mubr.bf16.mxu0 %v635
    %2506 = vmatmul.mubr.bf16.gmra.mrb[0].mxu0 %v621
    %v2507 = vpop.f32.mrb[0].mxu0
    %v2508 = vadd.f32 %v2468, %v2507
    %v2509 = vpop.f32.mrb[0].mxu0
    %v2510 = vpop.f32.mrb[0].mxu0
    %v2511 = vpop.f32.mrb[0].mxu0
    %2512 = vdwg.mxu0
    %2513 = vmatprep.subr.bf16.mxu0 0
    %2514 = vmatpush1.bf16.msra.mxu0 %v1881
    %2515 = vmatprep.subr.bf16.mxu0 0
    %2516 = vmatpush1.bf16.msra.mxu0 %v1882
    %2517 = vmatprep.subr.bf16.mxu0 0
    %2518 = vmatpush1.bf16.msra.mxu0 %v1883
    %2519 = vmatprep.subr.bf16.mxu0 0
    %2520 = vmatpush1.bf16.msra.mxu0 %v1884
    %2521 = vmatprep.subr.bf16.mxu0 0
    %2522 = vmatpush1.bf16.msra.mxu0 %v1885
    %2523 = vmatprep.subr.bf16.mxu0 0
    %2524 = vmatpush1.bf16.msra.mxu0 %v1886
    %2525 = vmatprep.subr.bf16.mxu0 0
    %2526 = vmatpush1.bf16.msra.mxu0 %v1887
    %2527 = vmatprep.subr.bf16.mxu0 0
    %2528 = vmatpush1.bf16.msra.mxu0 %v1888
    %2529 = vmatprep.subr.bf16.mxu0 0
    %2530 = vmatpush1.bf16.msra.mxu0 %v1889
    %2531 = vmatprep.subr.bf16.mxu0 0
    %2532 = vmatpush1.bf16.msra.mxu0 %v1890
    %2533 = vmatprep.subr.bf16.mxu0 0
    %2534 = vmatpush1.bf16.msra.mxu0 %v1891
    %2535 = vmatprep.subr.bf16.mxu0 0
    %2536 = vmatpush1.bf16.msra.mxu0 %v1892
    %2537 = vmatprep.subr.bf16.mxu0 0
    %2538 = vmatpush1.bf16.msra.mxu0 %v1893
    %2539 = vmatprep.subr.bf16.mxu0 0
    %2540 = vmatpush1.bf16.msra.mxu0 %v1894
    %2541 = vmatprep.subr.bf16.mxu0 0
    %2542 = vmatpush1.bf16.msra.mxu0 %v1895
    %2543 = vmatprep.subr.bf16.mxu0 0
    %2544 = vmatpush1.bf16.msra.mxu0 %v1896
    %2545 = vmatprep.mubr.bf16.mxu0 %v645
    %2546 = vmatmul.mubr.bf16.gmra.mrb[0].mxu0 %v643
    %v2547 = vpop.f32.mrb[0].mxu0
    %v2548 = vadd.f32 %v2508, %v2547
    %v2549 = vpop.f32.mrb[0].mxu0
    %v2550 = vpop.f32.mrb[0].mxu0
    %v2551 = vpop.f32.mrb[0].mxu0
    %2552 = vdwg.mxu0
    %2553 = vmatprep.subr.bf16.mxu0 0
    %2554 = vmatpush1.bf16.msra.mxu0 %v1897
    %2555 = vmatprep.subr.bf16.mxu0 0
    %2556 = vmatpush1.bf16.msra.mxu0 %v1898
    %2557 = vmatprep.subr.bf16.mxu0 0
    %2558 = vmatpush1.bf16.msra.mxu0 %v1899
    %2559 = vmatprep.subr.bf16.mxu0 0
    %2560 = vmatpush1.bf16.msra.mxu0 %v1900
    %2561 = vmatprep.subr.bf16.mxu0 0
    %2562 = vmatpush1.bf16.msra.mxu0 %v1901
    %2563 = vmatprep.subr.bf16.mxu0 0
    %2564 = vmatpush1.bf16.msra.mxu0 %v1902
    %2565 = vmatprep.subr.bf16.mxu0 0
    %2566 = vmatpush1.bf16.msra.mxu0 %v1903
    %2567 = vmatprep.subr.bf16.mxu0 0
    %2568 = vmatpush1.bf16.msra.mxu0 %v1904
    %2569 = vmatprep.subr.bf16.mxu0 0
    %2570 = vmatpush1.bf16.msra.mxu0 %v1905
    %2571 = vmatprep.subr.bf16.mxu0 0
    %2572 = vmatpush1.bf16.msra.mxu0 %v1906
    %2573 = vmatprep.subr.bf16.mxu0 0
    %2574 = vmatpush1.bf16.msra.mxu0 %v1907
    %2575 = vmatprep.subr.bf16.mxu0 0
    %2576 = vmatpush1.bf16.msra.mxu0 %v1908
    %2577 = vmatprep.subr.bf16.mxu0 0
    %2578 = vmatpush1.bf16.msra.mxu0 %v1909
    %2579 = vmatprep.subr.bf16.mxu0 0
    %2580 = vmatpush1.bf16.msra.mxu0 %v1910
    %2581 = vmatprep.subr.bf16.mxu0 0
    %2582 = vmatpush1.bf16.msra.mxu0 %v1911
    %2583 = vmatprep.subr.bf16.mxu0 0
    %2584 = vmatpush1.bf16.msra.mxu0 %v1912
    %2585 = vmatprep.mubr.bf16.mxu0 %v642
    %2586 = vmatmul.mubr.bf16.gmra.mrb[0].mxu0 %v628
    %v2587 = vpop.f32.mrb[0].mxu0
    %v2588 = vadd.f32 %v2548, %v2587
    %v2589 = vpop.f32.mrb[0].mxu0
    %v2590 = vpop.f32.mrb[0].mxu0
    %v2591 = vpop.f32.mrb[0].mxu0
    %2592 = vdwg.mxu0
    %2593 = vmatprep.subr.bf16.mxu0 0
    %2594 = vmatpush1.bf16.msra.mxu0 %v1913
    %2595 = vmatprep.subr.bf16.mxu0 0
    %2596 = vmatpush1.bf16.msra.mxu0 %v1914
    %2597 = vmatprep.subr.bf16.mxu0 0
    %2598 = vmatpush1.bf16.msra.mxu0 %v1915
    %2599 = vmatprep.subr.bf16.mxu0 0
    %2600 = vmatpush1.bf16.msra.mxu0 %v1916
    %2601 = vmatprep.subr.bf16.mxu0 0
    %2602 = vmatpush1.bf16.msra.mxu0 %v1917
    %2603 = vmatprep.subr.bf16.mxu0 0
    %2604 = vmatpush1.bf16.msra.mxu0 %v1918
    %2605 = vmatprep.subr.bf16.mxu0 0
    %2606 = vmatpush1.bf16.msra.mxu0 %v1919
    %2607 = vmatprep.subr.bf16.mxu0 0
    %2608 = vmatpush1.bf16.msra.mxu0 %v1920
    %2609 = vmatprep.subr.bf16.mxu0 0
    %2610 = vmatpush1.bf16.msra.mxu0 %v1921
    %2611 = vmatprep.subr.bf16.mxu0 0
    %2612 = vmatpush1.bf16.msra.mxu0 %v1922
    %2613 = vmatprep.subr.bf16.mxu0 0
    %2614 = vmatpush1.bf16.msra.mxu0 %v1923
    %2615 = vmatprep.subr.bf16.mxu0 0
    %2616 = vmatpush1.bf16.msra.mxu0 %v1924
    %2617 = vmatprep.subr.bf16.mxu0 0
    %2618 = vmatpush1.bf16.msra.mxu0 %v1925
    %2619 = vmatprep.subr.bf16.mxu0 0
    %2620 = vmatpush1.bf16.msra.mxu0 %v1926
    %2621 = vmatprep.subr.bf16.mxu0 0
    %2622 = vmatpush1.bf16.msra.mxu0 %v1927
    %2623 = vmatprep.subr.bf16.mxu0 0
    %2624 = vmatpush1.bf16.msra.mxu0 %v1928
    %2625 = vmatprep.mubr.bf16.mxu0 %v646
    %2626 = vmatmul.mubr.bf16.gmra.mrb[0].mxu0 %v644
    %v2627 = vpop.f32.mrb[0].mxu0
    %v2628 = vadd.f32 %v2588, %v2627
    %v2629 = vpop.f32.mrb[0].mxu0
    %v2630 = vpop.f32.mrb[0].mxu0
    %v2631 = vpop.f32.mrb[0].mxu0
    %2632 = vdwg.mxu0
    %2633 = vmatprep.subr.bf16.mxu0 0
    %2634 = vmatpush1.bf16.msra.mxu0 %v1929
    %2635 = vmatprep.subr.bf16.mxu0 0
    %2636 = vmatpush1.bf16.msra.mxu0 %v1930
    %2637 = vmatprep.subr.bf16.mxu0 0
    %2638 = vmatpush1.bf16.msra.mxu0 %v1931
    %2639 = vmatprep.subr.bf16.mxu0 0
    %2640 = vmatpush1.bf16.msra.mxu0 %v1932
    %2641 = vmatprep.subr.bf16.mxu0 0
    %2642 = vmatpush1.bf16.msra.mxu0 %v1933
    %2643 = vmatprep.subr.bf16.mxu0 0
    %2644 = vmatpush1.bf16.msra.mxu0 %v1934
    %2645 = vmatprep.subr.bf16.mxu0 0
    %2646 = vmatpush1.bf16.msra.mxu0 %v1935
    %2647 = vmatprep.subr.bf16.mxu0 0
    %2648 = vmatpush1.bf16.msra.mxu0 %v1936
    %2649 = vmatprep.subr.bf16.mxu0 0
    %2650 = vmatpush1.bf16.msra.mxu0 %v1937
    %2651 = vmatprep.subr.bf16.mxu0 0
    %2652 = vmatpush1.bf16.msra.mxu0 %v1938
    %2653 = vmatprep.subr.bf16.mxu0 0
    %2654 = vmatpush1.bf16.msra.mxu0 %v1939
    %2655 = vmatprep.subr.bf16.mxu0 0
    %2656 = vmatpush1.bf16.msra.mxu0 %v1940
    %2657 = vmatprep.subr.bf16.mxu0 0
    %2658 = vmatpush1.bf16.msra.mxu0 %v1941
    %2659 = vmatprep.subr.bf16.mxu0 0
    %2660 = vmatpush1.bf16.msra.mxu0 %v1942
    %2661 = vmatprep.subr.bf16.mxu0 0
    %2662 = vmatpush1.bf16.msra.mxu0 %v1943
    %2663 = vmatprep.subr.bf16.mxu0 0
    %2664 = vmatpush1.bf16.msra.mxu0 %v1944
    %2665 = vmatprep.mubr.bf16.mxu0 %v684
    %2666 = vmatmul.mubr.bf16.gmra.mrb[0].mxu0 %v670
    %v2667 = vpop.f32.mrb[0].mxu0
    %v2668 = vadd.f32 %v2628, %v2667
    %v2669 = vpop.f32.mrb[0].mxu0
    %v2670 = vpop.f32.mrb[0].mxu0
    %v2671 = vpop.f32.mrb[0].mxu0
    %2672 = vdwg.mxu0
    %2673 = vmatprep.subr.bf16.mxu0 0
    %2674 = vmatpush1.bf16.msra.mxu0 %v1945
    %2675 = vmatprep.subr.bf16.mxu0 0
    %2676 = vmatpush1.bf16.msra.mxu0 %v1946
    %2677 = vmatprep.subr.bf16.mxu0 0
    %2678 = vmatpush1.bf16.msra.mxu0 %v1947
    %2679 = vmatprep.subr.bf16.mxu0 0
    %2680 = vmatpush1.bf16.msra.mxu0 %v1948
    %2681 = vmatprep.subr.bf16.mxu0 0
    %2682 = vmatpush1.bf16.msra.mxu0 %v1949
    %2683 = vmatprep.subr.bf16.mxu0 0
    %2684 = vmatpush1.bf16.msra.mxu0 %v1950
    %2685 = vmatprep.subr.bf16.mxu0 0
    %2686 = vmatpush1.bf16.msra.mxu0 %v1951
    %2687 = vmatprep.subr.bf16.mxu0 0
    %2688 = vmatpush1.bf16.msra.mxu0 %v1952
    %2689 = vmatprep.subr.bf16.mxu0 0
    %2690 = vmatpush1.bf16.msra.mxu0 %v1953
    %2691 = vmatprep.subr.bf16.mxu0 0
    %2692 = vmatpush1.bf16.msra.mxu0 %v1954
    %2693 = vmatprep.subr.bf16.mxu0 0
    %2694 = vmatpush1.bf16.msra.mxu0 %v1955
    %2695 = vmatprep.subr.bf16.mxu0 0
    %2696 = vmatpush1.bf16.msra.mxu0 %v1956
    %2697 = vmatprep.subr.bf16.mxu0 0
    %2698 = vmatpush1.bf16.msra.mxu0 %v1957
    %2699 = vmatprep.subr.bf16.mxu0 0
    %2700 = vmatpush1.bf16.msra.mxu0 %v1958
    %2701 = vmatprep.subr.bf16.mxu0 0
    %2702 = vmatpush1.bf16.msra.mxu0 %v1959
    %2703 = vmatprep.subr.bf16.mxu0 0
    %2704 = vmatpush1.bf16.msra.mxu0 %v1960
    %2705 = vmatprep.mubr.bf16.mxu0 %v694
    %2706 = vmatmul.mubr.bf16.gmra.mrb[0].mxu0 %v692
    %v2707 = vpop.f32.mrb[0].mxu0
    %v2708 = vadd.f32 %v2668, %v2707
    %v2709 = vpop.f32.mrb[0].mxu0
    %v2710 = vpop.f32.mrb[0].mxu0
    %v2711 = vpop.f32.mrb[0].mxu0
    %2712 = vdwg.mxu0
    %2713 = vmatprep.subr.bf16.mxu0 0
    %2714 = vmatpush1.bf16.msra.mxu0 %v1961
    %2715 = vmatprep.subr.bf16.mxu0 0
    %2716 = vmatpush1.bf16.msra.mxu0 %v1962
    %2717 = vmatprep.subr.bf16.mxu0 0
    %2718 = vmatpush1.bf16.msra.mxu0 %v1963
    %2719 = vmatprep.subr.bf16.mxu0 0
    %2720 = vmatpush1.bf16.msra.mxu0 %v1964
    %2721 = vmatprep.subr.bf16.mxu0 0
    %2722 = vmatpush1.bf16.msra.mxu0 %v1965
    %2723 = vmatprep.subr.bf16.mxu0 0
    %2724 = vmatpush1.bf16.msra.mxu0 %v1966
    %2725 = vmatprep.subr.bf16.mxu0 0
    %2726 = vmatpush1.bf16.msra.mxu0 %v1967
    %2727 = vmatprep.subr.bf16.mxu0 0
    %2728 = vmatpush1.bf16.msra.mxu0 %v1968
    %2729 = vmatprep.subr.bf16.mxu0 0
    %2730 = vmatpush1.bf16.msra.mxu0 %v1969
    %2731 = vmatprep.subr.bf16.mxu0 0
    %2732 = vmatpush1.bf16.msra.mxu0 %v1970
    %2733 = vmatprep.subr.bf16.mxu0 0
    %2734 = vmatpush1.bf16.msra.mxu0 %v1971
    %2735 = vmatprep.subr.bf16.mxu0 0
    %2736 = vmatpush1.bf16.msra.mxu0 %v1972
    %2737 = vmatprep.subr.bf16.mxu0 0
    %2738 = vmatpush1.bf16.msra.mxu0 %v1973
    %2739 = vmatprep.subr.bf16.mxu0 0
    %2740 = vmatpush1.bf16.msra.mxu0 %v1974
    %2741 = vmatprep.subr.bf16.mxu0 0
    %2742 = vmatpush1.bf16.msra.mxu0 %v1975
    %2743 = vmatprep.subr.bf16.mxu0 0
    %2744 = vmatpush1.bf16.msra.mxu0 %v1976
    %2745 = vmatprep.mubr.bf16.mxu0 %v691
    %2746 = vmatmul.mubr.bf16.gmra.mrb[0].mxu0 %v677
    %v2747 = vpop.f32.mrb[0].mxu0
    %v2748 = vadd.f32 %v2708, %v2747
    %v2749 = vpop.f32.mrb[0].mxu0
    %v2750 = vpop.f32.mrb[0].mxu0
    %v2751 = vpop.f32.mrb[0].mxu0
    %2752 = vdwg.mxu0
    %2753 = vmatprep.subr.bf16.mxu0 0
    %2754 = vmatpush1.bf16.msra.mxu0 %v1977
    %2755 = vmatprep.subr.bf16.mxu0 0
    %2756 = vmatpush1.bf16.msra.mxu0 %v1978
    %2757 = vmatprep.subr.bf16.mxu0 0
    %2758 = vmatpush1.bf16.msra.mxu0 %v1979
    %2759 = vmatprep.subr.bf16.mxu0 0
    %2760 = vmatpush1.bf16.msra.mxu0 %v1980
    %2761 = vmatprep.subr.bf16.mxu0 0
    %2762 = vmatpush1.bf16.msra.mxu0 %v1981
    %2763 = vmatprep.subr.bf16.mxu0 0
    %2764 = vmatpush1.bf16.msra.mxu0 %v1982
    %2765 = vmatprep.subr.bf16.mxu0 0
    %2766 = vmatpush1.bf16.msra.mxu0 %v1983
    %2767 = vmatprep.subr.bf16.mxu0 0
    %2768 = vmatpush1.bf16.msra.mxu0 %v1984
    %2769 = vmatprep.subr.bf16.mxu0 0
    %2770 = vmatpush1.bf16.msra.mxu0 %v1985
    %2771 = vmatprep.subr.bf16.mxu0 0
    %2772 = vmatpush1.bf16.msra.mxu0 %v1986
    %2773 = vmatprep.subr.bf16.mxu0 0
    %2774 = vmatpush1.bf16.msra.mxu0 %v1987
    %2775 = vmatprep.subr.bf16.mxu0 0
    %2776 = vmatpush1.bf16.msra.mxu0 %v1988
    %2777 = vmatprep.subr.bf16.mxu0 0
    %2778 = vmatpush1.bf16.msra.mxu0 %v1989
    %2779 = vmatprep.subr.bf16.mxu0 0
    %2780 = vmatpush1.bf16.msra.mxu0 %v1990
    %2781 = vmatprep.subr.bf16.mxu0 0
    %2782 = vmatpush1.bf16.msra.mxu0 %v1991
    %2783 = vmatprep.subr.bf16.mxu0 0
    %2784 = vmatpush1.bf16.msra.mxu0 %v1992
    %2785 = vmatprep.mubr.bf16.mxu0 %v695
    %2786 = vmatmul.mubr.bf16.gmra.mrb[0].mxu0 %v693
    %v2787 = vpop.f32.mrb[0].mxu0
    %v2788 = vadd.f32 %v2748, %v2787
    %v2789 = vpop.f32.mrb[0].mxu0
    %v2790 = vpop.f32.mrb[0].mxu0
    %v2791 = vpop.f32.mrb[0].mxu0
    %2792 = vdwg.mxu0
    %2793 = vmatprep.subr.bf16.mxu0 0
    %2794 = vmatpush1.bf16.msra.mxu0 %v1993
    %2795 = vmatprep.subr.bf16.mxu0 0
    %2796 = vmatpush1.bf16.msra.mxu0 %v1994
    %2797 = vmatprep.subr.bf16.mxu0 0
    %2798 = vmatpush1.bf16.msra.mxu0 %v1995
    %2799 = vmatprep.subr.bf16.mxu0 0
    %2800 = vmatpush1.bf16.msra.mxu0 %v1996
    %2801 = vmatprep.subr.bf16.mxu0 0
    %2802 = vmatpush1.bf16.msra.mxu0 %v1997
    %2803 = vmatprep.subr.bf16.mxu0 0
    %2804 = vmatpush1.bf16.msra.mxu0 %v1998
    %2805 = vmatprep.subr.bf16.mxu0 0
    %2806 = vmatpush1.bf16.msra.mxu0 %v1999
    %2807 = vmatprep.subr.bf16.mxu0 0
    %2808 = vmatpush1.bf16.msra.mxu0 %v2000
    %2809 = vmatprep.subr.bf16.mxu0 0
    %2810 = vmatpush1.bf16.msra.mxu0 %v2001
    %2811 = vmatprep.subr.bf16.mxu0 0
    %2812 = vmatpush1.bf16.msra.mxu0 %v2002
    %2813 = vmatprep.subr.bf16.mxu0 0
    %2814 = vmatpush1.bf16.msra.mxu0 %v2003
    %2815 = vmatprep.subr.bf16.mxu0 0
    %2816 = vmatpush1.bf16.msra.mxu0 %v2004
    %2817 = vmatprep.subr.bf16.mxu0 0
    %2818 = vmatpush1.bf16.msra.mxu0 %v2005
    %2819 = vmatprep.subr.bf16.mxu0 0
    %2820 = vmatpush1.bf16.msra.mxu0 %v2006
    %2821 = vmatprep.subr.bf16.mxu0 0
    %2822 = vmatpush1.bf16.msra.mxu0 %v2007
    %2823 = vmatprep.subr.bf16.mxu0 0
    %2824 = vmatpush1.bf16.msra.mxu0 %v2008
    %2825 = vmatprep.mubr.bf16.mxu0 %v733
    %2826 = vmatmul.mubr.bf16.gmra.mrb[0].mxu0 %v719
    %v2827 = vpop.f32.mrb[0].mxu0
    %v2828 = vadd.f32 %v2788, %v2827
    %v2829 = vpop.f32.mrb[0].mxu0
    %v2830 = vpop.f32.mrb[0].mxu0
    %v2831 = vpop.f32.mrb[0].mxu0
    %2832 = vdwg.mxu0
    %2833 = vmatprep.subr.bf16.mxu0 0
    %2834 = vmatpush1.bf16.msra.mxu0 %v2009
    %2835 = vmatprep.subr.bf16.mxu0 0
    %2836 = vmatpush1.bf16.msra.mxu0 %v2010
    %2837 = vmatprep.subr.bf16.mxu0 0
    %2838 = vmatpush1.bf16.msra.mxu0 %v2011
    %2839 = vmatprep.subr.bf16.mxu0 0
    %2840 = vmatpush1.bf16.msra.mxu0 %v2012
    %2841 = vmatprep.subr.bf16.mxu0 0
    %2842 = vmatpush1.bf16.msra.mxu0 %v2013
    %2843 = vmatprep.subr.bf16.mxu0 0
    %2844 = vmatpush1.bf16.msra.mxu0 %v2014
    %2845 = vmatprep.subr.bf16.mxu0 0
    %2846 = vmatpush1.bf16.msra.mxu0 %v2015
    %2847 = vmatprep.subr.bf16.mxu0 0
    %2848 = vmatpush1.bf16.msra.mxu0 %v2016
    %2849 = vmatprep.subr.bf16.mxu0 0
    %2850 = vmatpush1.bf16.msra.mxu0 %v2017
    %2851 = vmatprep.subr.bf16.mxu0 0
    %2852 = vmatpush1.bf16.msra.mxu0 %v2018
    %2853 = vmatprep.subr.bf16.mxu0 0
    %2854 = vmatpush1.bf16.msra.mxu0 %v2019
    %2855 = vmatprep.subr.bf16.mxu0 0
    %2856 = vmatpush1.bf16.msra.mxu0 %v2020
    %2857 = vmatprep.subr.bf16.mxu0 0
    %2858 = vmatpush1.bf16.msra.mxu0 %v2021
    %2859 = vmatprep.subr.bf16.mxu0 0
    %2860 = vmatpush1.bf16.msra.mxu0 %v2022
    %2861 = vmatprep.subr.bf16.mxu0 0
    %2862 = vmatpush1.bf16.msra.mxu0 %v2023
    %2863 = vmatprep.subr.bf16.mxu0 0
    %2864 = vmatpush1.bf16.msra.mxu0 %v2024
    %2865 = vmatprep.mubr.bf16.mxu0 %v743
    %2866 = vmatmul.mubr.bf16.gmra.mrb[0].mxu0 %v741
    %v2867 = vpop.f32.mrb[0].mxu0
    %v2868 = vadd.f32 %v2828, %v2867
    %v2869 = vpop.f32.mrb[0].mxu0
    %v2870 = vpop.f32.mrb[0].mxu0
    %v2871 = vpop.f32.mrb[0].mxu0
    %2872 = vdwg.mxu0
    %2873 = vmatprep.subr.bf16.mxu0 0
    %2874 = vmatpush1.bf16.msra.mxu0 %v2025
    %2875 = vmatprep.subr.bf16.mxu0 0
    %2876 = vmatpush1.bf16.msra.mxu0 %v2026
    %2877 = vmatprep.subr.bf16.mxu0 0
    %2878 = vmatpush1.bf16.msra.mxu0 %v2027
    %2879 = vmatprep.subr.bf16.mxu0 0
    %2880 = vmatpush1.bf16.msra.mxu0 %v2028
    %2881 = vmatprep.subr.bf16.mxu0 0
    %2882 = vmatpush1.bf16.msra.mxu0 %v2029
    %2883 = vmatprep.subr.bf16.mxu0 0
    %2884 = vmatpush1.bf16.msra.mxu0 %v2030
    %2885 = vmatprep.subr.bf16.mxu0 0
    %2886 = vmatpush1.bf16.msra.mxu0 %v2031
    %2887 = vmatprep.subr.bf16.mxu0 0
    %2888 = vmatpush1.bf16.msra.mxu0 %v2032
    %2889 = vmatprep.subr.bf16.mxu0 0
    %2890 = vmatpush1.bf16.msra.mxu0 %v2033
    %2891 = vmatprep.subr.bf16.mxu0 0
    %2892 = vmatpush1.bf16.msra.mxu0 %v2034
    %2893 = vmatprep.subr.bf16.mxu0 0
    %2894 = vmatpush1.bf16.msra.mxu0 %v2035
    %2895 = vmatprep.subr.bf16.mxu0 0
    %2896 = vmatpush1.bf16.msra.mxu0 %v2036
    %2897 = vmatprep.subr.bf16.mxu0 0
    %2898 = vmatpush1.bf16.msra.mxu0 %v2037
    %2899 = vmatprep.subr.bf16.mxu0 0
    %2900 = vmatpush1.bf16.msra.mxu0 %v2038
    %2901 = vmatprep.subr.bf16.mxu0 0
    %2902 = vmatpush1.bf16.msra.mxu0 %v2039
    %2903 = vmatprep.subr.bf16.mxu0 0
    %2904 = vmatpush1.bf16.msra.mxu0 %v2040
    %2905 = vmatprep.mubr.bf16.mxu0 %v740
    %2906 = vmatmul.mubr.bf16.gmra.mrb[0].mxu0 %v726
    %v2907 = vpop.f32.mrb[0].mxu0
    %v2908 = vadd.f32 %v2868, %v2907
    %v2909 = vpop.f32.mrb[0].mxu0
    %v2910 = vpop.f32.mrb[0].mxu0
    %v2911 = vpop.f32.mrb[0].mxu0
    %2912 = vdwg.mxu0
    %2913 = vmatprep.subr.bf16.mxu0 0
    %2914 = vmatpush1.bf16.msra.mxu0 %v2041
    %2915 = vmatprep.subr.bf16.mxu0 0
    %2916 = vmatpush1.bf16.msra.mxu0 %v2042
    %2917 = vmatprep.subr.bf16.mxu0 0
    %2918 = vmatpush1.bf16.msra.mxu0 %v2043
    %2919 = vmatprep.subr.bf16.mxu0 0
    %2920 = vmatpush1.bf16.msra.mxu0 %v2044
    %2921 = vmatprep.subr.bf16.mxu0 0
    %2922 = vmatpush1.bf16.msra.mxu0 %v2045
    %2923 = vmatprep.subr.bf16.mxu0 0
    %2924 = vmatpush1.bf16.msra.mxu0 %v2046
    %2925 = vmatprep.subr.bf16.mxu0 0
    %2926 = vmatpush1.bf16.msra.mxu0 %v2047
    %2927 = vmatprep.subr.bf16.mxu0 0
    %2928 = vmatpush1.bf16.msra.mxu0 %v2048
    %2929 = vmatprep.subr.bf16.mxu0 0
    %2930 = vmatpush1.bf16.msra.mxu0 %v2049
    %2931 = vmatprep.subr.bf16.mxu0 0
    %2932 = vmatpush1.bf16.msra.mxu0 %v2050
    %2933 = vmatprep.subr.bf16.mxu0 0
    %2934 = vmatpush1.bf16.msra.mxu0 %v2051
    %2935 = vmatprep.subr.bf16.mxu0 0
    %2936 = vmatpush1.bf16.msra.mxu0 %v2052
    %2937 = vmatprep.subr.bf16.mxu0 0
    %2938 = vmatpush1.bf16.msra.mxu0 %v2053
    %2939 = vmatprep.subr.bf16.mxu0 0
    %2940 = vmatpush1.bf16.msra.mxu0 %v2054
    %2941 = vmatprep.subr.bf16.mxu0 0
    %2942 = vmatpush1.bf16.msra.mxu0 %v2055
    %2943 = vmatprep.subr.bf16.mxu0 0
    %2944 = vmatpush1.bf16.msra.mxu0 %v2056
    %2945 = vmatprep.mubr.bf16.mxu0 %v744
    %2946 = vmatmul.mubr.bf16.gmra.mrb[0].mxu0 %v742
    %v2947 = vpop.f32.mrb[0].mxu0
    %v2948 = vadd.f32 %v2908, %v2947
    %v2949 = vpop.f32.mrb[0].mxu0
    %v2950 = vpop.f32.mrb[0].mxu0
    %v2951 = vpop.f32.mrb[0].mxu0
    %2952 = vdwg.mxu0
    %v2953 = vmax.f32 %v2948, 0.0
    %v2954 = vpack.c.bf16 %v2953, %v2953
    %v2955 = vld [vmem:[%s3] sm:$0xf]
    %v2956 = vld [vmem:[%s3 + $0x4] sm:$0xf]
    %v2957 = vld [vmem:[%s3 + $0x8] sm:$0xf]
    %v2958 = vld [vmem:[%s3 + $0xc] sm:$0xf]
    %v2959 = vld [vmem:[%s3 + $0x10] sm:$0xf]
    %v2960 = vld [vmem:[%s3 + $0x14] sm:$0xf]
    %v2961 = vld [vmem:[%s3 + $0x18] sm:$0xf]
    %v2962 = vld [vmem:[%s3 + $0x1c] sm:$0xf]
    %v2963 = vld [vmem:[%s3 + $0x20] sm:$0xf]
    %v2964 = vld [vmem:[%s3 + $0x24] sm:$0xf]
    %v2965 = vld [vmem:[%s3 + $0x28] sm:$0xf]
    %v2966 = vld [vmem:[%s3 + $0x2c] sm:$0xf]
    %v2967 = vld [vmem:[%s3 + $0x30] sm:$0xf]
    %v2968 = vld [vmem:[%s3 + $0x34] sm:$0xf]
    %v2969 = vld [vmem:[%s3 + $0x38] sm:$0xf]
    %v2970 = vld [vmem:[%s3 + $0x3c] sm:$0xf]
    %v2971 = vld [vmem:[%s4] sm:$0x1]
    %v2973 = vlaneseq
    %v2974 = vshrl.u32 %v2973, 7
    %v2975 = vsub.s32 0, %v2974
    %v2976 = vrot.slane %v2971, %v2975
    %v2994 = vunpack.c.l.b16 %v2955
    %v2995 = vunpack.c.l.b16 %v2956
    %v2996 = vunpack.c.l.b16 %v2957
    %v2997 = vunpack.c.l.b16 %v2958
    %v2998 = vunpack.c.l.b16 %v2959
    %v2999 = vunpack.c.l.b16 %v2960
    %v3000 = vunpack.c.l.b16 %v2961
    %v3001 = vunpack.c.l.b16 %v2962
    %v3002 = vunpack.c.l.b16 %v2963
    %v3003 = vunpack.c.l.b16 %v2964
    %v3004 = vunpack.c.l.b16 %v2965
    %v3005 = vunpack.c.l.b16 %v2966
    %v3006 = vunpack.c.l.b16 %v2967
    %v3007 = vunpack.c.l.b16 %v2968
    %v3008 = vunpack.c.l.b16 %v2969
    %v3009 = vunpack.c.l.b16 %v2970
    %v3010 = vpack.c.b16 %v2995, %v2994
    %v3011 = vpack.c.b16 %v2997, %v2996
    %v3012 = vpack.c.b16 %v2999, %v2998
    %v3013 = vpack.c.b16 %v3001, %v3000
    %v3014 = vpack.c.b16 %v3003, %v3002
    %v3015 = vpack.c.b16 %v3005, %v3004
    %v3016 = vpack.c.b16 %v3007, %v3006
    %v3017 = vpack.c.b16 %v3009, %v3008
    %3026 = vmatprep.subr.bf16.mxu0 0
    %3027 = vmatpush1.bf16.msra.mxu0 %v3010
    %3028 = vmatprep.subr.bf16.mxu0 0
    %3029 = vmatpush1.bf16.msra.mxu0 %v3011
    %3030 = vmatprep.subr.bf16.mxu0 0
    %3031 = vmatpush1.bf16.msra.mxu0 %v3012
    %3032 = vmatprep.subr.bf16.mxu0 0
    %3033 = vmatpush1.bf16.msra.mxu0 %v3013
    %3034 = vmatprep.subr.bf16.mxu0 0
    %3035 = vmatpush1.bf16.msra.mxu0 %v3014
    %3036 = vmatprep.subr.bf16.mxu0 0
    %3037 = vmatpush1.bf16.msra.mxu0 %v3015
    %3038 = vmatprep.subr.bf16.mxu0 0
    %3039 = vmatpush1.bf16.msra.mxu0 %v3016
    %3040 = vmatprep.subr.bf16.mxu0 0
    %3041 = vmatpush1.bf16.msra.mxu0 %v3017
    %3042 = vmatprep.subr.bf16.mxu0 0
    %3043 = vmatpush1.bf16.msra.mxu0 0
    %3044 = vmatprep.subr.bf16.mxu0 0
    %3045 = vmatpush1.bf16.msra.mxu0 0
    %3046 = vmatprep.subr.bf16.mxu0 0
    %3047 = vmatpush1.bf16.msra.mxu0 0
    %3048 = vmatprep.subr.bf16.mxu0 0
    %3049 = vmatpush1.bf16.msra.mxu0 0
    %3050 = vmatprep.subr.bf16.mxu0 0
    %3051 = vmatpush1.bf16.msra.mxu0 0
    %3052 = vmatprep.subr.bf16.mxu0 0
    %3053 = vmatpush1.bf16.msra.mxu0 0
    %3054 = vmatprep.subr.bf16.mxu0 0
    %3055 = vmatpush1.bf16.msra.mxu0 0
    %3056 = vmatprep.subr.bf16.mxu0 0
    %3057 = vmatpush1.bf16.msra.mxu0 0
    %3058 = vmatprep.mubr.bf16.mxu0 0
    %3059 = vmatmul.mubr.bf16.gmra.mrb[0].mxu0 %v2954
    %v3060 = vpop.f32.mrb[0].mxu0
    %v3061 = vadd.f32 %v2976, %v3060
    %v3062 = vpop.f32.mrb[0].mxu0
    %v3063 = vpop.f32.mrb[0].mxu0
    %v3064 = vpop.f32.mrb[0].mxu0
    %3065 = vdwg.mxu0
    %vm3066 = vcmask 74752
    %v3067 = vsel %vm3066, %v3061, -inf
    %3068 = vmax.xlane.f32.xlu0 %v3067
    %v3069 = vpop.xlane.xlu0 %3068
    %v3070 = vsub.f32 %v3061, %v3069
    %v3071 = vmul.f32 %v3070, 1.442695
    %v3072 = vpow.pop %v3071
    %v3073 = vsel %vm3066, %v3072, 0.0
    %3074 = vadd.xlane.f32.xlu0 %v3073
    %v3075 = vpop.xlane.xlu0 %3074
    %v3076 = vlog2.pop %v3075
    %v3077 = vmul.f32 %v3076, 0.6931472
    %v3078 = vsub.f32 %v3070, %v3077
    %3079 = vst.msk [vmem:[#allocation2] sm:$0x3] %vm3066, %v3078
    // Predicated region
    $region22: #{mynet_forward.3} parent=1 // pred_check
      _
    $region23: #{mynet_forward.3} parent=1 // pred_check_branch
      %3081 = sbr.rel (0) target = $region25
    $region24: #{mynet_forward.3} parent=1 // pred_region
      %s3083 = ssub.s32 32, 32
      %3084 = vsyncadd [#allocation3], %s3083
      %s3086 = sshll.u32 [#allocation2], 4
      %s3087 = int_to_ptr.vmem [resolvable:$true] %s3086
      %3089 = dma.vmem_to_hbm [thread:$0]  %s3087, 32, %s5, [#allocation3]
    $region25: #{mynet_forward.3} parent=1 // pred_fallthru
      _
    // Predicated region
    $region26: #{mynet_forward.3} parent=1 // pred_check
      _
    $region27: #{mynet_forward.3} parent=1 // pred_check_branch
      %3091 = sbr.rel (0) target = $region29
    $region28: #{mynet_forward.3} parent=1 // pred_region
      %3092 = dma.done [#allocation3], 32
    $region29: #{mynet_forward.3} parent=1 // pred_fallthru
      _
    %3093 = vsyncpa [#allocation3], 1

// kernel: mynet_forward.2
$region0: #{mynet_forward.2}
  #allocation0 [shape = 'u32[]', space=smem, size = 0x4, offset = 0x4, fixed_abs, tag = 'smem constant byte address 0x4 - core index']
  #allocation1 [shape = 'u32[144,128]{1,0:T(1,128)}', space=vmem, size = 0x12000, scoped, tag = 'internal scratch']
  %s0 = inlined_call_operand.vmem [shape: bf16[2,9,1024], index: 0, kind: input, shape index: {}]
  %s1 = inlined_call_operand.vmem [shape: bf16[32,9], index: 1, kind: input, shape index: {}]
  %s2 = inlined_call_operand.vmem [shape: f32[32,1], index: 2, kind: input, shape index: {}]
  %s3 = inlined_call_operand.vmem [shape: bf16[256,2304], index: 3, kind: input, shape index: {}]
  %s4 = inlined_call_operand.vmem [shape: bf16[9,64,32], index: 4, kind: input, shape index: {}]
  %s5 = inlined_call_operand.vmem [shape: f32[64,1], index: 5, kind: input, shape index: {}]
  %s6 = inlined_call_operand.vmem [shape: bf16[2,64,64], index: 6, kind: output, shape index: {}]
  %s7 = sld [smem:[#allocation0]]
  $region57: #{mynet_forward.2} parent=0
    _
  %s9 = ssub.s32 1, %s7
  %s10 = scalar_select 0, %s9, %s7
  loop: start=0, step=1, limit=4
  $region2: #{mynet_forward.2} parent=0 // loop_pre_header
    _
  $region3: #{mynet_forward.2} parent=0 // loop_header
    %s12 = sphi 0, %s16
    %p13 = scmp.ge.s32.totalorder %s12, 4
    %s22 = sphi 0, %s24
    %s25 = sphi 0, %s22
    %s26 = sphi 0, %s25
    %s42 = sphi 0, %s26
    %s46 = sphi 0, %s46
    %s48 = sphi 0, %s46
    %s49 = sphi 0, %s48
    %s63 = sphi 0, %s49
    %s67 = sphi 0, %s67
    %s69 = sphi 0, %s67
    %s70 = sphi 0, %s69
    %s84 = sphi 0, %s70
    %s88 = sphi 0, %s88
    %s90 = sphi 0, %s88
    %s91 = sphi 0, %s90
    %s105 = sphi 0, %s91
    %s109 = sphi 0, %s109
    %s111 = sphi 0, %s109
    %s112 = sphi 0, %s111
    %s126 = sphi 0, %s112
    %s130 = sphi 0, %s130
    %s132 = sphi 0, %s130
    %s133 = sphi 0, %s132
    %s147 = sphi 0, %s133
    %s153 = sphi 0, %s155
    %s156 = sphi 0, %s153
    %s157 = sphi 0, %s156
    %s173 = sphi 0, %s157
  $region4: #{mynet_forward.2} parent=0 // loop_header_branch
    %15 = sbr.rel (%p13) target = $region8
  $region5: #{mynet_forward.2} parent=0 // loop_body
    %s17 = ssub.s32 %s12, 1
    %s18 = ssub.s32 %s12, 2
    %s19 = sadd.s32 %s12, 1
    %s20 = ssub.s32 %s12, %s19
    %p21 = scmp.eq.s32.totalorder %s20, 0
    %s23 = sadd.s32 %s22, 1
    %s24 = scalar_select %p21, %s22, %s23
    %p27 = pneg %p21
    %p28 = scmp.eq.s32.totalorder %s12, 1
    %p29 = por %p27, %p28
    %p30 = scmp.ne.s32.totalorder %s22, %s25
    %p31 = scmp.eq.s32.totalorder %s12, 0
    %p32 = por %p30, %p31
    %p33 = scmp.ne.s32.totalorder %s22, %s25
    %p34 = scmp.eq.s32.totalorder %s17, 1
    %p35 = por %p33, %p34
    %p36 = scmp.ne.s32.totalorder %s25, %s26
    %p37 = scmp.eq.s32.totalorder %s17, 0
    %p38 = por %p36, %p37
    %p39 = scmp.ne.s32.totalorder %s25, %s26
    %p40 = scmp.eq.s32.totalorder %s18, 1
    %p41 = por %p39, %p40
    %p43 = scmp.ne.s32.totalorder %s26, %s42
    %p44 = scmp.eq.s32.totalorder %s18, 0
    %p45 = por %p43, %p44
    %s47 = sadd.s32 %s46, 1
    %p50 = scmp.eq.s32.totalorder %s12, 1
    %p51 = scmp.ne.s32.totalorder %s46, %s48
    %p52 = scmp.eq.s32.totalorder %s12, 0
    %p53 = por %p51, %p52
    %p54 = scmp.ne.s32.totalorder %s46, %s48
    %p55 = scmp.eq.s32.totalorder %s17, 1
    %p56 = por %p54, %p55
    %p57 = scmp.ne.s32.totalorder %s48, %s49
    %p58 = scmp.eq.s32.totalorder %s17, 0
    %p59 = por %p57, %p58
    %p60 = scmp.ne.s32.totalorder %s48, %s49
    %p61 = scmp.eq.s32.totalorder %s18, 1
    %p62 = por %p60, %p61
    %p64 = scmp.ne.s32.totalorder %s49, %s63
    %p65 = scmp.eq.s32.totalorder %s18, 0
    %p66 = por %p64, %p65
    %s68 = sadd.s32 %s67, 1
    %p71 = scmp.eq.s32.totalorder %s12, 1
    %p72 = scmp.ne.s32.totalorder %s67, %s69
    %p73 = scmp.eq.s32.totalorder %s12, 0
    %p74 = por %p72, %p73
    %p75 = scmp.ne.s32.totalorder %s67, %s69
    %p76 = scmp.eq.s32.totalorder %s17, 1
    %p77 = por %p75, %p76
    %p78 = scmp.ne.s32.totalorder %s69, %s70
    %p79 = scmp.eq.s32.totalorder %s17, 0
    %p80 = por %p78, %p79
    %p81 = scmp.ne.s32.totalorder %s69, %s70
    %p82 = scmp.eq.s32.totalorder %s18, 1
    %p83 = por %p81, %p82
    %p85 = scmp.ne.s32.totalorder %s70, %s84
    %p86 = scmp.eq.s32.totalorder %s18, 0
    %p87 = por %p85, %p86
    %s89 = sadd.s32 %s88, 1
    %p92 = scmp.eq.s32.totalorder %s12, 1
    %p93 = scmp.ne.s32.totalorder %s88, %s90
    %p94 = scmp.eq.s32.totalorder %s12, 0
    %p95 = por %p93, %p94
    %p96 = scmp.ne.s32.totalorder %s88, %s90
    %p97 = scmp.eq.s32.totalorder %s17, 1
    %p98 = por %p96, %p97
    %p99 = scmp.ne.s32.totalorder %s90, %s91
    %p100 = scmp.eq.s32.totalorder %s17, 0
    %p101 = por %p99, %p100
    %p102 = scmp.ne.s32.totalorder %s90, %s91
    %p103 = scmp.eq.s32.totalorder %s18, 1
    %p104 = por %p102, %p103
    %p106 = scmp.ne.s32.totalorder %s91, %s105
    %p107 = scmp.eq.s32.totalorder %s18, 0
    %p108 = por %p106, %p107
    %s110 = sadd.s32 %s109, 1
    %p113 = scmp.eq.s32.totalorder %s12, 1
    %p114 = scmp.ne.s32.totalorder %s109, %s111
    %p115 = scmp.eq.s32.totalorder %s12, 0
    %p116 = por %p114, %p115
    %p117 = scmp.ne.s32.totalorder %s109, %s111
    %p118 = scmp.eq.s32.totalorder %s17, 1
    %p119 = por %p117, %p118
    %p120 = scmp.ne.s32.totalorder %s111, %s112
    %p121 = scmp.eq.s32.totalorder %s17, 0
    %p122 = por %p120, %p121
    %p123 = scmp.ne.s32.totalorder %s111, %s112
    %p124 = scmp.eq.s32.totalorder %s18, 1
    %p125 = por %p123, %p124
    %p127 = scmp.ne.s32.totalorder %s112, %s126
    %p128 = scmp.eq.s32.totalorder %s18, 0
    %p129 = por %p127, %p128
    %s131 = sadd.s32 %s130, 1
    %p134 = scmp.eq.s32.totalorder %s12, 1
    %p135 = scmp.ne.s32.totalorder %s130, %s132
    %p136 = scmp.eq.s32.totalorder %s12, 0
    %p137 = por %p135, %p136
    %p138 = scmp.ne.s32.totalorder %s130, %s132
    %p139 = scmp.eq.s32.totalorder %s17, 1
    %p140 = por %p138, %p139
    %p141 = scmp.ne.s32.totalorder %s132, %s133
    %p142 = scmp.eq.s32.totalorder %s17, 0
    %p143 = por %p141, %p142
    %p144 = scmp.ne.s32.totalorder %s132, %s133
    %p145 = scmp.eq.s32.totalorder %s18, 1
    %p146 = por %p144, %p145
    %p148 = scmp.ne.s32.totalorder %s133, %s147
    %p149 = scmp.eq.s32.totalorder %s18, 0
    %p150 = por %p148, %p149
    %s151 = ssub.s32 %s12, %s19
    %p152 = scmp.eq.s32.totalorder %s151, 0
    %s154 = sadd.s32 %s153, 1
    %s155 = scalar_select %p152, %s153, %s154
    %p158 = pneg %p152
    %p159 = scmp.eq.s32.totalorder %s12, 1
    %p160 = por %p158, %p159
    %p161 = scmp.ne.s32.totalorder %s153, %s156
    %p162 = scmp.eq.s32.totalorder %s12, 0
    %p163 = por %p161, %p162
    %p164 = scmp.ne.s32.totalorder %s153, %s156
    %p165 = scmp.eq.s32.totalorder %s17, 1
    %p166 = por %p164, %p165
    %p167 = scmp.ne.s32.totalorder %s156, %s157
    %p168 = scmp.eq.s32.totalorder %s17, 0
    %p169 = por %p167, %p168
    %p170 = scmp.ne.s32.totalorder %s156, %s157
    %p171 = scmp.eq.s32.totalorder %s18, 1
    %p172 = por %p170, %p171
    %p174 = scmp.ne.s32.totalorder %s157, %s173
    %p175 = scmp.eq.s32.totalorder %s18, 0
    %p176 = por %p174, %p175
    %p177 = scmp.le.s32.totalorder 1, %s12
    %p178 = scmp.lt.s32.totalorder %s12, 3
    %p179 = pnand %p177, %p178
    %p180 = pneg %p179
    // Predicated region
    $region9: #{mynet_forward.2} parent=5 // pred_check
      _
    $region10: #{mynet_forward.2} parent=5 // pred_check_branch
      %182 = sbr.rel (%p179) target = $region12
    $region11: #{mynet_forward.2} parent=5 // pred_region
      %s183 = ssub.s32 %s12, 1
      // Predicated region
      $region13: #{mynet_forward.2} parent=11 // pred_check
        %p184 = pneg %p59
      $region14: #{mynet_forward.2} parent=11 // pred_check_branch
        %186 = sbr.rel (%p184) target = $region16
      $region15: #{mynet_forward.2} parent=11 // pred_region
        _
      $region16: #{mynet_forward.2} parent=11 // pred_fallthru
        _
      // Predicated region
      $region17: #{mynet_forward.2} parent=11 // pred_check
        %p187 = pneg %p80
      $region18: #{mynet_forward.2} parent=11 // pred_check_branch
        %189 = sbr.rel (%p187) target = $region20
      $region19: #{mynet_forward.2} parent=11 // pred_region
        _
      $region20: #{mynet_forward.2} parent=11 // pred_fallthru
        _
      // Predicated region
      $region21: #{mynet_forward.2} parent=11 // pred_check
        %p190 = pneg %p101
      $region22: #{mynet_forward.2} parent=11 // pred_check_branch
        %192 = sbr.rel (%p190) target = $region24
      $region23: #{mynet_forward.2} parent=11 // pred_region
        _
      $region24: #{mynet_forward.2} parent=11 // pred_fallthru
        _
      // Predicated region
      $region25: #{mynet_forward.2} parent=11 // pred_check
        %p193 = pneg %p122
      $region26: #{mynet_forward.2} parent=11 // pred_check_branch
        %195 = sbr.rel (%p193) target = $region28
      $region27: #{mynet_forward.2} parent=11 // pred_region
        _
      $region28: #{mynet_forward.2} parent=11 // pred_fallthru
        _
      // Predicated region
      $region29: #{mynet_forward.2} parent=11 // pred_check
        %p196 = pneg %p143
      $region30: #{mynet_forward.2} parent=11 // pred_check_branch
        %198 = sbr.rel (%p196) target = $region32
      $region31: #{mynet_forward.2} parent=11 // pred_region
        _
      $region32: #{mynet_forward.2} parent=11 // pred_fallthru
        _
    $region12: #{mynet_forward.2} parent=5 // pred_fallthru
      _
    %p199 = scmp.lt.s32.totalorder %s12, 2
    // Predicated region
    $region33: #{mynet_forward.2} parent=5 // pred_check
      %p200 = pneg %p199
    $region34: #{mynet_forward.2} parent=5 // pred_check_branch
      %202 = sbr.rel (%p200) target = $region36
    $region35: #{mynet_forward.2} parent=5 // pred_region
      // Predicated region
      $region37: #{mynet_forward.2} parent=35 // pred_check
        %p203 = pneg %p32
      $region38: #{mynet_forward.2} parent=35 // pred_check_branch
        %205 = sbr.rel (%p203) target = $region40
      $region39: #{mynet_forward.2} parent=35 // pred_region
        %p206 = scmp.lt.s32.totalorder %s12, 1
        %s207 = scalar_select %p206, %s12, 1
        %s208 = smul.addr %s207, 16
        %s209 = smul.addr %s208, 4
        %s210 = scalar_lea.vmem %s0, %s209
      $region40: #{mynet_forward.2} parent=35 // pred_fallthru
        _
    $region36: #{mynet_forward.2} parent=5 // pred_fallthru
      _
    %p211 = scmp.le.s32.totalorder 1, %s12
    %p212 = scmp.lt.s32.totalorder %s12, 3
    %p213 = pnand %p211, %p212
    %p214 = pneg %p213
    // Predicated region
    $region41: #{mynet_forward.2} parent=5 // pred_check
      _
    $region42: #{mynet_forward.2} parent=5 // pred_check_branch
      %216 = sbr.rel (%p213) target = $region44
    $region43: #{mynet_forward.2} parent=5 // pred_region
      %s217 = ssub.s32 %s12, 1
      %p218 = scmp.lt.s32.totalorder %s17, 1
      %s219 = scalar_select %p218, %s17, 1
      %s220 = smul.addr %s219, 16
      %s221 = smul.addr %s220, 4
      %s222 = scalar_lea.vmem %s0, %s221
      %p223 = pneg %p38
      %p224 = pneg %p35
      %p225 = pneg %p59
      %p226 = pneg %p56
      %p227 = pneg %p80
      %p228 = pneg %p77
      %p229 = pneg %p101
      %p230 = pneg %p98
      %p231 = pneg %p122
      %p232 = pneg %p119
      %p233 = pneg %p143
      %p234 = pneg %p140
      %p235 = pneg %p169
      %p236 = pneg %p166
      %p237 = scmp.lt.s32.totalorder %s17, 1
      %s238 = scalar_select %p237, %s17, 1
      %s239 = smul.addr %s238, 8
      %s240 = smul.addr %s239, 4
      %s241 = scalar_lea.vmem %s6, %s240
      %p242 = scmp.lt.s32.totalorder %s17, 1
      %s243 = scalar_select %p242, %s17, 1
      %s244 = smul.addr %s243, 16
      %s245 = smul.addr %s244, 4
      %s246 = scalar_lea.vmem %s0, %s245
      %p247 = scmp.lt.s32.totalorder %s17, 1
      %s248 = scalar_select %p247, %s17, 1
      %s249 = smul.addr %s248, 8
      %s250 = smul.addr %s249, 4
      %s251 = scalar_lea.vmem %s6, %s250
      %v253 = vld [vmem:[%s1] sm:$0xf]
      %v254 = vld [vmem:[%s1 + $0x4] sm:$0xf]
      %v255 = vld [vmem:[%s1 + $0x8] sm:$0xf]
      %v256 = vld [vmem:[%s1 + $0xc] sm:$0xf]
      %v257 = vld [vmem:[%s246] sm:$0xff]
      %v258 = vld [vmem:[%s246 + $0x8] sm:$0xff]
      %v259 = vld [vmem:[%s246 + $0x10] sm:$0xff]
      %v260 = vld [vmem:[%s246 + $0x18] sm:$0xff]
      %v261 = vld [vmem:[%s246 + $0x20] sm:$0x11]
      %v262 = vld [vmem:[%s246 + $0x28] sm:$0x11]
      %v263 = vld [vmem:[%s246 + $0x30] sm:$0x11]
      %v264 = vld [vmem:[%s246 + $0x38] sm:$0x11]
      %v265 = vld [vmem:[%s2] sm:$0xff]
      %v266 = vld [vmem:[%s2 + $0x8] sm:$0xff]
      %v267 = vld [vmem:[%s2 + $0x10] sm:$0xff]
      %v268 = vld [vmem:[%s2 + $0x18] sm:$0xff]
      %270 = vset.pattern.permute.xlu0 0
      %271 = vperm.xlu0 %270, %v265
      %v272 = vpop.permute.xlu0 %271
      %275 = vset.pattern.permute.xlu0 0
      %276 = vperm.xlu0 %275, %v266
      %v277 = vpop.permute.xlu0 %276
      %280 = vset.pattern.permute.xlu0 0
      %281 = vperm.xlu0 %280, %v267
      %v282 = vpop.permute.xlu0 %281
      %285 = vset.pattern.permute.xlu0 0
      %286 = vperm.xlu0 %285, %v268
      %v287 = vpop.permute.xlu0 %286
      %v293 = vunpack.c.l.b16 %v253
      %v294 = vunpack.c.l.b16 %v254
      %v295 = vunpack.c.l.b16 %v255
      %v296 = vunpack.c.l.b16 %v256
      %v297 = vpack.c.b16 %v294, %v293
      %v298 = vpack.c.b16 %v296, %v295
      %v307 = vunpack.c.l.b16 %v257
      %v308 = vunpack.c.h.b16 %v257
      %v309 = vunpack.c.l.b16 %v258
      %v310 = vunpack.c.h.b16 %v258
      %v311 = vunpack.c.l.b16 %v259
      %v312 = vunpack.c.h.b16 %v259
      %v313 = vunpack.c.l.b16 %v260
      %v314 = vunpack.c.h.b16 %v260
      %v315 = vunpack.c.l.b16 %v261
      %v316 = vunpack.c.h.b16 %v261
      %v317 = vunpack.c.l.b16 %v262
      %v318 = vunpack.c.h.b16 %v262
      %v319 = vunpack.c.l.b16 %v263
      %v320 = vunpack.c.h.b16 %v263
      %v321 = vunpack.c.l.b16 %v264
      %v322 = vunpack.c.h.b16 %v264
      %v323 = vpack.c.b16 %v315, %v307
      %v324 = vpack.c.b16 %v316, %v308
      %v325 = vpack.c.b16 %v317, %v309
      %v326 = vpack.c.b16 %v318, %v310
      %v327 = vpack.c.b16 %v319, %v311
      %v328 = vpack.c.b16 %v320, %v312
      %v329 = vpack.c.b16 %v321, %v313
      %v330 = vpack.c.b16 %v322, %v314
      %vm331 = vcmask 72704
      %v333 = vsel %vm331, %v297, 0
      %v336 = vsel %vm331, %v298, 0
      %vm338 = vcmask 1043456
      %vm339 = vcmask 1044480
      %v340 = vsel %vm338, 4294967295, 65535
      %v341 = vsel %vm339, %v340, 0
      %v343 = vand.u32 %v323, %v341
      %v346 = vand.u32 %v324, %v341
      %v349 = vand.u32 %v325, %v341
      %v352 = vand.u32 %v326, %v341
      %v355 = vand.u32 %v327, %v341
      %v358 = vand.u32 %v328, %v341
      %v361 = vand.u32 %v329, %v341
      %v364 = vand.u32 %v330, %v341
      %366 = vmatprep.subr.bf16.mxu0 %v346
      %367 = vmatpush1.bf16.msra.mxu0 %v343
      %368 = vmatprep.subr.bf16.mxu0 0
      %369 = vmatpush1.bf16.msra.mxu0 0
      %370 = vmatprep.subr.bf16.mxu0 0
      %371 = vmatpush1.bf16.msra.mxu0 0
      %372 = vmatprep.subr.bf16.mxu0 0
      %373 = vmatpush1.bf16.msra.mxu0 0
      %374 = vmatprep.subr.bf16.mxu0 0
      %375 = vmatpush1.bf16.msra.mxu0 0
      %376 = vmatprep.subr.bf16.mxu0 0
      %377 = vmatpush1.bf16.msra.mxu0 0
      %378 = vmatprep.subr.bf16.mxu0 0
      %379 = vmatpush1.bf16.msra.mxu0 0
      %380 = vmatprep.subr.bf16.mxu0 0
      %381 = vmatpush1.bf16.msra.mxu0 0
      %382 = vmatprep.subr.bf16.mxu0 0
      %383 = vmatpush1.bf16.msra.mxu0 0
      %384 = vmatprep.subr.bf16.mxu0 0
      %385 = vmatpush1.bf16.msra.mxu0 0
      %386 = vmatprep.subr.bf16.mxu0 0
      %387 = vmatpush1.bf16.msra.mxu0 0
      %388 = vmatprep.subr.bf16.mxu0 0
      %389 = vmatpush1.bf16.msra.mxu0 0
      %390 = vmatprep.subr.bf16.mxu0 0
      %391 = vmatpush1.bf16.msra.mxu0 0
      %392 = vmatprep.subr.bf16.mxu0 0
      %393 = vmatpush1.bf16.msra.mxu0 0
      %394 = vmatprep.subr.bf16.mxu0 0
      %395 = vmatpush1.bf16.msra.mxu0 0
      %396 = vmatprep.subr.bf16.mxu0 0
      %397 = vmatpush1.bf16.msra.mxu0 0
      %398 = vmatprep.mubr.bf16.mxu0 0
      %399 = vmatmul.mubr.bf16.gmra.mrb[0].mxu0 %v333
      %v400 = vpop.f32.mrb[0].mxu0
      %v401 = vadd.f32 %v272, %v400
      %v402 = vpop.f32.mrb[0].mxu0
      %v403 = vadd.f32 %v272, %v402
      %v404 = vpop.f32.mrb[0].mxu0
      %v405 = vadd.f32 %v277, %v404
      %v406 = vpop.f32.mrb[0].mxu0
      %v407 = vadd.f32 %v277, %v406
      %408 = vmatprep.mubr.bf16.mxu0 0
      %409 = vmatmul.mubr.bf16.gmra.mrb[0].mxu0 %v336
      %v410 = vpop.f32.mrb[0].mxu0
      %v411 = vadd.f32 %v282, %v410
      %v412 = vpop.f32.mrb[0].mxu0
      %v413 = vadd.f32 %v282, %v412
      %v414 = vpop.f32.mrb[0].mxu0
      %v415 = vadd.f32 %v287, %v414
      %v416 = vpop.f32.mrb[0].mxu0
      %v417 = vadd.f32 %v287, %v416
      %418 = vdwg.mxu0
      %419 = vmatprep.subr.bf16.mxu0 %v352
      %420 = vmatpush1.bf16.msra.mxu0 %v349
      %421 = vmatprep.subr.bf16.mxu0 0
      %422 = vmatpush1.bf16.msra.mxu0 0
      %423 = vmatprep.subr.bf16.mxu0 0
      %424 = vmatpush1.bf16.msra.mxu0 0
      %425 = vmatprep.subr.bf16.mxu0 0
      %426 = vmatpush1.bf16.msra.mxu0 0
      %427 = vmatprep.subr.bf16.mxu0 0
      %428 = vmatpush1.bf16.msra.mxu0 0
      %429 = vmatprep.subr.bf16.mxu0 0
      %430 = vmatpush1.bf16.msra.mxu0 0
      %431 = vmatprep.subr.bf16.mxu0 0
      %432 = vmatpush1.bf16.msra.mxu0 0
      %433 = vmatprep.subr.bf16.mxu0 0
      %434 = vmatpush1.bf16.msra.mxu0 0
      %435 = vmatprep.subr.bf16.mxu0 0
      %436 = vmatpush1.bf16.msra.mxu0 0
      %437 = vmatprep.subr.bf16.mxu0 0
      %438 = vmatpush1.bf16.msra.mxu0 0
      %439 = vmatprep.subr.bf16.mxu0 0
      %440 = vmatpush1.bf16.msra.mxu0 0
      %441 = vmatprep.subr.bf16.mxu0 0
      %442 = vmatpush1.bf16.msra.mxu0 0
      %443 = vmatprep.subr.bf16.mxu0 0
      %444 = vmatpush1.bf16.msra.mxu0 0
      %445 = vmatprep.subr.bf16.mxu0 0
      %446 = vmatpush1.bf16.msra.mxu0 0
      %447 = vmatprep.subr.bf16.mxu0 0
      %448 = vmatpush1.bf16.msra.mxu0 0
      %449 = vmatprep.subr.bf16.mxu0 0
      %450 = vmatpush1.bf16.msra.mxu0 0
      %451 = vmatprep.mubr.bf16.mxu0 0
      %452 = vmatmul.mubr.bf16.gmra.mrb[0].mxu0 %v333
      %v453 = vpop.f32.mrb[0].mxu0
      %v454 = vadd.f32 %v272, %v453
      %v455 = vpop.f32.mrb[0].mxu0
      %v456 = vadd.f32 %v272, %v455
      %v457 = vpop.f32.mrb[0].mxu0
      %v458 = vadd.f32 %v277, %v457
      %v459 = vpop.f32.mrb[0].mxu0
      %v460 = vadd.f32 %v277, %v459
      %461 = vmatprep.mubr.bf16.mxu0 0
      %462 = vmatmul.mubr.bf16.gmra.mrb[0].mxu0 %v336
      %v463 = vpop.f32.mrb[0].mxu0
      %v464 = vadd.f32 %v282, %v463
      %v465 = vpop.f32.mrb[0].mxu0
      %v466 = vadd.f32 %v282, %v465
      %v467 = vpop.f32.mrb[0].mxu0
      %v468 = vadd.f32 %v287, %v467
      %v469 = vpop.f32.mrb[0].mxu0
      %v470 = vadd.f32 %v287, %v469
      %471 = vdwg.mxu0
      %472 = vmatprep.subr.bf16.mxu0 %v358
      %473 = vmatpush1.bf16.msra.mxu0 %v355
      %474 = vmatprep.subr.bf16.mxu0 0
      %475 = vmatpush1.bf16.msra.mxu0 0
      %476 = vmatprep.subr.bf16.mxu0 0
      %477 = vmatpush1.bf16.msra.mxu0 0
      %478 = vmatprep.subr.bf16.mxu0 0
      %479 = vmatpush1.bf16.msra.mxu0 0
      %480 = vmatprep.subr.bf16.mxu0 0
      %481 = vmatpush1.bf16.msra.mxu0 0
      %482 = vmatprep.subr.bf16.mxu0 0
      %483 = vmatpush1.bf16.msra.mxu0 0
      %484 = vmatprep.subr.bf16.mxu0 0
      %485 = vmatpush1.bf16.msra.mxu0 0
      %486 = vmatprep.subr.bf16.mxu0 0
      %487 = vmatpush1.bf16.msra.mxu0 0
      %488 = vmatprep.subr.bf16.mxu0 0
      %489 = vmatpush1.bf16.msra.mxu0 0
      %490 = vmatprep.subr.bf16.mxu0 0
      %491 = vmatpush1.bf16.msra.mxu0 0
      %492 = vmatprep.subr.bf16.mxu0 0
      %493 = vmatpush1.bf16.msra.mxu0 0
      %494 = vmatprep.subr.bf16.mxu0 0
      %495 = vmatpush1.bf16.msra.mxu0 0
      %496 = vmatprep.subr.bf16.mxu0 0
      %497 = vmatpush1.bf16.msra.mxu0 0
      %498 = vmatprep.subr.bf16.mxu0 0
      %499 = vmatpush1.bf16.msra.mxu0 0
      %500 = vmatprep.subr.bf16.mxu0 0
      %501 = vmatpush1.bf16.msra.mxu0 0
      %502 = vmatprep.subr.bf16.mxu0 0
      %503 = vmatpush1.bf16.msra.mxu0 0
      %504 = vmatprep.mubr.bf16.mxu0 0
      %505 = vmatmul.mubr.bf16.gmra.mrb[0].mxu0 %v333
      %v506 = vpop.f32.mrb[0].mxu0
      %v507 = vadd.f32 %v272, %v506
      %v508 = vpop.f32.mrb[0].mxu0
      %v509 = vadd.f32 %v272, %v508
      %v510 = vpop.f32.mrb[0].mxu0
      %v511 = vadd.f32 %v277, %v510
      %v512 = vpop.f32.mrb[0].mxu0
      %v513 = vadd.f32 %v277, %v512
      %514 = vmatprep.mubr.bf16.mxu0 0
      %515 = vmatmul.mubr.bf16.gmra.mrb[0].mxu0 %v336
      %v516 = vpop.f32.mrb[0].mxu0
      %v517 = vadd.f32 %v282, %v516
      %v518 = vpop.f32.mrb[0].mxu0
      %v519 = vadd.f32 %v282, %v518
      %v520 = vpop.f32.mrb[0].mxu0
      %v521 = vadd.f32 %v287, %v520
      %v522 = vpop.f32.mrb[0].mxu0
      %v523 = vadd.f32 %v287, %v522
      %524 = vdwg.mxu0
      %525 = vmatprep.subr.bf16.mxu0 %v364
      %526 = vmatpush1.bf16.msra.mxu0 %v361
      %527 = vmatprep.subr.bf16.mxu0 0
      %528 = vmatpush1.bf16.msra.mxu0 0
      %529 = vmatprep.subr.bf16.mxu0 0
      %530 = vmatpush1.bf16.msra.mxu0 0
      %531 = vmatprep.subr.bf16.mxu0 0
      %532 = vmatpush1.bf16.msra.mxu0 0
      %533 = vmatprep.subr.bf16.mxu0 0
      %534 = vmatpush1.bf16.msra.mxu0 0
      %535 = vmatprep.subr.bf16.mxu0 0
      %536 = vmatpush1.bf16.msra.mxu0 0
      %537 = vmatprep.subr.bf16.mxu0 0
      %538 = vmatpush1.bf16.msra.mxu0 0
      %539 = vmatprep.subr.bf16.mxu0 0
      %540 = vmatpush1.bf16.msra.mxu0 0
      %541 = vmatprep.subr.bf16.mxu0 0
      %542 = vmatpush1.bf16.msra.mxu0 0
      %543 = vmatprep.subr.bf16.mxu0 0
      %544 = vmatpush1.bf16.msra.mxu0 0
      %545 = vmatprep.subr.bf16.mxu0 0
      %546 = vmatpush1.bf16.msra.mxu0 0
      %547 = vmatprep.subr.bf16.mxu0 0
      %548 = vmatpush1.bf16.msra.mxu0 0
      %549 = vmatprep.subr.bf16.mxu0 0
      %550 = vmatpush1.bf16.msra.mxu0 0
      %551 = vmatprep.subr.bf16.mxu0 0
      %552 = vmatpush1.bf16.msra.mxu0 0
      %553 = vmatprep.subr.bf16.mxu0 0
      %554 = vmatpush1.bf16.msra.mxu0 0
      %555 = vmatprep.subr.bf16.mxu0 0
      %556 = vmatpush1.bf16.msra.mxu0 0
      %557 = vmatprep.mubr.bf16.mxu0 0
      %558 = vmatmul.mubr.bf16.gmra.mrb[0].mxu0 %v333
      %v559 = vpop.f32.mrb[0].mxu0
      %v560 = vadd.f32 %v272, %v559
      %v561 = vpop.f32.mrb[0].mxu0
      %v562 = vadd.f32 %v272, %v561
      %v563 = vpop.f32.mrb[0].mxu0
      %v564 = vadd.f32 %v277, %v563
      %v565 = vpop.f32.mrb[0].mxu0
      %v566 = vadd.f32 %v277, %v565
      %567 = vmatprep.mubr.bf16.mxu0 0
      %568 = vmatmul.mubr.bf16.gmra.mrb[0].mxu0 %v336
      %v569 = vpop.f32.mrb[0].mxu0
      %v570 = vadd.f32 %v282, %v569
      %v571 = vpop.f32.mrb[0].mxu0
      %v572 = vadd.f32 %v282, %v571
      %v573 = vpop.f32.mrb[0].mxu0
      %v574 = vadd.f32 %v287, %v573
      %v575 = vpop.f32.mrb[0].mxu0
      %v576 = vadd.f32 %v287, %v575
      %577 = vdwg.mxu0
      %v578 = vmax.f32 %v401, 0.0
      %v579 = vmax.f32 %v403, 0.0
      %v580 = vmax.f32 %v454, 0.0
      %v581 = vmax.f32 %v456, 0.0
      %v582 = vmax.f32 %v507, 0.0
      %v583 = vmax.f32 %v509, 0.0
      %v584 = vmax.f32 %v560, 0.0
      %v585 = vmax.f32 %v562, 0.0
      %v586 = vmax.f32 %v405, 0.0
      %v587 = vmax.f32 %v407, 0.0
      %v588 = vmax.f32 %v458, 0.0
      %v589 = vmax.f32 %v460, 0.0
      %v590 = vmax.f32 %v511, 0.0
      %v591 = vmax.f32 %v513, 0.0
      %v592 = vmax.f32 %v564, 0.0
      %v593 = vmax.f32 %v566, 0.0
      %v594 = vmax.f32 %v411, 0.0
      %v595 = vmax.f32 %v413, 0.0
      %v596 = vmax.f32 %v464, 0.0
      %v597 = vmax.f32 %v466, 0.0
      %v598 = vmax.f32 %v517, 0.0
      %v599 = vmax.f32 %v519, 0.0
      %v600 = vmax.f32 %v570, 0.0
      %v601 = vmax.f32 %v572, 0.0
      %v602 = vmax.f32 %v415, 0.0
      %v603 = vmax.f32 %v417, 0.0
      %v604 = vmax.f32 %v468, 0.0
      %v605 = vmax.f32 %v470, 0.0
      %v606 = vmax.f32 %v521, 0.0
      %v607 = vmax.f32 %v523, 0.0
      %v608 = vmax.f32 %v574, 0.0
      %v609 = vmax.f32 %v576, 0.0
      %v610 = vmax.f32 %v578, %v580
      %v611 = vmax.f32 %v579, %v581
      %v612 = vmax.f32 %v586, %v588
      %v613 = vmax.f32 %v587, %v589
      %v614 = vmax.f32 %v594, %v596
      %v615 = vmax.f32 %v595, %v597
      %v616 = vmax.f32 %v602, %v604
      %v617 = vmax.f32 %v603, %v605
      %v618 = vmax.f32 %v582, %v584
      %v619 = vmax.f32 %v583, %v585
      %v620 = vmax.f32 %v590, %v592
      %v621 = vmax.f32 %v591, %v593
      %v622 = vmax.f32 %v598, %v600
      %v623 = vmax.f32 %v599, %v601
      %v624 = vmax.f32 %v606, %v608
      %v625 = vmax.f32 %v607, %v609
      %v626 = vmax.f32 %v610, %v618
      %v627 = vmax.f32 %v611, %v619
      %v628 = vmax.f32 %v612, %v620
      %v629 = vmax.f32 %v613, %v621
      %v630 = vmax.f32 %v614, %v622
      %v631 = vmax.f32 %v615, %v623
      %v632 = vmax.f32 %v616, %v624
      %v633 = vmax.f32 %v617, %v625
      %v634 = vpack.c.bf16 %v628, %v626
      %v635 = vpack.c.bf16 %v629, %v627
      %v636 = vpack.c.bf16 %v632, %v630
      %v637 = vpack.c.bf16 %v633, %v631
      %v638 = vld [vmem:[%s3] sm:$0xff]
      %v639 = vld [vmem:[%s3 + $0x8] sm:$0xff]
      %v640 = vld [vmem:[%s3 + $0x10] sm:$0xff]
      %v641 = vld [vmem:[%s3 + $0x18] sm:$0xff]
      %v642 = vld [vmem:[%s3 + $0x20] sm:$0xff]
      %v643 = vld [vmem:[%s3 + $0x28] sm:$0xff]
      %v644 = vld [vmem:[%s3 + $0x30] sm:$0xff]
      %v645 = vld [vmem:[%s3 + $0x38] sm:$0xff]
      %v646 = vld [vmem:[%s3 + $0x40] sm:$0xff]
      %v647 = vld [vmem:[%s3 + $0x48] sm:$0xff]
      %v648 = vld [vmem:[%s3 + $0x50] sm:$0xff]
      %v649 = vld [vmem:[%s3 + $0x58] sm:$0xff]
      %v650 = vld [vmem:[%s3 + $0x60] sm:$0xff]
      %v651 = vld [vmem:[%s3 + $0x68] sm:$0xff]
      %v652 = vld [vmem:[%s3 + $0x70] sm:$0xff]
      %v653 = vld [vmem:[%s3 + $0x78] sm:$0xff]
      %v654 = vld [vmem:[%s3 + $0x80] sm:$0xff]
      %v655 = vld [vmem:[%s3 + $0x88] sm:$0xff]
      %v656 = vld [vmem:[%s3 + $0x90] sm:$0xff]
      %v657 = vld [vmem:[%s3 + $0x98] sm:$0xff]
      %v658 = vld [vmem:[%s3 + $0xa0] sm:$0xff]
      %v659 = vld [vmem:[%s3 + $0xa8] sm:$0xff]
      %v660 = vld [vmem:[%s3 + $0xb0] sm:$0xff]
      %v661 = vld [vmem:[%s3 + $0xb8] sm:$0xff]
      %v662 = vld [vmem:[%s3 + $0xc0] sm:$0xff]
      %v663 = vld [vmem:[%s3 + $0xc8] sm:$0xff]
      %v664 = vld [vmem:[%s3 + $0xd0] sm:$0xff]
      %v665 = vld [vmem:[%s3 + $0xd8] sm:$0xff]
      %v666 = vld [vmem:[%s3 + $0xe0] sm:$0xff]
      %v667 = vld [vmem:[%s3 + $0xe8] sm:$0xff]
      %v668 = vld [vmem:[%s3 + $0xf0] sm:$0xff]
      %v669 = vld [vmem:[%s3 + $0xf8] sm:$0xff]
      %v670 = vld [vmem:[%s3 + $0x100] sm:$0xff]
      %v671 = vld [vmem:[%s3 + $0x108] sm:$0xff]
      %v672 = vld [vmem:[%s3 + $0x110] sm:$0xff]
      %v673 = vld [vmem:[%s3 + $0x118] sm:$0xff]
      %v674 = vld [vmem:[%s3 + $0x120] sm:$0xff]
      %v675 = vld [vmem:[%s3 + $0x128] sm:$0xff]
      %v676 = vld [vmem:[%s3 + $0x130] sm:$0xff]
      %v677 = vld [vmem:[%s3 + $0x138] sm:$0xff]
      %v678 = vld [vmem:[%s3 + $0x140] sm:$0xff]
      %v679 = vld [vmem:[%s3 + $0x148] sm:$0xff]
      %v680 = vld [vmem:[%s3 + $0x150] sm:$0xff]
      %v681 = vld [vmem:[%s3 + $0x158] sm:$0xff]
      %v682 = vld [vmem:[%s3 + $0x160] sm:$0xff]
      %v683 = vld [vmem:[%s3 + $0x168] sm:$0xff]
      %v684 = vld [vmem:[%s3 + $0x170] sm:$0xff]
      %v685 = vld [vmem:[%s3 + $0x178] sm:$0xff]
      %v686 = vld [vmem:[%s3 + $0x180] sm:$0xff]
      %v687 = vld [vmem:[%s3 + $0x188] sm:$0xff]
      %v688 = vld [vmem:[%s3 + $0x190] sm:$0xff]
      %v689 = vld [vmem:[%s3 + $0x198] sm:$0xff]
      %v690 = vld [vmem:[%s3 + $0x1a0] sm:$0xff]
      %v691 = vld [vmem:[%s3 + $0x1a8] sm:$0xff]
      %v692 = vld [vmem:[%s3 + $0x1b0] sm:$0xff]
      %v693 = vld [vmem:[%s3 + $0x1b8] sm:$0xff]
      %v694 = vld [vmem:[%s3 + $0x1c0] sm:$0xff]
      %v695 = vld [vmem:[%s3 + $0x1c8] sm:$0xff]
      %v696 = vld [vmem:[%s3 + $0x1d0] sm:$0xff]
      %v697 = vld [vmem:[%s3 + $0x1d8] sm:$0xff]
      %v698 = vld [vmem:[%s3 + $0x1e0] sm:$0xff]
      %v699 = vld [vmem:[%s3 + $0x1e8] sm:$0xff]
      %v700 = vld [vmem:[%s3 + $0x1f0] sm:$0xff]
      %v701 = vld [vmem:[%s3 + $0x1f8] sm:$0xff]
      %v702 = vld [vmem:[%s3 + $0x200] sm:$0xff]
      %v703 = vld [vmem:[%s3 + $0x208] sm:$0xff]
      %v704 = vld [vmem:[%s3 + $0x210] sm:$0xff]
      %v705 = vld [vmem:[%s3 + $0x218] sm:$0xff]
      %v706 = vld [vmem:[%s3 + $0x220] sm:$0xff]
      %v707 = vld [vmem:[%s3 + $0x228] sm:$0xff]
      %v708 = vld [vmem:[%s3 + $0x230] sm:$0xff]
      %v709 = vld [vmem:[%s3 + $0x238] sm:$0xff]
      %v710 = vld [vmem:[%s3 + $0x240] sm:$0xff]
      %v711 = vld [vmem:[%s3 + $0x248] sm:$0xff]
      %v712 = vld [vmem:[%s3 + $0x250] sm:$0xff]
      %v713 = vld [vmem:[%s3 + $0x258] sm:$0xff]
      %v714 = vld [vmem:[%s3 + $0x260] sm:$0xff]
      %v715 = vld [vmem:[%s3 + $0x268] sm:$0xff]
      %v716 = vld [vmem:[%s3 + $0x270] sm:$0xff]
      %v717 = vld [vmem:[%s3 + $0x278] sm:$0xff]
      %v718 = vld [vmem:[%s3 + $0x280] sm:$0xff]
      %v719 = vld [vmem:[%s3 + $0x288] sm:$0xff]
      %v720 = vld [vmem:[%s3 + $0x290] sm:$0xff]
      %v721 = vld [vmem:[%s3 + $0x298] sm:$0xff]
      %v722 = vld [vmem:[%s3 + $0x2a0] sm:$0xff]
      %v723 = vld [vmem:[%s3 + $0x2a8] sm:$0xff]
      %v724 = vld [vmem:[%s3 + $0x2b0] sm:$0xff]
      %v725 = vld [vmem:[%s3 + $0x2b8] sm:$0xff]
      %v726 = vld [vmem:[%s3 + $0x2c0] sm:$0xff]
      %v727 = vld [vmem:[%s3 + $0x2c8] sm:$0xff]
      %v728 = vld [vmem:[%s3 + $0x2d0] sm:$0xff]
      %v729 = vld [vmem:[%s3 + $0x2d8] sm:$0xff]
      %v730 = vld [vmem:[%s3 + $0x2e0] sm:$0xff]
      %v731 = vld [vmem:[%s3 + $0x2e8] sm:$0xff]
      %v732 = vld [vmem:[%s3 + $0x2f0] sm:$0xff]
      %v733 = vld [vmem:[%s3 + $0x2f8] sm:$0xff]
      %v734 = vld [vmem:[%s3 + $0x300] sm:$0xff]
      %v735 = vld [vmem:[%s3 + $0x308] sm:$0xff]
      %v736 = vld [vmem:[%s3 + $0x310] sm:$0xff]
      %v737 = vld [vmem:[%s3 + $0x318] sm:$0xff]
      %v738 = vld [vmem:[%s3 + $0x320] sm:$0xff]
      %v739 = vld [vmem:[%s3 + $0x328] sm:$0xff]
      %v740 = vld [vmem:[%s3 + $0x330] sm:$0xff]
      %v741 = vld [vmem:[%s3 + $0x338] sm:$0xff]
      %v742 = vld [vmem:[%s3 + $0x340] sm:$0xff]
      %v743 = vld [vmem:[%s3 + $0x348] sm:$0xff]
      %v744 = vld [vmem:[%s3 + $0x350] sm:$0xff]
      %v745 = vld [vmem:[%s3 + $0x358] sm:$0xff]
      %v746 = vld [vmem:[%s3 + $0x360] sm:$0xff]
      %v747 = vld [vmem:[%s3 + $0x368] sm:$0xff]
      %v748 = vld [vmem:[%s3 + $0x370] sm:$0xff]
      %v749 = vld [vmem:[%s3 + $0x378] sm:$0xff]
      %v750 = vld [vmem:[%s3 + $0x380] sm:$0xff]
      %v751 = vld [vmem:[%s3 + $0x388] sm:$0xff]
      %v752 = vld [vmem:[%s3 + $0x390] sm:$0xff]
      %v753 = vld [vmem:[%s3 + $0x398] sm:$0xff]
      %v754 = vld [vmem:[%s3 + $0x3a0] sm:$0xff]
      %v755 = vld [vmem:[%s3 + $0x3a8] sm:$0xff]
      %v756 = vld [vmem:[%s3 + $0x3b0] sm:$0xff]
      %v757 = vld [vmem:[%s3 + $0x3b8] sm:$0xff]
      %v758 = vld [vmem:[%s3 + $0x3c0] sm:$0xff]
      %v759 = vld [vmem:[%s3 + $0x3c8] sm:$0xff]
      %v760 = vld [vmem:[%s3 + $0x3d0] sm:$0xff]
      %v761 = vld [vmem:[%s3 + $0x3d8] sm:$0xff]
      %v762 = vld [vmem:[%s3 + $0x3e0] sm:$0xff]
      %v763 = vld [vmem:[%s3 + $0x3e8] sm:$0xff]
      %v764 = vld [vmem:[%s3 + $0x3f0] sm:$0xff]
      %v765 = vld [vmem:[%s3 + $0x3f8] sm:$0xff]
      %v766 = vld [vmem:[%s3 + $0x400] sm:$0xff]
      %v767 = vld [vmem:[%s3 + $0x408] sm:$0xff]
      %v768 = vld [vmem:[%s3 + $0x410] sm:$0xff]
      %v769 = vld [vmem:[%s3 + $0x418] sm:$0xff]
      %v770 = vld [vmem:[%s3 + $0x420] sm:$0xff]
      %v771 = vld [vmem:[%s3 + $0x428] sm:$0xff]
      %v772 = vld [vmem:[%s3 + $0x430] sm:$0xff]
      %v773 = vld [vmem:[%s3 + $0x438] sm:$0xff]
      %v774 = vld [vmem:[%s3 + $0x440] sm:$0xff]
      %v775 = vld [vmem:[%s3 + $0x448] sm:$0xff]
      %v776 = vld [vmem:[%s3 + $0x450] sm:$0xff]
      %v777 = vld [vmem:[%s3 + $0x458] sm:$0xff]
      %v778 = vld [vmem:[%s3 + $0x460] sm:$0xff]
      %v779 = vld [vmem:[%s3 + $0x468] sm:$0xff]
      %v780 = vld [vmem:[%s3 + $0x470] sm:$0xff]
      %v781 = vld [vmem:[%s3 + $0x478] sm:$0xff]
      %v782 = vld [vmem:[%s3 + $0x480] sm:$0xff]
      %v783 = vld [vmem:[%s3 + $0x488] sm:$0xff]
      %v784 = vld [vmem:[%s3 + $0x490] sm:$0xff]
      %v785 = vld [vmem:[%s3 + $0x498] sm:$0xff]
      %v786 = vld [vmem:[%s3 + $0x4a0] sm:$0xff]
      %v787 = vld [vmem:[%s3 + $0x4a8] sm:$0xff]
      %v788 = vld [vmem:[%s3 + $0x4b0] sm:$0xff]
      %v789 = vld [vmem:[%s3 + $0x4b8] sm:$0xff]
      %v790 = vld [vmem:[%s3 + $0x4c0] sm:$0xff]
      %v791 = vld [vmem:[%s3 + $0x4c8] sm:$0xff]
      %v792 = vld [vmem:[%s3 + $0x4d0] sm:$0xff]
      %v793 = vld [vmem:[%s3 + $0x4d8] sm:$0xff]
      %v794 = vld [vmem:[%s3 + $0x4e0] sm:$0xff]
      %v795 = vld [vmem:[%s3 + $0x4e8] sm:$0xff]
      %v796 = vld [vmem:[%s3 + $0x4f0] sm:$0xff]
      %v797 = vld [vmem:[%s3 + $0x4f8] sm:$0xff]
      %v798 = vld [vmem:[%s3 + $0x500] sm:$0xff]
      %v799 = vld [vmem:[%s3 + $0x508] sm:$0xff]
      %v800 = vld [vmem:[%s3 + $0x510] sm:$0xff]
      %v801 = vld [vmem:[%s3 + $0x518] sm:$0xff]
      %v802 = vld [vmem:[%s3 + $0x520] sm:$0xff]
      %v803 = vld [vmem:[%s3 + $0x528] sm:$0xff]
      %v804 = vld [vmem:[%s3 + $0x530] sm:$0xff]
      %v805 = vld [vmem:[%s3 + $0x538] sm:$0xff]
      %v806 = vld [vmem:[%s3 + $0x540] sm:$0xff]
      %v807 = vld [vmem:[%s3 + $0x548] sm:$0xff]
      %v808 = vld [vmem:[%s3 + $0x550] sm:$0xff]
      %v809 = vld [vmem:[%s3 + $0x558] sm:$0xff]
      %v810 = vld [vmem:[%s3 + $0x560] sm:$0xff]
      %v811 = vld [vmem:[%s3 + $0x568] sm:$0xff]
      %v812 = vld [vmem:[%s3 + $0x570] sm:$0xff]
      %v813 = vld [vmem:[%s3 + $0x578] sm:$0xff]
      %v814 = vld [vmem:[%s3 + $0x580] sm:$0xff]
      %v815 = vld [vmem:[%s3 + $0x588] sm:$0xff]
      %v816 = vld [vmem:[%s3 + $0x590] sm:$0xff]
      %v817 = vld [vmem:[%s3 + $0x598] sm:$0xff]
      %v818 = vld [vmem:[%s3 + $0x5a0] sm:$0xff]
      %v819 = vld [vmem:[%s3 + $0x5a8] sm:$0xff]
      %v820 = vld [vmem:[%s3 + $0x5b0] sm:$0xff]
      %v821 = vld [vmem:[%s3 + $0x5b8] sm:$0xff]
      %v822 = vld [vmem:[%s3 + $0x5c0] sm:$0xff]
      %v823 = vld [vmem:[%s3 + $0x5c8] sm:$0xff]
      %v824 = vld [vmem:[%s3 + $0x5d0] sm:$0xff]
      %v825 = vld [vmem:[%s3 + $0x5d8] sm:$0xff]
      %v826 = vld [vmem:[%s3 + $0x5e0] sm:$0xff]
      %v827 = vld [vmem:[%s3 + $0x5e8] sm:$0xff]
      %v828 = vld [vmem:[%s3 + $0x5f0] sm:$0xff]
      %v829 = vld [vmem:[%s3 + $0x5f8] sm:$0xff]
      %v830 = vld [vmem:[%s3 + $0x600] sm:$0xff]
      %v831 = vld [vmem:[%s3 + $0x608] sm:$0xff]
      %v832 = vld [vmem:[%s3 + $0x610] sm:$0xff]
      %v833 = vld [vmem:[%s3 + $0x618] sm:$0xff]
      %v834 = vld [vmem:[%s3 + $0x620] sm:$0xff]
      %v835 = vld [vmem:[%s3 + $0x628] sm:$0xff]
      %v836 = vld [vmem:[%s3 + $0x630] sm:$0xff]
      %v837 = vld [vmem:[%s3 + $0x638] sm:$0xff]
      %v838 = vld [vmem:[%s3 + $0x640] sm:$0xff]
      %v839 = vld [vmem:[%s3 + $0x648] sm:$0xff]
      %v840 = vld [vmem:[%s3 + $0x650] sm:$0xff]
      %v841 = vld [vmem:[%s3 + $0x658] sm:$0xff]
      %v842 = vld [vmem:[%s3 + $0x660] sm:$0xff]
      %v843 = vld [vmem:[%s3 + $0x668] sm:$0xff]
      %v844 = vld [vmem:[%s3 + $0x670] sm:$0xff]
      %v845 = vld [vmem:[%s3 + $0x678] sm:$0xff]
      %v846 = vld [vmem:[%s3 + $0x680] sm:$0xff]
      %v847 = vld [vmem:[%s3 + $0x688] sm:$0xff]
      %v848 = vld [vmem:[%s3 + $0x690] sm:$0xff]
      %v849 = vld [vmem:[%s3 + $0x698] sm:$0xff]
      %v850 = vld [vmem:[%s3 + $0x6a0] sm:$0xff]
      %v851 = vld [vmem:[%s3 + $0x6a8] sm:$0xff]
      %v852 = vld [vmem:[%s3 + $0x6b0] sm:$0xff]
      %v853 = vld [vmem:[%s3 + $0x6b8] sm:$0xff]
      %v854 = vld [vmem:[%s3 + $0x6c0] sm:$0xff]
      %v855 = vld [vmem:[%s3 + $0x6c8] sm:$0xff]
      %v856 = vld [vmem:[%s3 + $0x6d0] sm:$0xff]
      %v857 = vld [vmem:[%s3 + $0x6d8] sm:$0xff]
      %v858 = vld [vmem:[%s3 + $0x6e0] sm:$0xff]
      %v859 = vld [vmem:[%s3 + $0x6e8] sm:$0xff]
      %v860 = vld [vmem:[%s3 + $0x6f0] sm:$0xff]
      %v861 = vld [vmem:[%s3 + $0x6f8] sm:$0xff]
      %v862 = vld [vmem:[%s3 + $0x700] sm:$0xff]
      %v863 = vld [vmem:[%s3 + $0x708] sm:$0xff]
      %v864 = vld [vmem:[%s3 + $0x710] sm:$0xff]
      %v865 = vld [vmem:[%s3 + $0x718] sm:$0xff]
      %v866 = vld [vmem:[%s3 + $0x720] sm:$0xff]
      %v867 = vld [vmem:[%s3 + $0x728] sm:$0xff]
      %v868 = vld [vmem:[%s3 + $0x730] sm:$0xff]
      %v869 = vld [vmem:[%s3 + $0x738] sm:$0xff]
      %v870 = vld [vmem:[%s3 + $0x740] sm:$0xff]
      %v871 = vld [vmem:[%s3 + $0x748] sm:$0xff]
      %v872 = vld [vmem:[%s3 + $0x750] sm:$0xff]
      %v873 = vld [vmem:[%s3 + $0x758] sm:$0xff]
      %v874 = vld [vmem:[%s3 + $0x760] sm:$0xff]
      %v875 = vld [vmem:[%s3 + $0x768] sm:$0xff]
      %v876 = vld [vmem:[%s3 + $0x770] sm:$0xff]
      %v877 = vld [vmem:[%s3 + $0x778] sm:$0xff]
      %v878 = vld [vmem:[%s3 + $0x780] sm:$0xff]
      %v879 = vld [vmem:[%s3 + $0x788] sm:$0xff]
      %v880 = vld [vmem:[%s3 + $0x790] sm:$0xff]
      %v881 = vld [vmem:[%s3 + $0x798] sm:$0xff]
      %v882 = vld [vmem:[%s3 + $0x7a0] sm:$0xff]
      %v883 = vld [vmem:[%s3 + $0x7a8] sm:$0xff]
      %v884 = vld [vmem:[%s3 + $0x7b0] sm:$0xff]
      %v885 = vld [vmem:[%s3 + $0x7b8] sm:$0xff]
      %v886 = vld [vmem:[%s3 + $0x7c0] sm:$0xff]
      %v887 = vld [vmem:[%s3 + $0x7c8] sm:$0xff]
      %v888 = vld [vmem:[%s3 + $0x7d0] sm:$0xff]
      %v889 = vld [vmem:[%s3 + $0x7d8] sm:$0xff]
      %v890 = vld [vmem:[%s3 + $0x7e0] sm:$0xff]
      %v891 = vld [vmem:[%s3 + $0x7e8] sm:$0xff]
      %v892 = vld [vmem:[%s3 + $0x7f0] sm:$0xff]
      %v893 = vld [vmem:[%s3 + $0x7f8] sm:$0xff]
      %v894 = vld [vmem:[%s3 + $0x800] sm:$0xff]
      %v895 = vld [vmem:[%s3 + $0x808] sm:$0xff]
      %v896 = vld [vmem:[%s3 + $0x810] sm:$0xff]
      %v897 = vld [vmem:[%s3 + $0x818] sm:$0xff]
      %v898 = vld [vmem:[%s3 + $0x820] sm:$0xff]
      %v899 = vld [vmem:[%s3 + $0x828] sm:$0xff]
      %v900 = vld [vmem:[%s3 + $0x830] sm:$0xff]
      %v901 = vld [vmem:[%s3 + $0x838] sm:$0xff]
      %v902 = vld [vmem:[%s3 + $0x840] sm:$0xff]
      %v903 = vld [vmem:[%s3 + $0x848] sm:$0xff]
      %v904 = vld [vmem:[%s3 + $0x850] sm:$0xff]
      %v905 = vld [vmem:[%s3 + $0x858] sm:$0xff]
      %v906 = vld [vmem:[%s3 + $0x860] sm:$0xff]
      %v907 = vld [vmem:[%s3 + $0x868] sm:$0xff]
      %v908 = vld [vmem:[%s3 + $0x870] sm:$0xff]
      %v909 = vld [vmem:[%s3 + $0x878] sm:$0xff]
      %v910 = vld [vmem:[%s3 + $0x880] sm:$0xff]
      %v911 = vld [vmem:[%s3 + $0x888] sm:$0xff]
      %v912 = vld [vmem:[%s3 + $0x890] sm:$0xff]
      %v913 = vld [vmem:[%s3 + $0x898] sm:$0xff]
      %v914 = vld [vmem:[%s3 + $0x8a0] sm:$0xff]
      %v915 = vld [vmem:[%s3 + $0x8a8] sm:$0xff]
      %v916 = vld [vmem:[%s3 + $0x8b0] sm:$0xff]
      %v917 = vld [vmem:[%s3 + $0x8b8] sm:$0xff]
      %v918 = vld [vmem:[%s3 + $0x8c0] sm:$0xff]
      %v919 = vld [vmem:[%s3 + $0x8c8] sm:$0xff]
      %v920 = vld [vmem:[%s3 + $0x8d0] sm:$0xff]
      %v921 = vld [vmem:[%s3 + $0x8d8] sm:$0xff]
      %v922 = vld [vmem:[%s3 + $0x8e0] sm:$0xff]
      %v923 = vld [vmem:[%s3 + $0x8e8] sm:$0xff]
      %v924 = vld [vmem:[%s3 + $0x8f0] sm:$0xff]
      %v925 = vld [vmem:[%s3 + $0x8f8] sm:$0xff]
      %v1214 = vunpack.c.l.b16 %v638
      %v1215 = vunpack.c.h.b16 %v638
      %v1216 = vunpack.c.l.b16 %v639
      %v1217 = vunpack.c.h.b16 %v639
      %v1218 = vunpack.c.l.b16 %v640
      %v1219 = vunpack.c.h.b16 %v640
      %v1220 = vunpack.c.l.b16 %v641
      %v1221 = vunpack.c.h.b16 %v641
      %v1222 = vunpack.c.l.b16 %v642
      %v1223 = vunpack.c.h.b16 %v642
      %v1224 = vunpack.c.l.b16 %v643
      %v1225 = vunpack.c.h.b16 %v643
      %v1226 = vunpack.c.l.b16 %v644
      %v1227 = vunpack.c.h.b16 %v644
      %v1228 = vunpack.c.l.b16 %v645
      %v1229 = vunpack.c.h.b16 %v645
      %v1230 = vunpack.c.l.b16 %v646
      %v1231 = vunpack.c.h.b16 %v646
      %v1232 = vunpack.c.l.b16 %v647
      %v1233 = vunpack.c.h.b16 %v647
      %v1234 = vunpack.c.l.b16 %v648
      %v1235 = vunpack.c.h.b16 %v648
      %v1236 = vunpack.c.l.b16 %v649
      %v1237 = vunpack.c.h.b16 %v649
      %v1238 = vunpack.c.l.b16 %v650
      %v1239 = vunpack.c.h.b16 %v650
      %v1240 = vunpack.c.l.b16 %v651
      %v1241 = vunpack.c.h.b16 %v651
      %v1242 = vunpack.c.l.b16 %v652
      %v1243 = vunpack.c.h.b16 %v652
      %v1244 = vunpack.c.l.b16 %v653
      %v1245 = vunpack.c.h.b16 %v653
      %v1246 = vunpack.c.l.b16 %v654
      %v1247 = vunpack.c.h.b16 %v654
      %v1248 = vunpack.c.l.b16 %v655
      %v1249 = vunpack.c.h.b16 %v655
      %v1250 = vunpack.c.l.b16 %v656
      %v1251 = vunpack.c.h.b16 %v656
      %v1252 = vunpack.c.l.b16 %v657
      %v1253 = vunpack.c.h.b16 %v657
      %v1254 = vunpack.c.l.b16 %v658
      %v1255 = vunpack.c.h.b16 %v658
      %v1256 = vunpack.c.l.b16 %v659
      %v1257 = vunpack.c.h.b16 %v659
      %v1258 = vunpack.c.l.b16 %v660
      %v1259 = vunpack.c.h.b16 %v660
      %v1260 = vunpack.c.l.b16 %v661
      %v1261 = vunpack.c.h.b16 %v661
      %v1262 = vunpack.c.l.b16 %v662
      %v1263 = vunpack.c.h.b16 %v662
      %v1264 = vunpack.c.l.b16 %v663
      %v1265 = vunpack.c.h.b16 %v663
      %v1266 = vunpack.c.l.b16 %v664
      %v1267 = vunpack.c.h.b16 %v664
      %v1268 = vunpack.c.l.b16 %v665
      %v1269 = vunpack.c.h.b16 %v665
      %v1270 = vunpack.c.l.b16 %v666
      %v1271 = vunpack.c.h.b16 %v666
      %v1272 = vunpack.c.l.b16 %v667
      %v1273 = vunpack.c.h.b16 %v667
      %v1274 = vunpack.c.l.b16 %v668
      %v1275 = vunpack.c.h.b16 %v668
      %v1276 = vunpack.c.l.b16 %v669
      %v1277 = vunpack.c.h.b16 %v669
      %v1278 = vunpack.c.l.b16 %v670
      %v1279 = vunpack.c.h.b16 %v670
      %v1280 = vunpack.c.l.b16 %v671
      %v1281 = vunpack.c.h.b16 %v671
      %v1282 = vunpack.c.l.b16 %v672
      %v1283 = vunpack.c.h.b16 %v672
      %v1284 = vunpack.c.l.b16 %v673
      %v1285 = vunpack.c.h.b16 %v673
      %v1286 = vunpack.c.l.b16 %v674
      %v1287 = vunpack.c.h.b16 %v674
      %v1288 = vunpack.c.l.b16 %v675
      %v1289 = vunpack.c.h.b16 %v675
      %v1290 = vunpack.c.l.b16 %v676
      %v1291 = vunpack.c.h.b16 %v676
      %v1292 = vunpack.c.l.b16 %v677
      %v1293 = vunpack.c.h.b16 %v677
      %v1294 = vunpack.c.l.b16 %v678
      %v1295 = vunpack.c.h.b16 %v678
      %v1296 = vunpack.c.l.b16 %v679
      %v1297 = vunpack.c.h.b16 %v679
      %v1298 = vunpack.c.l.b16 %v680
      %v1299 = vunpack.c.h.b16 %v680
      %v1300 = vunpack.c.l.b16 %v681
      %v1301 = vunpack.c.h.b16 %v681
      %v1302 = vunpack.c.l.b16 %v682
      %v1303 = vunpack.c.h.b16 %v682
      %v1304 = vunpack.c.l.b16 %v683
      %v1305 = vunpack.c.h.b16 %v683
      %v1306 = vunpack.c.l.b16 %v684
      %v1307 = vunpack.c.h.b16 %v684
      %v1308 = vunpack.c.l.b16 %v685
      %v1309 = vunpack.c.h.b16 %v685
      %v1310 = vunpack.c.l.b16 %v686
      %v1311 = vunpack.c.h.b16 %v686
      %v1312 = vunpack.c.l.b16 %v687
      %v1313 = vunpack.c.h.b16 %v687
      %v1314 = vunpack.c.l.b16 %v688
      %v1315 = vunpack.c.h.b16 %v688
      %v1316 = vunpack.c.l.b16 %v689
      %v1317 = vunpack.c.h.b16 %v689
      %v1318 = vunpack.c.l.b16 %v690
      %v1319 = vunpack.c.h.b16 %v690
      %v1320 = vunpack.c.l.b16 %v691
      %v1321 = vunpack.c.h.b16 %v691
      %v1322 = vunpack.c.l.b16 %v692
      %v1323 = vunpack.c.h.b16 %v692
      %v1324 = vunpack.c.l.b16 %v693
      %v1325 = vunpack.c.h.b16 %v693
      %v1326 = vunpack.c.l.b16 %v694
      %v1327 = vunpack.c.h.b16 %v694
      %v1328 = vunpack.c.l.b16 %v695
      %v1329 = vunpack.c.h.b16 %v695
      %v1330 = vunpack.c.l.b16 %v696
      %v1331 = vunpack.c.h.b16 %v696
      %v1332 = vunpack.c.l.b16 %v697
      %v1333 = vunpack.c.h.b16 %v697
      %v1334 = vunpack.c.l.b16 %v698
      %v1335 = vunpack.c.h.b16 %v698
      %v1336 = vunpack.c.l.b16 %v699
      %v1337 = vunpack.c.h.b16 %v699
      %v1338 = vunpack.c.l.b16 %v700
      %v1339 = vunpack.c.h.b16 %v700
      %v1340 = vunpack.c.l.b16 %v701
      %v1341 = vunpack.c.h.b16 %v701
      %v1342 = vunpack.c.l.b16 %v702
      %v1343 = vunpack.c.h.b16 %v702
      %v1344 = vunpack.c.l.b16 %v703
      %v1345 = vunpack.c.h.b16 %v703
      %v1346 = vunpack.c.l.b16 %v704
      %v1347 = vunpack.c.h.b16 %v704
      %v1348 = vunpack.c.l.b16 %v705
      %v1349 = vunpack.c.h.b16 %v705
      %v1350 = vunpack.c.l.b16 %v706
      %v1351 = vunpack.c.h.b16 %v706
      %v1352 = vunpack.c.l.b16 %v707
      %v1353 = vunpack.c.h.b16 %v707
      %v1354 = vunpack.c.l.b16 %v708
      %v1355 = vunpack.c.h.b16 %v708
      %v1356 = vunpack.c.l.b16 %v709
      %v1357 = vunpack.c.h.b16 %v709
      %v1358 = vunpack.c.l.b16 %v710
      %v1359 = vunpack.c.h.b16 %v710
      %v1360 = vunpack.c.l.b16 %v711
      %v1361 = vunpack.c.h.b16 %v711
      %v1362 = vunpack.c.l.b16 %v712
      %v1363 = vunpack.c.h.b16 %v712
      %v1364 = vunpack.c.l.b16 %v713
      %v1365 = vunpack.c.h.b16 %v713
      %v1366 = vunpack.c.l.b16 %v714
      %v1367 = vunpack.c.h.b16 %v714
      %v1368 = vunpack.c.l.b16 %v715
      %v1369 = vunpack.c.h.b16 %v715
      %v1370 = vunpack.c.l.b16 %v716
      %v1371 = vunpack.c.h.b16 %v716
      %v1372 = vunpack.c.l.b16 %v717
      %v1373 = vunpack.c.h.b16 %v717
      %v1374 = vunpack.c.l.b16 %v718
      %v1375 = vunpack.c.h.b16 %v718
      %v1376 = vunpack.c.l.b16 %v719
      %v1377 = vunpack.c.h.b16 %v719
      %v1378 = vunpack.c.l.b16 %v720
      %v1379 = vunpack.c.h.b16 %v720
      %v1380 = vunpack.c.l.b16 %v721
      %v1381 = vunpack.c.h.b16 %v721
      %v1382 = vunpack.c.l.b16 %v722
      %v1383 = vunpack.c.h.b16 %v722
      %v1384 = vunpack.c.l.b16 %v723
      %v1385 = vunpack.c.h.b16 %v723
      %v1386 = vunpack.c.l.b16 %v724
      %v1387 = vunpack.c.h.b16 %v724
      %v1388 = vunpack.c.l.b16 %v725
      %v1389 = vunpack.c.h.b16 %v725
      %v1390 = vunpack.c.l.b16 %v726
      %v1391 = vunpack.c.h.b16 %v726
      %v1392 = vunpack.c.l.b16 %v727
      %v1393 = vunpack.c.h.b16 %v727
      %v1394 = vunpack.c.l.b16 %v728
      %v1395 = vunpack.c.h.b16 %v728
      %v1396 = vunpack.c.l.b16 %v729
      %v1397 = vunpack.c.h.b16 %v729
      %v1398 = vunpack.c.l.b16 %v730
      %v1399 = vunpack.c.h.b16 %v730
      %v1400 = vunpack.c.l.b16 %v731
      %v1401 = vunpack.c.h.b16 %v731
      %v1402 = vunpack.c.l.b16 %v732
      %v1403 = vunpack.c.h.b16 %v732
      %v1404 = vunpack.c.l.b16 %v733
      %v1405 = vunpack.c.h.b16 %v733
      %v1406 = vunpack.c.l.b16 %v734
      %v1407 = vunpack.c.h.b16 %v734
      %v1408 = vunpack.c.l.b16 %v735
      %v1409 = vunpack.c.h.b16 %v735
      %v1410 = vunpack.c.l.b16 %v736
      %v1411 = vunpack.c.h.b16 %v736
      %v1412 = vunpack.c.l.b16 %v737
      %v1413 = vunpack.c.h.b16 %v737
      %v1414 = vunpack.c.l.b16 %v738
      %v1415 = vunpack.c.h.b16 %v738
      %v1416 = vunpack.c.l.b16 %v739
      %v1417 = vunpack.c.h.b16 %v739
      %v1418 = vunpack.c.l.b16 %v740
      %v1419 = vunpack.c.h.b16 %v740
      %v1420 = vunpack.c.l.b16 %v741
      %v1421 = vunpack.c.h.b16 %v741
      %v1422 = vunpack.c.l.b16 %v742
      %v1423 = vunpack.c.h.b16 %v742
      %v1424 = vunpack.c.l.b16 %v743
      %v1425 = vunpack.c.h.b16 %v743
      %v1426 = vunpack.c.l.b16 %v744
      %v1427 = vunpack.c.h.b16 %v744
      %v1428 = vunpack.c.l.b16 %v745
      %v1429 = vunpack.c.h.b16 %v745
      %v1430 = vunpack.c.l.b16 %v746
      %v1431 = vunpack.c.h.b16 %v746
      %v1432 = vunpack.c.l.b16 %v747
      %v1433 = vunpack.c.h.b16 %v747
      %v1434 = vunpack.c.l.b16 %v748
      %v1435 = vunpack.c.h.b16 %v748
      %v1436 = vunpack.c.l.b16 %v749
      %v1437 = vunpack.c.h.b16 %v749
      %v1438 = vunpack.c.l.b16 %v750
      %v1439 = vunpack.c.h.b16 %v750
      %v1440 = vunpack.c.l.b16 %v751
      %v1441 = vunpack.c.h.b16 %v751
      %v1442 = vunpack.c.l.b16 %v752
      %v1443 = vunpack.c.h.b16 %v752
      %v1444 = vunpack.c.l.b16 %v753
      %v1445 = vunpack.c.h.b16 %v753
      %v1446 = vunpack.c.l.b16 %v754
      %v1447 = vunpack.c.h.b16 %v754
      %v1448 = vunpack.c.l.b16 %v755
      %v1449 = vunpack.c.h.b16 %v755
      %v1450 = vunpack.c.l.b16 %v756
      %v1451 = vunpack.c.h.b16 %v756
      %v1452 = vunpack.c.l.b16 %v757
      %v1453 = vunpack.c.h.b16 %v757
      %v1454 = vunpack.c.l.b16 %v758
      %v1455 = vunpack.c.h.b16 %v758
      %v1456 = vunpack.c.l.b16 %v759
      %v1457 = vunpack.c.h.b16 %v759
      %v1458 = vunpack.c.l.b16 %v760
      %v1459 = vunpack.c.h.b16 %v760
      %v1460 = vunpack.c.l.b16 %v761
      %v1461 = vunpack.c.h.b16 %v761
      %v1462 = vunpack.c.l.b16 %v762
      %v1463 = vunpack.c.h.b16 %v762
      %v1464 = vunpack.c.l.b16 %v763
      %v1465 = vunpack.c.h.b16 %v763
      %v1466 = vunpack.c.l.b16 %v764
      %v1467 = vunpack.c.h.b16 %v764
      %v1468 = vunpack.c.l.b16 %v765
      %v1469 = vunpack.c.h.b16 %v765
      %v1470 = vunpack.c.l.b16 %v766
      %v1471 = vunpack.c.h.b16 %v766
      %v1472 = vunpack.c.l.b16 %v767
      %v1473 = vunpack.c.h.b16 %v767
      %v1474 = vunpack.c.l.b16 %v768
      %v1475 = vunpack.c.h.b16 %v768
      %v1476 = vunpack.c.l.b16 %v769
      %v1477 = vunpack.c.h.b16 %v769
      %v1478 = vunpack.c.l.b16 %v770
      %v1479 = vunpack.c.h.b16 %v770
      %v1480 = vunpack.c.l.b16 %v771
      %v1481 = vunpack.c.h.b16 %v771
      %v1482 = vunpack.c.l.b16 %v772
      %v1483 = vunpack.c.h.b16 %v772
      %v1484 = vunpack.c.l.b16 %v773
      %v1485 = vunpack.c.h.b16 %v773
      %v1486 = vunpack.c.l.b16 %v774
      %v1487 = vunpack.c.h.b16 %v774
      %v1488 = vunpack.c.l.b16 %v775
      %v1489 = vunpack.c.h.b16 %v775
      %v1490 = vunpack.c.l.b16 %v776
      %v1491 = vunpack.c.h.b16 %v776
      %v1492 = vunpack.c.l.b16 %v777
      %v1493 = vunpack.c.h.b16 %v777
      %v1494 = vunpack.c.l.b16 %v778
      %v1495 = vunpack.c.h.b16 %v778
      %v1496 = vunpack.c.l.b16 %v779
      %v1497 = vunpack.c.h.b16 %v779
      %v1498 = vunpack.c.l.b16 %v780
      %v1499 = vunpack.c.h.b16 %v780
      %v1500 = vunpack.c.l.b16 %v781
      %v1501 = vunpack.c.h.b16 %v781
      %v1502 = vunpack.c.l.b16 %v782
      %v1503 = vunpack.c.h.b16 %v782
      %v1504 = vunpack.c.l.b16 %v783
      %v1505 = vunpack.c.h.b16 %v783
      %v1506 = vunpack.c.l.b16 %v784
      %v1507 = vunpack.c.h.b16 %v784
      %v1508 = vunpack.c.l.b16 %v785
      %v1509 = vunpack.c.h.b16 %v785
      %v1510 = vunpack.c.l.b16 %v786
      %v1511 = vunpack.c.h.b16 %v786
      %v1512 = vunpack.c.l.b16 %v787
      %v1513 = vunpack.c.h.b16 %v787
      %v1514 = vunpack.c.l.b16 %v788
      %v1515 = vunpack.c.h.b16 %v788
      %v1516 = vunpack.c.l.b16 %v789
      %v1517 = vunpack.c.h.b16 %v789
      %v1518 = vunpack.c.l.b16 %v790
      %v1519 = vunpack.c.h.b16 %v790
      %v1520 = vunpack.c.l.b16 %v791
      %v1521 = vunpack.c.h.b16 %v791
      %v1522 = vunpack.c.l.b16 %v792
      %v1523 = vunpack.c.h.b16 %v792
      %v1524 = vunpack.c.l.b16 %v793
      %v1525 = vunpack.c.h.b16 %v793
      %v1526 = vunpack.c.l.b16 %v794
      %v1527 = vunpack.c.h.b16 %v794
      %v1528 = vunpack.c.l.b16 %v795
      %v1529 = vunpack.c.h.b16 %v795
      %v1530 = vunpack.c.l.b16 %v796
      %v1531 = vunpack.c.h.b16 %v796
      %v1532 = vunpack.c.l.b16 %v797
      %v1533 = vunpack.c.h.b16 %v797
      %v1534 = vunpack.c.l.b16 %v798
      %v1535 = vunpack.c.h.b16 %v798
      %v1536 = vunpack.c.l.b16 %v799
      %v1537 = vunpack.c.h.b16 %v799
      %v1538 = vunpack.c.l.b16 %v800
      %v1539 = vunpack.c.h.b16 %v800
      %v1540 = vunpack.c.l.b16 %v801
      %v1541 = vunpack.c.h.b16 %v801
      %v1542 = vunpack.c.l.b16 %v802
      %v1543 = vunpack.c.h.b16 %v802
      %v1544 = vunpack.c.l.b16 %v803
      %v1545 = vunpack.c.h.b16 %v803
      %v1546 = vunpack.c.l.b16 %v804
      %v1547 = vunpack.c.h.b16 %v804
      %v1548 = vunpack.c.l.b16 %v805
      %v1549 = vunpack.c.h.b16 %v805
      %v1550 = vunpack.c.l.b16 %v806
      %v1551 = vunpack.c.h.b16 %v806
      %v1552 = vunpack.c.l.b16 %v807
      %v1553 = vunpack.c.h.b16 %v807
      %v1554 = vunpack.c.l.b16 %v808
      %v1555 = vunpack.c.h.b16 %v808
      %v1556 = vunpack.c.l.b16 %v809
      %v1557 = vunpack.c.h.b16 %v809
      %v1558 = vunpack.c.l.b16 %v810
      %v1559 = vunpack.c.h.b16 %v810
      %v1560 = vunpack.c.l.b16 %v811
      %v1561 = vunpack.c.h.b16 %v811
      %v1562 = vunpack.c.l.b16 %v812
      %v1563 = vunpack.c.h.b16 %v812
      %v1564 = vunpack.c.l.b16 %v813
      %v1565 = vunpack.c.h.b16 %v813
      %v1566 = vunpack.c.l.b16 %v814
      %v1567 = vunpack.c.h.b16 %v814
      %v1568 = vunpack.c.l.b16 %v815
      %v1569 = vunpack.c.h.b16 %v815
      %v1570 = vunpack.c.l.b16 %v816
      %v1571 = vunpack.c.h.b16 %v816
      %v1572 = vunpack.c.l.b16 %v817
      %v1573 = vunpack.c.h.b16 %v817
      %v1574 = vunpack.c.l.b16 %v818
      %v1575 = vunpack.c.h.b16 %v818
      %v1576 = vunpack.c.l.b16 %v819
      %v1577 = vunpack.c.h.b16 %v819
      %v1578 = vunpack.c.l.b16 %v820
      %v1579 = vunpack.c.h.b16 %v820
      %v1580 = vunpack.c.l.b16 %v821
      %v1581 = vunpack.c.h.b16 %v821
      %v1582 = vunpack.c.l.b16 %v822
      %v1583 = vunpack.c.h.b16 %v822
      %v1584 = vunpack.c.l.b16 %v823
      %v1585 = vunpack.c.h.b16 %v823
      %v1586 = vunpack.c.l.b16 %v824
      %v1587 = vunpack.c.h.b16 %v824
      %v1588 = vunpack.c.l.b16 %v825
      %v1589 = vunpack.c.h.b16 %v825
      %v1590 = vunpack.c.l.b16 %v826
      %v1591 = vunpack.c.h.b16 %v826
      %v1592 = vunpack.c.l.b16 %v827
      %v1593 = vunpack.c.h.b16 %v827
      %v1594 = vunpack.c.l.b16 %v828
      %v1595 = vunpack.c.h.b16 %v828
      %v1596 = vunpack.c.l.b16 %v829
      %v1597 = vunpack.c.h.b16 %v829
      %v1598 = vunpack.c.l.b16 %v830
      %v1599 = vunpack.c.h.b16 %v830
      %v1600 = vunpack.c.l.b16 %v831
      %v1601 = vunpack.c.h.b16 %v831
      %v1602 = vunpack.c.l.b16 %v832
      %v1603 = vunpack.c.h.b16 %v832
      %v1604 = vunpack.c.l.b16 %v833
      %v1605 = vunpack.c.h.b16 %v833
      %v1606 = vunpack.c.l.b16 %v834
      %v1607 = vunpack.c.h.b16 %v834
      %v1608 = vunpack.c.l.b16 %v835
      %v1609 = vunpack.c.h.b16 %v835
      %v1610 = vunpack.c.l.b16 %v836
      %v1611 = vunpack.c.h.b16 %v836
      %v1612 = vunpack.c.l.b16 %v837
      %v1613 = vunpack.c.h.b16 %v837
      %v1614 = vunpack.c.l.b16 %v838
      %v1615 = vunpack.c.h.b16 %v838
      %v1616 = vunpack.c.l.b16 %v839
      %v1617 = vunpack.c.h.b16 %v839
      %v1618 = vunpack.c.l.b16 %v840
      %v1619 = vunpack.c.h.b16 %v840
      %v1620 = vunpack.c.l.b16 %v841
      %v1621 = vunpack.c.h.b16 %v841
      %v1622 = vunpack.c.l.b16 %v842
      %v1623 = vunpack.c.h.b16 %v842
      %v1624 = vunpack.c.l.b16 %v843
      %v1625 = vunpack.c.h.b16 %v843
      %v1626 = vunpack.c.l.b16 %v844
      %v1627 = vunpack.c.h.b16 %v844
      %v1628 = vunpack.c.l.b16 %v845
      %v1629 = vunpack.c.h.b16 %v845
      %v1630 = vunpack.c.l.b16 %v846
      %v1631 = vunpack.c.h.b16 %v846
      %v1632 = vunpack.c.l.b16 %v847
      %v1633 = vunpack.c.h.b16 %v847
      %v1634 = vunpack.c.l.b16 %v848
      %v1635 = vunpack.c.h.b16 %v848
      %v1636 = vunpack.c.l.b16 %v849
      %v1637 = vunpack.c.h.b16 %v849
      %v1638 = vunpack.c.l.b16 %v850
      %v1639 = vunpack.c.h.b16 %v850
      %v1640 = vunpack.c.l.b16 %v851
      %v1641 = vunpack.c.h.b16 %v851
      %v1642 = vunpack.c.l.b16 %v852
      %v1643 = vunpack.c.h.b16 %v852
      %v1644 = vunpack.c.l.b16 %v853
      %v1645 = vunpack.c.h.b16 %v853
      %v1646 = vunpack.c.l.b16 %v854
      %v1647 = vunpack.c.h.b16 %v854
      %v1648 = vunpack.c.l.b16 %v855
      %v1649 = vunpack.c.h.b16 %v855
      %v1650 = vunpack.c.l.b16 %v856
      %v1651 = vunpack.c.h.b16 %v856
      %v1652 = vunpack.c.l.b16 %v857
      %v1653 = vunpack.c.h.b16 %v857
      %v1654 = vunpack.c.l.b16 %v858
      %v1655 = vunpack.c.h.b16 %v858
      %v1656 = vunpack.c.l.b16 %v859
      %v1657 = vunpack.c.h.b16 %v859
      %v1658 = vunpack.c.l.b16 %v860
      %v1659 = vunpack.c.h.b16 %v860
      %v1660 = vunpack.c.l.b16 %v861
      %v1661 = vunpack.c.h.b16 %v861
      %v1662 = vunpack.c.l.b16 %v862
      %v1663 = vunpack.c.h.b16 %v862
      %v1664 = vunpack.c.l.b16 %v863
      %v1665 = vunpack.c.h.b16 %v863
      %v1666 = vunpack.c.l.b16 %v864
      %v1667 = vunpack.c.h.b16 %v864
      %v1668 = vunpack.c.l.b16 %v865
      %v1669 = vunpack.c.h.b16 %v865
      %v1670 = vunpack.c.l.b16 %v866
      %v1671 = vunpack.c.h.b16 %v866
      %v1672 = vunpack.c.l.b16 %v867
      %v1673 = vunpack.c.h.b16 %v867
      %v1674 = vunpack.c.l.b16 %v868
      %v1675 = vunpack.c.h.b16 %v868
      %v1676 = vunpack.c.l.b16 %v869
      %v1677 = vunpack.c.h.b16 %v869
      %v1678 = vunpack.c.l.b16 %v870
      %v1679 = vunpack.c.h.b16 %v870
      %v1680 = vunpack.c.l.b16 %v871
      %v1681 = vunpack.c.h.b16 %v871
      %v1682 = vunpack.c.l.b16 %v872
      %v1683 = vunpack.c.h.b16 %v872
      %v1684 = vunpack.c.l.b16 %v873
      %v1685 = vunpack.c.h.b16 %v873
      %v1686 = vunpack.c.l.b16 %v874
      %v1687 = vunpack.c.h.b16 %v874
      %v1688 = vunpack.c.l.b16 %v875
      %v1689 = vunpack.c.h.b16 %v875
      %v1690 = vunpack.c.l.b16 %v876
      %v1691 = vunpack.c.h.b16 %v876
      %v1692 = vunpack.c.l.b16 %v877
      %v1693 = vunpack.c.h.b16 %v877
      %v1694 = vunpack.c.l.b16 %v878
      %v1695 = vunpack.c.h.b16 %v878
      %v1696 = vunpack.c.l.b16 %v879
      %v1697 = vunpack.c.h.b16 %v879
      %v1698 = vunpack.c.l.b16 %v880
      %v1699 = vunpack.c.h.b16 %v880
      %v1700 = vunpack.c.l.b16 %v881
      %v1701 = vunpack.c.h.b16 %v881
      %v1702 = vunpack.c.l.b16 %v882
      %v1703 = vunpack.c.h.b16 %v882
      %v1704 = vunpack.c.l.b16 %v883
      %v1705 = vunpack.c.h.b16 %v883
      %v1706 = vunpack.c.l.b16 %v884
      %v1707 = vunpack.c.h.b16 %v884
      %v1708 = vunpack.c.l.b16 %v885
      %v1709 = vunpack.c.h.b16 %v885
      %v1710 = vunpack.c.l.b16 %v886
      %v1711 = vunpack.c.h.b16 %v886
      %v1712 = vunpack.c.l.b16 %v887
      %v1713 = vunpack.c.h.b16 %v887
      %v1714 = vunpack.c.l.b16 %v888
      %v1715 = vunpack.c.h.b16 %v888
      %v1716 = vunpack.c.l.b16 %v889
      %v1717 = vunpack.c.h.b16 %v889
      %v1718 = vunpack.c.l.b16 %v890
      %v1719 = vunpack.c.h.b16 %v890
      %v1720 = vunpack.c.l.b16 %v891
      %v1721 = vunpack.c.h.b16 %v891
      %v1722 = vunpack.c.l.b16 %v892
      %v1723 = vunpack.c.h.b16 %v892
      %v1724 = vunpack.c.l.b16 %v893
      %v1725 = vunpack.c.h.b16 %v893
      %v1726 = vunpack.c.l.b16 %v894
      %v1727 = vunpack.c.h.b16 %v894
      %v1728 = vunpack.c.l.b16 %v895
      %v1729 = vunpack.c.h.b16 %v895
      %v1730 = vunpack.c.l.b16 %v896
      %v1731 = vunpack.c.h.b16 %v896
      %v1732 = vunpack.c.l.b16 %v897
      %v1733 = vunpack.c.h.b16 %v897
      %v1734 = vunpack.c.l.b16 %v898
      %v1735 = vunpack.c.h.b16 %v898
      %v1736 = vunpack.c.l.b16 %v899
      %v1737 = vunpack.c.h.b16 %v899
      %v1738 = vunpack.c.l.b16 %v900
      %v1739 = vunpack.c.h.b16 %v900
      %v1740 = vunpack.c.l.b16 %v901
      %v1741 = vunpack.c.h.b16 %v901
      %v1742 = vunpack.c.l.b16 %v902
      %v1743 = vunpack.c.h.b16 %v902
      %v1744 = vunpack.c.l.b16 %v903
      %v1745 = vunpack.c.h.b16 %v903
      %v1746 = vunpack.c.l.b16 %v904
      %v1747 = vunpack.c.h.b16 %v904
      %v1748 = vunpack.c.l.b16 %v905
      %v1749 = vunpack.c.h.b16 %v905
      %v1750 = vunpack.c.l.b16 %v906
      %v1751 = vunpack.c.h.b16 %v906
      %v1752 = vunpack.c.l.b16 %v907
      %v1753 = vunpack.c.h.b16 %v907
      %v1754 = vunpack.c.l.b16 %v908
      %v1755 = vunpack.c.h.b16 %v908
      %v1756 = vunpack.c.l.b16 %v909
      %v1757 = vunpack.c.h.b16 %v909
      %v1758 = vunpack.c.l.b16 %v910
      %v1759 = vunpack.c.h.b16 %v910
      %v1760 = vunpack.c.l.b16 %v911
      %v1761 = vunpack.c.h.b16 %v911
      %v1762 = vunpack.c.l.b16 %v912
      %v1763 = vunpack.c.h.b16 %v912
      %v1764 = vunpack.c.l.b16 %v913
      %v1765 = vunpack.c.h.b16 %v913
      %v1766 = vunpack.c.l.b16 %v914
      %v1767 = vunpack.c.h.b16 %v914
      %v1768 = vunpack.c.l.b16 %v915
      %v1769 = vunpack.c.h.b16 %v915
      %v1770 = vunpack.c.l.b16 %v916
      %v1771 = vunpack.c.h.b16 %v916
      %v1772 = vunpack.c.l.b16 %v917
      %v1773 = vunpack.c.h.b16 %v917
      %v1774 = vunpack.c.l.b16 %v918
      %v1775 = vunpack.c.h.b16 %v918
      %v1776 = vunpack.c.l.b16 %v919
      %v1777 = vunpack.c.h.b16 %v919
      %v1778 = vunpack.c.l.b16 %v920
      %v1779 = vunpack.c.h.b16 %v920
      %v1780 = vunpack.c.l.b16 %v921
      %v1781 = vunpack.c.h.b16 %v921
      %v1782 = vunpack.c.l.b16 %v922
      %v1783 = vunpack.c.h.b16 %v922
      %v1784 = vunpack.c.l.b16 %v923
      %v1785 = vunpack.c.h.b16 %v923
      %v1786 = vunpack.c.l.b16 %v924
      %v1787 = vunpack.c.h.b16 %v924
      %v1788 = vunpack.c.l.b16 %v925
      %v1789 = vunpack.c.h.b16 %v925
      %v1790 = vpack.c.b16 %v1232, %v1214
      %v1791 = vpack.c.b16 %v1233, %v1215
      %v1792 = vpack.c.b16 %v1234, %v1216
      %v1793 = vpack.c.b16 %v1235, %v1217
      %v1794 = vpack.c.b16 %v1236, %v1218
      %v1795 = vpack.c.b16 %v1237, %v1219
      %v1796 = vpack.c.b16 %v1238, %v1220
      %v1797 = vpack.c.b16 %v1239, %v1221
      %v1798 = vpack.c.b16 %v1240, %v1222
      %v1799 = vpack.c.b16 %v1241, %v1223
      %v1800 = vpack.c.b16 %v1242, %v1224
      %v1801 = vpack.c.b16 %v1243, %v1225
      %v1802 = vpack.c.b16 %v1244, %v1226
      %v1803 = vpack.c.b16 %v1245, %v1227
      %v1804 = vpack.c.b16 %v1246, %v1228
      %v1805 = vpack.c.b16 %v1247, %v1229
      %v1806 = vpack.c.b16 %v1248, %v1230
      %v1807 = vpack.c.b16 %v1249, %v1231
      %v1808 = vpack.c.b16 %v1268, %v1250
      %v1809 = vpack.c.b16 %v1269, %v1251
      %v1810 = vpack.c.b16 %v1270, %v1252
      %v1811 = vpack.c.b16 %v1271, %v1253
      %v1812 = vpack.c.b16 %v1272, %v1254
      %v1813 = vpack.c.b16 %v1273, %v1255
      %v1814 = vpack.c.b16 %v1274, %v1256
      %v1815 = vpack.c.b16 %v1275, %v1257
      %v1816 = vpack.c.b16 %v1276, %v1258
      %v1817 = vpack.c.b16 %v1277, %v1259
      %v1818 = vpack.c.b16 %v1278, %v1260
      %v1819 = vpack.c.b16 %v1279, %v1261
      %v1820 = vpack.c.b16 %v1280, %v1262
      %v1821 = vpack.c.b16 %v1281, %v1263
      %v1822 = vpack.c.b16 %v1282, %v1264
      %v1823 = vpack.c.b16 %v1283, %v1265
      %v1824 = vpack.c.b16 %v1284, %v1266
      %v1825 = vpack.c.b16 %v1285, %v1267
      %v1826 = vpack.c.b16 %v1304, %v1286
      %v1827 = vpack.c.b16 %v1305, %v1287
      %v1828 = vpack.c.b16 %v1306, %v1288
      %v1829 = vpack.c.b16 %v1307, %v1289
      %v1830 = vpack.c.b16 %v1308, %v1290
      %v1831 = vpack.c.b16 %v1309, %v1291
      %v1832 = vpack.c.b16 %v1310, %v1292
      %v1833 = vpack.c.b16 %v1311, %v1293
      %v1834 = vpack.c.b16 %v1312, %v1294
      %v1835 = vpack.c.b16 %v1313, %v1295
      %v1836 = vpack.c.b16 %v1314, %v1296
      %v1837 = vpack.c.b16 %v1315, %v1297
      %v1838 = vpack.c.b16 %v1316, %v1298
      %v1839 = vpack.c.b16 %v1317, %v1299
      %v1840 = vpack.c.b16 %v1318, %v1300
      %v1841 = vpack.c.b16 %v1319, %v1301
      %v1842 = vpack.c.b16 %v1320, %v1302
      %v1843 = vpack.c.b16 %v1321, %v1303
      %v1844 = vpack.c.b16 %v1340, %v1322
      %v1845 = vpack.c.b16 %v1341, %v1323
      %v1846 = vpack.c.b16 %v1342, %v1324
      %v1847 = vpack.c.b16 %v1343, %v1325
      %v1848 = vpack.c.b16 %v1344, %v1326
      %v1849 = vpack.c.b16 %v1345, %v1327
      %v1850 = vpack.c.b16 %v1346, %v1328
      %v1851 = vpack.c.b16 %v1347, %v1329
      %v1852 = vpack.c.b16 %v1348, %v1330
      %v1853 = vpack.c.b16 %v1349, %v1331
      %v1854 = vpack.c.b16 %v1350, %v1332
      %v1855 = vpack.c.b16 %v1351, %v1333
      %v1856 = vpack.c.b16 %v1352, %v1334
      %v1857 = vpack.c.b16 %v1353, %v1335
      %v1858 = vpack.c.b16 %v1354, %v1336
      %v1859 = vpack.c.b16 %v1355, %v1337
      %v1860 = vpack.c.b16 %v1356, %v1338
      %v1861 = vpack.c.b16 %v1357, %v1339
      %v1862 = vpack.c.b16 %v1376, %v1358
      %v1863 = vpack.c.b16 %v1377, %v1359
      %v1864 = vpack.c.b16 %v1378, %v1360
      %v1865 = vpack.c.b16 %v1379, %v1361
      %v1866 = vpack.c.b16 %v1380, %v1362
      %v1867 = vpack.c.b16 %v1381, %v1363
      %v1868 = vpack.c.b16 %v1382, %v1364
      %v1869 = vpack.c.b16 %v1383, %v1365
      %v1870 = vpack.c.b16 %v1384, %v1366
      %v1871 = vpack.c.b16 %v1385, %v1367
      %v1872 = vpack.c.b16 %v1386, %v1368
      %v1873 = vpack.c.b16 %v1387, %v1369
      %v1874 = vpack.c.b16 %v1388, %v1370
      %v1875 = vpack.c.b16 %v1389, %v1371
      %v1876 = vpack.c.b16 %v1390, %v1372
      %v1877 = vpack.c.b16 %v1391, %v1373
      %v1878 = vpack.c.b16 %v1392, %v1374
      %v1879 = vpack.c.b16 %v1393, %v1375
      %v1880 = vpack.c.b16 %v1412, %v1394
      %v1881 = vpack.c.b16 %v1413, %v1395
      %v1882 = vpack.c.b16 %v1414, %v1396
      %v1883 = vpack.c.b16 %v1415, %v1397
      %v1884 = vpack.c.b16 %v1416, %v1398
      %v1885 = vpack.c.b16 %v1417, %v1399
      %v1886 = vpack.c.b16 %v1418, %v1400
      %v1887 = vpack.c.b16 %v1419, %v1401
      %v1888 = vpack.c.b16 %v1420, %v1402
      %v1889 = vpack.c.b16 %v1421, %v1403
      %v1890 = vpack.c.b16 %v1422, %v1404
      %v1891 = vpack.c.b16 %v1423, %v1405
      %v1892 = vpack.c.b16 %v1424, %v1406
      %v1893 = vpack.c.b16 %v1425, %v1407
      %v1894 = vpack.c.b16 %v1426, %v1408
      %v1895 = vpack.c.b16 %v1427, %v1409
      %v1896 = vpack.c.b16 %v1428, %v1410
      %v1897 = vpack.c.b16 %v1429, %v1411
      %v1898 = vpack.c.b16 %v1448, %v1430
      %v1899 = vpack.c.b16 %v1449, %v1431
      %v1900 = vpack.c.b16 %v1450, %v1432
      %v1901 = vpack.c.b16 %v1451, %v1433
      %v1902 = vpack.c.b16 %v1452, %v1434
      %v1903 = vpack.c.b16 %v1453, %v1435
      %v1904 = vpack.c.b16 %v1454, %v1436
      %v1905 = vpack.c.b16 %v1455, %v1437
      %v1906 = vpack.c.b16 %v1456, %v1438
      %v1907 = vpack.c.b16 %v1457, %v1439
      %v1908 = vpack.c.b16 %v1458, %v1440
      %v1909 = vpack.c.b16 %v1459, %v1441
      %v1910 = vpack.c.b16 %v1460, %v1442
      %v1911 = vpack.c.b16 %v1461, %v1443
      %v1912 = vpack.c.b16 %v1462, %v1444
      %v1913 = vpack.c.b16 %v1463, %v1445
      %v1914 = vpack.c.b16 %v1464, %v1446
      %v1915 = vpack.c.b16 %v1465, %v1447
      %v1916 = vpack.c.b16 %v1484, %v1466
      %v1917 = vpack.c.b16 %v1485, %v1467
      %v1918 = vpack.c.b16 %v1486, %v1468
      %v1919 = vpack.c.b16 %v1487, %v1469
      %v1920 = vpack.c.b16 %v1488, %v1470
      %v1921 = vpack.c.b16 %v1489, %v1471
      %v1922 = vpack.c.b16 %v1490, %v1472
      %v1923 = vpack.c.b16 %v1491, %v1473
      %v1924 = vpack.c.b16 %v1492, %v1474
      %v1925 = vpack.c.b16 %v1493, %v1475
      %v1926 = vpack.c.b16 %v1494, %v1476
      %v1927 = vpack.c.b16 %v1495, %v1477
      %v1928 = vpack.c.b16 %v1496, %v1478
      %v1929 = vpack.c.b16 %v1497, %v1479
      %v1930 = vpack.c.b16 %v1498, %v1480
      %v1931 = vpack.c.b16 %v1499, %v1481
      %v1932 = vpack.c.b16 %v1500, %v1482
      %v1933 = vpack.c.b16 %v1501, %v1483
      %v1934 = vpack.c.b16 %v1520, %v1502
      %v1935 = vpack.c.b16 %v1521, %v1503
      %v1936 = vpack.c.b16 %v1522, %v1504
      %v1937 = vpack.c.b16 %v1523, %v1505
      %v1938 = vpack.c.b16 %v1524, %v1506
      %v1939 = vpack.c.b16 %v1525, %v1507
      %v1940 = vpack.c.b16 %v1526, %v1508
      %v1941 = vpack.c.b16 %v1527, %v1509
      %v1942 = vpack.c.b16 %v1528, %v1510
      %v1943 = vpack.c.b16 %v1529, %v1511
      %v1944 = vpack.c.b16 %v1530, %v1512
      %v1945 = vpack.c.b16 %v1531, %v1513
      %v1946 = vpack.c.b16 %v1532, %v1514
      %v1947 = vpack.c.b16 %v1533, %v1515
      %v1948 = vpack.c.b16 %v1534, %v1516
      %v1949 = vpack.c.b16 %v1535, %v1517
      %v1950 = vpack.c.b16 %v1536, %v1518
      %v1951 = vpack.c.b16 %v1537, %v1519
      %v1952 = vpack.c.b16 %v1556, %v1538
      %v1953 = vpack.c.b16 %v1557, %v1539
      %v1954 = vpack.c.b16 %v1558, %v1540
      %v1955 = vpack.c.b16 %v1559, %v1541
      %v1956 = vpack.c.b16 %v1560, %v1542
      %v1957 = vpack.c.b16 %v1561, %v1543
      %v1958 = vpack.c.b16 %v1562, %v1544
      %v1959 = vpack.c.b16 %v1563, %v1545
      %v1960 = vpack.c.b16 %v1564, %v1546
      %v1961 = vpack.c.b16 %v1565, %v1547
      %v1962 = vpack.c.b16 %v1566, %v1548
      %v1963 = vpack.c.b16 %v1567, %v1549
      %v1964 = vpack.c.b16 %v1568, %v1550
      %v1965 = vpack.c.b16 %v1569, %v1551
      %v1966 = vpack.c.b16 %v1570, %v1552
      %v1967 = vpack.c.b16 %v1571, %v1553
      %v1968 = vpack.c.b16 %v1572, %v1554
      %v1969 = vpack.c.b16 %v1573, %v1555
      %v1970 = vpack.c.b16 %v1592, %v1574
      %v1971 = vpack.c.b16 %v1593, %v1575
      %v1972 = vpack.c.b16 %v1594, %v1576
      %v1973 = vpack.c.b16 %v1595, %v1577
      %v1974 = vpack.c.b16 %v1596, %v1578
      %v1975 = vpack.c.b16 %v1597, %v1579
      %v1976 = vpack.c.b16 %v1598, %v1580
      %v1977 = vpack.c.b16 %v1599, %v1581
      %v1978 = vpack.c.b16 %v1600, %v1582
      %v1979 = vpack.c.b16 %v1601, %v1583
      %v1980 = vpack.c.b16 %v1602, %v1584
      %v1981 = vpack.c.b16 %v1603, %v1585
      %v1982 = vpack.c.b16 %v1604, %v1586
      %v1983 = vpack.c.b16 %v1605, %v1587
      %v1984 = vpack.c.b16 %v1606, %v1588
      %v1985 = vpack.c.b16 %v1607, %v1589
      %v1986 = vpack.c.b16 %v1608, %v1590
      %v1987 = vpack.c.b16 %v1609, %v1591
      %v1988 = vpack.c.b16 %v1628, %v1610
      %v1989 = vpack.c.b16 %v1629, %v1611
      %v1990 = vpack.c.b16 %v1630, %v1612
      %v1991 = vpack.c.b16 %v1631, %v1613
      %v1992 = vpack.c.b16 %v1632, %v1614
      %v1993 = vpack.c.b16 %v1633, %v1615
      %v1994 = vpack.c.b16 %v1634, %v1616
      %v1995 = vpack.c.b16 %v1635, %v1617
      %v1996 = vpack.c.b16 %v1636, %v1618
      %v1997 = vpack.c.b16 %v1637, %v1619
      %v1998 = vpack.c.b16 %v1638, %v1620
      %v1999 = vpack.c.b16 %v1639, %v1621
      %v2000 = vpack.c.b16 %v1640, %v1622
      %v2001 = vpack.c.b16 %v1641, %v1623
      %v2002 = vpack.c.b16 %v1642, %v1624
      %v2003 = vpack.c.b16 %v1643, %v1625
      %v2004 = vpack.c.b16 %v1644, %v1626
      %v2005 = vpack.c.b16 %v1645, %v1627
      %v2006 = vpack.c.b16 %v1664, %v1646
      %v2007 = vpack.c.b16 %v1665, %v1647
      %v2008 = vpack.c.b16 %v1666, %v1648
      %v2009 = vpack.c.b16 %v1667, %v1649
      %v2010 = vpack.c.b16 %v1668, %v1650
      %v2011 = vpack.c.b16 %v1669, %v1651
      %v2012 = vpack.c.b16 %v1670, %v1652
      %v2013 = vpack.c.b16 %v1671, %v1653
      %v2014 = vpack.c.b16 %v1672, %v1654
      %v2015 = vpack.c.b16 %v1673, %v1655
      %v2016 = vpack.c.b16 %v1674, %v1656
      %v2017 = vpack.c.b16 %v1675, %v1657
      %v2018 = vpack.c.b16 %v1676, %v1658
      %v2019 = vpack.c.b16 %v1677, %v1659
      %v2020 = vpack.c.b16 %v1678, %v1660
      %v2021 = vpack.c.b16 %v1679, %v1661
      %v2022 = vpack.c.b16 %v1680, %v1662
      %v2023 = vpack.c.b16 %v1681, %v1663
      %v2024 = vpack.c.b16 %v1700, %v1682
      %v2025 = vpack.c.b16 %v1701, %v1683
      %v2026 = vpack.c.b16 %v1702, %v1684
      %v2027 = vpack.c.b16 %v1703, %v1685
      %v2028 = vpack.c.b16 %v1704, %v1686
      %v2029 = vpack.c.b16 %v1705, %v1687
      %v2030 = vpack.c.b16 %v1706, %v1688
      %v2031 = vpack.c.b16 %v1707, %v1689
      %v2032 = vpack.c.b16 %v1708, %v1690
      %v2033 = vpack.c.b16 %v1709, %v1691
      %v2034 = vpack.c.b16 %v1710, %v1692
      %v2035 = vpack.c.b16 %v1711, %v1693
      %v2036 = vpack.c.b16 %v1712, %v1694
      %v2037 = vpack.c.b16 %v1713, %v1695
      %v2038 = vpack.c.b16 %v1714, %v1696
      %v2039 = vpack.c.b16 %v1715, %v1697
      %v2040 = vpack.c.b16 %v1716, %v1698
      %v2041 = vpack.c.b16 %v1717, %v1699
      %v2042 = vpack.c.b16 %v1736, %v1718
      %v2043 = vpack.c.b16 %v1737, %v1719
      %v2044 = vpack.c.b16 %v1738, %v1720
      %v2045 = vpack.c.b16 %v1739, %v1721
      %v2046 = vpack.c.b16 %v1740, %v1722
      %v2047 = vpack.c.b16 %v1741, %v1723
      %v2048 = vpack.c.b16 %v1742, %v1724
      %v2049 = vpack.c.b16 %v1743, %v1725
      %v2050 = vpack.c.b16 %v1744, %v1726
      %v2051 = vpack.c.b16 %v1745, %v1727
      %v2052 = vpack.c.b16 %v1746, %v1728
      %v2053 = vpack.c.b16 %v1747, %v1729
      %v2054 = vpack.c.b16 %v1748, %v1730
      %v2055 = vpack.c.b16 %v1749, %v1731
      %v2056 = vpack.c.b16 %v1750, %v1732
      %v2057 = vpack.c.b16 %v1751, %v1733
      %v2058 = vpack.c.b16 %v1752, %v1734
      %v2059 = vpack.c.b16 %v1753, %v1735
      %v2060 = vpack.c.b16 %v1772, %v1754
      %v2061 = vpack.c.b16 %v1773, %v1755
      %v2062 = vpack.c.b16 %v1774, %v1756
      %v2063 = vpack.c.b16 %v1775, %v1757
      %v2064 = vpack.c.b16 %v1776, %v1758
      %v2065 = vpack.c.b16 %v1777, %v1759
      %v2066 = vpack.c.b16 %v1778, %v1760
      %v2067 = vpack.c.b16 %v1779, %v1761
      %v2068 = vpack.c.b16 %v1780, %v1762
      %v2069 = vpack.c.b16 %v1781, %v1763
      %v2070 = vpack.c.b16 %v1782, %v1764
      %v2071 = vpack.c.b16 %v1783, %v1765
      %v2072 = vpack.c.b16 %v1784, %v1766
      %v2073 = vpack.c.b16 %v1785, %v1767
      %v2074 = vpack.c.b16 %v1786, %v1768
      %v2075 = vpack.c.b16 %v1787, %v1769
      %v2076 = vpack.c.b16 %v1788, %v1770
      %v2077 = vpack.c.b16 %v1789, %v1771
      %2366 = vmatprep.subr.bf16.mxu0 %v1791
      %2367 = vmatpush1.bf16.msra.mxu0 %v1790
      %2368 = vmatprep.subr.bf16.mxu0 %v1809
      %2369 = vmatpush1.bf16.msra.mxu0 %v1808
      %2370 = vmatprep.subr.bf16.mxu0 %v1827
      %2371 = vmatpush1.bf16.msra.mxu0 %v1826
      %2372 = vmatprep.subr.bf16.mxu0 %v1845
      %2373 = vmatpush1.bf16.msra.mxu0 %v1844
      %2374 = vmatprep.subr.bf16.mxu0 %v1863
      %2375 = vmatpush1.bf16.msra.mxu0 %v1862
      %2376 = vmatprep.subr.bf16.mxu0 %v1881
      %2377 = vmatpush1.bf16.msra.mxu0 %v1880
      %2378 = vmatprep.subr.bf16.mxu0 %v1899
      %2379 = vmatpush1.bf16.msra.mxu0 %v1898
      %2380 = vmatprep.subr.bf16.mxu0 %v1917
      %2381 = vmatpush1.bf16.msra.mxu0 %v1916
      %2382 = vmatprep.subr.bf16.mxu0 %v1935
      %2383 = vmatpush1.bf16.msra.mxu0 %v1934
      %2384 = vmatprep.subr.bf16.mxu0 %v1953
      %2385 = vmatpush1.bf16.msra.mxu0 %v1952
      %2386 = vmatprep.subr.bf16.mxu0 %v1971
      %2387 = vmatpush1.bf16.msra.mxu0 %v1970
      %2388 = vmatprep.subr.bf16.mxu0 %v1989
      %2389 = vmatpush1.bf16.msra.mxu0 %v1988
      %2390 = vmatprep.subr.bf16.mxu0 %v2007
      %2391 = vmatpush1.bf16.msra.mxu0 %v2006
      %2392 = vmatprep.subr.bf16.mxu0 %v2025
      %2393 = vmatpush1.bf16.msra.mxu0 %v2024
      %2394 = vmatprep.subr.bf16.mxu0 %v2043
      %2395 = vmatpush1.bf16.msra.mxu0 %v2042
      %2396 = vmatprep.subr.bf16.mxu0 %v2061
      %2397 = vmatpush1.bf16.msra.mxu0 %v2060
      %2398 = vmatprep.mubr.bf16.mxu0 %v635
      %2399 = vmatmul.mubr.bf16.gmra.mrb[0].mxu0 %v634
      %v2400 = vpop.f32.mrb[0].mxu0
      %v2401 = vadd.f32 0.0, %v2400
      %v2402 = vpop.f32.mrb[0].mxu0
      %v2403 = vadd.f32 0.0, %v2402
      %v2404 = vpop.f32.mrb[0].mxu0
      %v2405 = vadd.f32 0.0, %v2404
      %v2406 = vpop.f32.mrb[0].mxu0
      %v2407 = vadd.f32 0.0, %v2406
      %2408 = vmatprep.mubr.bf16.mxu0 %v637
      %2409 = vmatmul.mubr.bf16.gmra.mrb[0].mxu0 %v636
      %v2410 = vpop.f32.mrb[0].mxu0
      %v2411 = vadd.f32 0.0, %v2410
      %v2412 = vpop.f32.mrb[0].mxu0
      %v2413 = vadd.f32 0.0, %v2412
      %v2414 = vpop.f32.mrb[0].mxu0
      %v2415 = vadd.f32 0.0, %v2414
      %v2416 = vpop.f32.mrb[0].mxu0
      %v2417 = vadd.f32 0.0, %v2416
      %2418 = vdwg.mxu0
      %2419 = vmatprep.subr.bf16.mxu0 %v1793
      %2420 = vmatpush1.bf16.msra.mxu0 %v1792
      %2421 = vmatprep.subr.bf16.mxu0 %v1811
      %2422 = vmatpush1.bf16.msra.mxu0 %v1810
      %2423 = vmatprep.subr.bf16.mxu0 %v1829
      %2424 = vmatpush1.bf16.msra.mxu0 %v1828
      %2425 = vmatprep.subr.bf16.mxu0 %v1847
      %2426 = vmatpush1.bf16.msra.mxu0 %v1846
      %2427 = vmatprep.subr.bf16.mxu0 %v1865
      %2428 = vmatpush1.bf16.msra.mxu0 %v1864
      %2429 = vmatprep.subr.bf16.mxu0 %v1883
      %2430 = vmatpush1.bf16.msra.mxu0 %v1882
      %2431 = vmatprep.subr.bf16.mxu0 %v1901
      %2432 = vmatpush1.bf16.msra.mxu0 %v1900
      %2433 = vmatprep.subr.bf16.mxu0 %v1919
      %2434 = vmatpush1.bf16.msra.mxu0 %v1918
      %2435 = vmatprep.subr.bf16.mxu0 %v1937
      %2436 = vmatpush1.bf16.msra.mxu0 %v1936
      %2437 = vmatprep.subr.bf16.mxu0 %v1955
      %2438 = vmatpush1.bf16.msra.mxu0 %v1954
      %2439 = vmatprep.subr.bf16.mxu0 %v1973
      %2440 = vmatpush1.bf16.msra.mxu0 %v1972
      %2441 = vmatprep.subr.bf16.mxu0 %v1991
      %2442 = vmatpush1.bf16.msra.mxu0 %v1990
      %2443 = vmatprep.subr.bf16.mxu0 %v2009
      %2444 = vmatpush1.bf16.msra.mxu0 %v2008
      %2445 = vmatprep.subr.bf16.mxu0 %v2027
      %2446 = vmatpush1.bf16.msra.mxu0 %v2026
      %2447 = vmatprep.subr.bf16.mxu0 %v2045
      %2448 = vmatpush1.bf16.msra.mxu0 %v2044
      %2449 = vmatprep.subr.bf16.mxu0 %v2063
      %2450 = vmatpush1.bf16.msra.mxu0 %v2062
      %2451 = vmatprep.mubr.bf16.mxu0 %v635
      %2452 = vmatmul.mubr.bf16.gmra.mrb[0].mxu0 %v634
      %v2453 = vpop.f32.mrb[0].mxu0
      %v2454 = vadd.f32 0.0, %v2453
      %v2455 = vpop.f32.mrb[0].mxu0
      %v2456 = vadd.f32 0.0, %v2455
      %v2457 = vpop.f32.mrb[0].mxu0
      %v2458 = vadd.f32 0.0, %v2457
      %v2459 = vpop.f32.mrb[0].mxu0
      %v2460 = vadd.f32 0.0, %v2459
      %2461 = vmatprep.mubr.bf16.mxu0 %v637
      %2462 = vmatmul.mubr.bf16.gmra.mrb[0].mxu0 %v636
      %v2463 = vpop.f32.mrb[0].mxu0
      %v2464 = vadd.f32 0.0, %v2463
      %v2465 = vpop.f32.mrb[0].mxu0
      %v2466 = vadd.f32 0.0, %v2465
      %v2467 = vpop.f32.mrb[0].mxu0
      %v2468 = vadd.f32 0.0, %v2467
      %v2469 = vpop.f32.mrb[0].mxu0
      %v2470 = vadd.f32 0.0, %v2469
      %2471 = vdwg.mxu0
      %2472 = vmatprep.subr.bf16.mxu0 %v1795
      %2473 = vmatpush1.bf16.msra.mxu0 %v1794
      %2474 = vmatprep.subr.bf16.mxu0 %v1813
      %2475 = vmatpush1.bf16.msra.mxu0 %v1812
      %2476 = vmatprep.subr.bf16.mxu0 %v1831
      %2477 = vmatpush1.bf16.msra.mxu0 %v1830
      %2478 = vmatprep.subr.bf16.mxu0 %v1849
      %2479 = vmatpush1.bf16.msra.mxu0 %v1848
      %2480 = vmatprep.subr.bf16.mxu0 %v1867
      %2481 = vmatpush1.bf16.msra.mxu0 %v1866
      %2482 = vmatprep.subr.bf16.mxu0 %v1885
      %2483 = vmatpush1.bf16.msra.mxu0 %v1884
      %2484 = vmatprep.subr.bf16.mxu0 %v1903
      %2485 = vmatpush1.bf16.msra.mxu0 %v1902
      %2486 = vmatprep.subr.bf16.mxu0 %v1921
      %2487 = vmatpush1.bf16.msra.mxu0 %v1920
      %2488 = vmatprep.subr.bf16.mxu0 %v1939
      %2489 = vmatpush1.bf16.msra.mxu0 %v1938
      %2490 = vmatprep.subr.bf16.mxu0 %v1957
      %2491 = vmatpush1.bf16.msra.mxu0 %v1956
      %2492 = vmatprep.subr.bf16.mxu0 %v1975
      %2493 = vmatpush1.bf16.msra.mxu0 %v1974
      %2494 = vmatprep.subr.bf16.mxu0 %v1993
      %2495 = vmatpush1.bf16.msra.mxu0 %v1992
      %2496 = vmatprep.subr.bf16.mxu0 %v2011
      %2497 = vmatpush1.bf16.msra.mxu0 %v2010
      %2498 = vmatprep.subr.bf16.mxu0 %v2029
      %2499 = vmatpush1.bf16.msra.mxu0 %v2028
      %2500 = vmatprep.subr.bf16.mxu0 %v2047
      %2501 = vmatpush1.bf16.msra.mxu0 %v2046
      %2502 = vmatprep.subr.bf16.mxu0 %v2065
      %2503 = vmatpush1.bf16.msra.mxu0 %v2064
      %2504 = vmatprep.mubr.bf16.mxu0 %v635
      %2505 = vmatmul.mubr.bf16.gmra.mrb[0].mxu0 %v634
      %v2506 = vpop.f32.mrb[0].mxu0
      %v2507 = vadd.f32 0.0, %v2506
      %v2508 = vpop.f32.mrb[0].mxu0
      %v2509 = vadd.f32 0.0, %v2508
      %v2510 = vpop.f32.mrb[0].mxu0
      %v2511 = vadd.f32 0.0, %v2510
      %v2512 = vpop.f32.mrb[0].mxu0
      %v2513 = vadd.f32 0.0, %v2512
      %2514 = vmatprep.mubr.bf16.mxu0 %v637
      %2515 = vmatmul.mubr.bf16.gmra.mrb[0].mxu0 %v636
      %v2516 = vpop.f32.mrb[0].mxu0
      %v2517 = vadd.f32 0.0, %v2516
      %v2518 = vpop.f32.mrb[0].mxu0
      %v2519 = vadd.f32 0.0, %v2518
      %v2520 = vpop.f32.mrb[0].mxu0
      %v2521 = vadd.f32 0.0, %v2520
      %v2522 = vpop.f32.mrb[0].mxu0
      %v2523 = vadd.f32 0.0, %v2522
      %2524 = vdwg.mxu0
      %2525 = vmatprep.subr.bf16.mxu0 %v1797
      %2526 = vmatpush1.bf16.msra.mxu0 %v1796
      %2527 = vmatprep.subr.bf16.mxu0 %v1815
      %2528 = vmatpush1.bf16.msra.mxu0 %v1814
      %2529 = vmatprep.subr.bf16.mxu0 %v1833
      %2530 = vmatpush1.bf16.msra.mxu0 %v1832
      %2531 = vmatprep.subr.bf16.mxu0 %v1851
      %2532 = vmatpush1.bf16.msra.mxu0 %v1850
      %2533 = vmatprep.subr.bf16.mxu0 %v1869
      %2534 = vmatpush1.bf16.msra.mxu0 %v1868
      %2535 = vmatprep.subr.bf16.mxu0 %v1887
      %2536 = vmatpush1.bf16.msra.mxu0 %v1886
      %2537 = vmatprep.subr.bf16.mxu0 %v1905
      %2538 = vmatpush1.bf16.msra.mxu0 %v1904
      %2539 = vmatprep.subr.bf16.mxu0 %v1923
      %2540 = vmatpush1.bf16.msra.mxu0 %v1922
      %2541 = vmatprep.subr.bf16.mxu0 %v1941
      %2542 = vmatpush1.bf16.msra.mxu0 %v1940
      %2543 = vmatprep.subr.bf16.mxu0 %v1959
      %2544 = vmatpush1.bf16.msra.mxu0 %v1958
      %2545 = vmatprep.subr.bf16.mxu0 %v1977
      %2546 = vmatpush1.bf16.msra.mxu0 %v1976
      %2547 = vmatprep.subr.bf16.mxu0 %v1995
      %2548 = vmatpush1.bf16.msra.mxu0 %v1994
      %2549 = vmatprep.subr.bf16.mxu0 %v2013
      %2550 = vmatpush1.bf16.msra.mxu0 %v2012
      %2551 = vmatprep.subr.bf16.mxu0 %v2031
      %2552 = vmatpush1.bf16.msra.mxu0 %v2030
      %2553 = vmatprep.subr.bf16.mxu0 %v2049
      %2554 = vmatpush1.bf16.msra.mxu0 %v2048
      %2555 = vmatprep.subr.bf16.mxu0 %v2067
      %2556 = vmatpush1.bf16.msra.mxu0 %v2066
      %2557 = vmatprep.mubr.bf16.mxu0 %v635
      %2558 = vmatmul.mubr.bf16.gmra.mrb[0].mxu0 %v634
      %v2559 = vpop.f32.mrb[0].mxu0
      %v2560 = vadd.f32 0.0, %v2559
      %v2561 = vpop.f32.mrb[0].mxu0
      %v2562 = vadd.f32 0.0, %v2561
      %v2563 = vpop.f32.mrb[0].mxu0
      %v2564 = vadd.f32 0.0, %v2563
      %v2565 = vpop.f32.mrb[0].mxu0
      %v2566 = vadd.f32 0.0, %v2565
      %2567 = vmatprep.mubr.bf16.mxu0 %v637
      %2568 = vmatmul.mubr.bf16.gmra.mrb[0].mxu0 %v636
      %v2569 = vpop.f32.mrb[0].mxu0
      %v2570 = vadd.f32 0.0, %v2569
      %v2571 = vpop.f32.mrb[0].mxu0
      %v2572 = vadd.f32 0.0, %v2571
      %v2573 = vpop.f32.mrb[0].mxu0
      %v2574 = vadd.f32 0.0, %v2573
      %v2575 = vpop.f32.mrb[0].mxu0
      %v2576 = vadd.f32 0.0, %v2575
      %2577 = vdwg.mxu0
      %2578 = vmatprep.subr.bf16.mxu0 %v1799
      %2579 = vmatpush1.bf16.msra.mxu0 %v1798
      %2580 = vmatprep.subr.bf16.mxu0 %v1817
      %2581 = vmatpush1.bf16.msra.mxu0 %v1816
      %2582 = vmatprep.subr.bf16.mxu0 %v1835
      %2583 = vmatpush1.bf16.msra.mxu0 %v1834
      %2584 = vmatprep.subr.bf16.mxu0 %v1853
      %2585 = vmatpush1.bf16.msra.mxu0 %v1852
      %2586 = vmatprep.subr.bf16.mxu0 %v1871
      %2587 = vmatpush1.bf16.msra.mxu0 %v1870
      %2588 = vmatprep.subr.bf16.mxu0 %v1889
      %2589 = vmatpush1.bf16.msra.mxu0 %v1888
      %2590 = vmatprep.subr.bf16.mxu0 %v1907
      %2591 = vmatpush1.bf16.msra.mxu0 %v1906
      %2592 = vmatprep.subr.bf16.mxu0 %v1925
      %2593 = vmatpush1.bf16.msra.mxu0 %v1924
      %2594 = vmatprep.subr.bf16.mxu0 %v1943
      %2595 = vmatpush1.bf16.msra.mxu0 %v1942
      %2596 = vmatprep.subr.bf16.mxu0 %v1961
      %2597 = vmatpush1.bf16.msra.mxu0 %v1960
      %2598 = vmatprep.subr.bf16.mxu0 %v1979
      %2599 = vmatpush1.bf16.msra.mxu0 %v1978
      %2600 = vmatprep.subr.bf16.mxu0 %v1997
      %2601 = vmatpush1.bf16.msra.mxu0 %v1996
      %2602 = vmatprep.subr.bf16.mxu0 %v2015
      %2603 = vmatpush1.bf16.msra.mxu0 %v2014
      %2604 = vmatprep.subr.bf16.mxu0 %v2033
      %2605 = vmatpush1.bf16.msra.mxu0 %v2032
      %2606 = vmatprep.subr.bf16.mxu0 %v2051
      %2607 = vmatpush1.bf16.msra.mxu0 %v2050
      %2608 = vmatprep.subr.bf16.mxu0 %v2069
      %2609 = vmatpush1.bf16.msra.mxu0 %v2068
      %2610 = vmatprep.mubr.bf16.mxu0 %v635
      %2611 = vmatmul.mubr.bf16.gmra.mrb[0].mxu0 %v634
      %v2612 = vpop.f32.mrb[0].mxu0
      %v2613 = vadd.f32 0.0, %v2612
      %v2614 = vpop.f32.mrb[0].mxu0
      %v2615 = vadd.f32 0.0, %v2614
      %v2616 = vpop.f32.mrb[0].mxu0
      %v2617 = vadd.f32 0.0, %v2616
      %v2618 = vpop.f32.mrb[0].mxu0
      %v2619 = vadd.f32 0.0, %v2618
      %2620 = vmatprep.mubr.bf16.mxu0 %v637
      %2621 = vmatmul.mubr.bf16.gmra.mrb[0].mxu0 %v636
      %v2622 = vpop.f32.mrb[0].mxu0
      %v2623 = vadd.f32 0.0, %v2622
      %v2624 = vpop.f32.mrb[0].mxu0
      %v2625 = vadd.f32 0.0, %v2624
      %v2626 = vpop.f32.mrb[0].mxu0
      %v2627 = vadd.f32 0.0, %v2626
      %v2628 = vpop.f32.mrb[0].mxu0
      %v2629 = vadd.f32 0.0, %v2628
      %2630 = vdwg.mxu0
      %2631 = vmatprep.subr.bf16.mxu0 %v1801
      %2632 = vmatpush1.bf16.msra.mxu0 %v1800
      %2633 = vmatprep.subr.bf16.mxu0 %v1819
      %2634 = vmatpush1.bf16.msra.mxu0 %v1818
      %2635 = vmatprep.subr.bf16.mxu0 %v1837
      %2636 = vmatpush1.bf16.msra.mxu0 %v1836
      %2637 = vmatprep.subr.bf16.mxu0 %v1855
      %2638 = vmatpush1.bf16.msra.mxu0 %v1854
      %2639 = vmatprep.subr.bf16.mxu0 %v1873
      %2640 = vmatpush1.bf16.msra.mxu0 %v1872
      %2641 = vmatprep.subr.bf16.mxu0 %v1891
      %2642 = vmatpush1.bf16.msra.mxu0 %v1890
      %2643 = vmatprep.subr.bf16.mxu0 %v1909
      %2644 = vmatpush1.bf16.msra.mxu0 %v1908
      %2645 = vmatprep.subr.bf16.mxu0 %v1927
      %2646 = vmatpush1.bf16.msra.mxu0 %v1926
      %2647 = vmatprep.subr.bf16.mxu0 %v1945
      %2648 = vmatpush1.bf16.msra.mxu0 %v1944
      %2649 = vmatprep.subr.bf16.mxu0 %v1963
      %2650 = vmatpush1.bf16.msra.mxu0 %v1962
      %2651 = vmatprep.subr.bf16.mxu0 %v1981
      %2652 = vmatpush1.bf16.msra.mxu0 %v1980
      %2653 = vmatprep.subr.bf16.mxu0 %v1999
      %2654 = vmatpush1.bf16.msra.mxu0 %v1998
      %2655 = vmatprep.subr.bf16.mxu0 %v2017
      %2656 = vmatpush1.bf16.msra.mxu0 %v2016
      %2657 = vmatprep.subr.bf16.mxu0 %v2035
      %2658 = vmatpush1.bf16.msra.mxu0 %v2034
      %2659 = vmatprep.subr.bf16.mxu0 %v2053
      %2660 = vmatpush1.bf16.msra.mxu0 %v2052
      %2661 = vmatprep.subr.bf16.mxu0 %v2071
      %2662 = vmatpush1.bf16.msra.mxu0 %v2070
      %2663 = vmatprep.mubr.bf16.mxu0 %v635
      %2664 = vmatmul.mubr.bf16.gmra.mrb[0].mxu0 %v634
      %v2665 = vpop.f32.mrb[0].mxu0
      %v2666 = vadd.f32 0.0, %v2665
      %v2667 = vpop.f32.mrb[0].mxu0
      %v2668 = vadd.f32 0.0, %v2667
      %v2669 = vpop.f32.mrb[0].mxu0
      %v2670 = vadd.f32 0.0, %v2669
      %v2671 = vpop.f32.mrb[0].mxu0
      %v2672 = vadd.f32 0.0, %v2671
      %2673 = vmatprep.mubr.bf16.mxu0 %v637
      %2674 = vmatmul.mubr.bf16.gmra.mrb[0].mxu0 %v636
      %v2675 = vpop.f32.mrb[0].mxu0
      %v2676 = vadd.f32 0.0, %v2675
      %v2677 = vpop.f32.mrb[0].mxu0
      %v2678 = vadd.f32 0.0, %v2677
      %v2679 = vpop.f32.mrb[0].mxu0
      %v2680 = vadd.f32 0.0, %v2679
      %v2681 = vpop.f32.mrb[0].mxu0
      %v2682 = vadd.f32 0.0, %v2681
      %2683 = vdwg.mxu0
      %2684 = vmatprep.subr.bf16.mxu0 %v1803
      %2685 = vmatpush1.bf16.msra.mxu0 %v1802
      %2686 = vmatprep.subr.bf16.mxu0 %v1821
      %2687 = vmatpush1.bf16.msra.mxu0 %v1820
      %2688 = vmatprep.subr.bf16.mxu0 %v1839
      %2689 = vmatpush1.bf16.msra.mxu0 %v1838
      %2690 = vmatprep.subr.bf16.mxu0 %v1857
      %2691 = vmatpush1.bf16.msra.mxu0 %v1856
      %2692 = vmatprep.subr.bf16.mxu0 %v1875
      %2693 = vmatpush1.bf16.msra.mxu0 %v1874
      %2694 = vmatprep.subr.bf16.mxu0 %v1893
      %2695 = vmatpush1.bf16.msra.mxu0 %v1892
      %2696 = vmatprep.subr.bf16.mxu0 %v1911
      %2697 = vmatpush1.bf16.msra.mxu0 %v1910
      %2698 = vmatprep.subr.bf16.mxu0 %v1929
      %2699 = vmatpush1.bf16.msra.mxu0 %v1928
      %2700 = vmatprep.subr.bf16.mxu0 %v1947
      %2701 = vmatpush1.bf16.msra.mxu0 %v1946
      %2702 = vmatprep.subr.bf16.mxu0 %v1965
      %2703 = vmatpush1.bf16.msra.mxu0 %v1964
      %2704 = vmatprep.subr.bf16.mxu0 %v1983
      %2705 = vmatpush1.bf16.msra.mxu0 %v1982
      %2706 = vmatprep.subr.bf16.mxu0 %v2001
      %2707 = vmatpush1.bf16.msra.mxu0 %v2000
      %2708 = vmatprep.subr.bf16.mxu0 %v2019
      %2709 = vmatpush1.bf16.msra.mxu0 %v2018
      %2710 = vmatprep.subr.bf16.mxu0 %v2037
      %2711 = vmatpush1.bf16.msra.mxu0 %v2036
      %2712 = vmatprep.subr.bf16.mxu0 %v2055
      %2713 = vmatpush1.bf16.msra.mxu0 %v2054
      %2714 = vmatprep.subr.bf16.mxu0 %v2073
      %2715 = vmatpush1.bf16.msra.mxu0 %v2072
      %2716 = vmatprep.mubr.bf16.mxu0 %v635
      %2717 = vmatmul.mubr.bf16.gmra.mrb[0].mxu0 %v634
      %v2718 = vpop.f32.mrb[0].mxu0
      %v2719 = vadd.f32 0.0, %v2718
      %v2720 = vpop.f32.mrb[0].mxu0
      %v2721 = vadd.f32 0.0, %v2720
      %v2722 = vpop.f32.mrb[0].mxu0
      %v2723 = vadd.f32 0.0, %v2722
      %v2724 = vpop.f32.mrb[0].mxu0
      %v2725 = vadd.f32 0.0, %v2724
      %2726 = vmatprep.mubr.bf16.mxu0 %v637
      %2727 = vmatmul.mubr.bf16.gmra.mrb[0].mxu0 %v636
      %v2728 = vpop.f32.mrb[0].mxu0
      %v2729 = vadd.f32 0.0, %v2728
      %v2730 = vpop.f32.mrb[0].mxu0
      %v2731 = vadd.f32 0.0, %v2730
      %v2732 = vpop.f32.mrb[0].mxu0
      %v2733 = vadd.f32 0.0, %v2732
      %v2734 = vpop.f32.mrb[0].mxu0
      %v2735 = vadd.f32 0.0, %v2734
      %2736 = vdwg.mxu0
      %2737 = vmatprep.subr.bf16.mxu0 %v1805
      %2738 = vmatpush1.bf16.msra.mxu0 %v1804
      %2739 = vmatprep.subr.bf16.mxu0 %v1823
      %2740 = vmatpush1.bf16.msra.mxu0 %v1822
      %2741 = vmatprep.subr.bf16.mxu0 %v1841
      %2742 = vmatpush1.bf16.msra.mxu0 %v1840
      %2743 = vmatprep.subr.bf16.mxu0 %v1859
      %2744 = vmatpush1.bf16.msra.mxu0 %v1858
      %2745 = vmatprep.subr.bf16.mxu0 %v1877
      %2746 = vmatpush1.bf16.msra.mxu0 %v1876
      %2747 = vmatprep.subr.bf16.mxu0 %v1895
      %2748 = vmatpush1.bf16.msra.mxu0 %v1894
      %2749 = vmatprep.subr.bf16.mxu0 %v1913
      %2750 = vmatpush1.bf16.msra.mxu0 %v1912
      %2751 = vmatprep.subr.bf16.mxu0 %v1931
      %2752 = vmatpush1.bf16.msra.mxu0 %v1930
      %2753 = vmatprep.subr.bf16.mxu0 %v1949
      %2754 = vmatpush1.bf16.msra.mxu0 %v1948
      %2755 = vmatprep.subr.bf16.mxu0 %v1967
      %2756 = vmatpush1.bf16.msra.mxu0 %v1966
      %2757 = vmatprep.subr.bf16.mxu0 %v1985
      %2758 = vmatpush1.bf16.msra.mxu0 %v1984
      %2759 = vmatprep.subr.bf16.mxu0 %v2003
      %2760 = vmatpush1.bf16.msra.mxu0 %v2002
      %2761 = vmatprep.subr.bf16.mxu0 %v2021
      %2762 = vmatpush1.bf16.msra.mxu0 %v2020
      %2763 = vmatprep.subr.bf16.mxu0 %v2039
      %2764 = vmatpush1.bf16.msra.mxu0 %v2038
      %2765 = vmatprep.subr.bf16.mxu0 %v2057
      %2766 = vmatpush1.bf16.msra.mxu0 %v2056
      %2767 = vmatprep.subr.bf16.mxu0 %v2075
      %2768 = vmatpush1.bf16.msra.mxu0 %v2074
      %2769 = vmatprep.mubr.bf16.mxu0 %v635
      %2770 = vmatmul.mubr.bf16.gmra.mrb[0].mxu0 %v634
      %v2771 = vpop.f32.mrb[0].mxu0
      %v2772 = vadd.f32 0.0, %v2771
      %v2773 = vpop.f32.mrb[0].mxu0
      %v2774 = vadd.f32 0.0, %v2773
      %v2775 = vpop.f32.mrb[0].mxu0
      %v2776 = vadd.f32 0.0, %v2775
      %v2777 = vpop.f32.mrb[0].mxu0
      %v2778 = vadd.f32 0.0, %v2777
      %2779 = vmatprep.mubr.bf16.mxu0 %v637
      %2780 = vmatmul.mubr.bf16.gmra.mrb[0].mxu0 %v636
      %v2781 = vpop.f32.mrb[0].mxu0
      %v2782 = vadd.f32 0.0, %v2781
      %v2783 = vpop.f32.mrb[0].mxu0
      %v2784 = vadd.f32 0.0, %v2783
      %v2785 = vpop.f32.mrb[0].mxu0
      %v2786 = vadd.f32 0.0, %v2785
      %v2787 = vpop.f32.mrb[0].mxu0
      %v2788 = vadd.f32 0.0, %v2787
      %2789 = vdwg.mxu0
      %2790 = vmatprep.subr.bf16.mxu0 %v1807
      %2791 = vmatpush1.bf16.msra.mxu0 %v1806
      %2792 = vmatprep.subr.bf16.mxu0 %v1825
      %2793 = vmatpush1.bf16.msra.mxu0 %v1824
      %2794 = vmatprep.subr.bf16.mxu0 %v1843
      %2795 = vmatpush1.bf16.msra.mxu0 %v1842
      %2796 = vmatprep.subr.bf16.mxu0 %v1861
      %2797 = vmatpush1.bf16.msra.mxu0 %v1860
      %2798 = vmatprep.subr.bf16.mxu0 %v1879
      %2799 = vmatpush1.bf16.msra.mxu0 %v1878
      %2800 = vmatprep.subr.bf16.mxu0 %v1897
      %2801 = vmatpush1.bf16.msra.mxu0 %v1896
      %2802 = vmatprep.subr.bf16.mxu0 %v1915
      %2803 = vmatpush1.bf16.msra.mxu0 %v1914
      %2804 = vmatprep.subr.bf16.mxu0 %v1933
      %2805 = vmatpush1.bf16.msra.mxu0 %v1932
      %2806 = vmatprep.subr.bf16.mxu0 %v1951
      %2807 = vmatpush1.bf16.msra.mxu0 %v1950
      %2808 = vmatprep.subr.bf16.mxu0 %v1969
      %2809 = vmatpush1.bf16.msra.mxu0 %v1968
      %2810 = vmatprep.subr.bf16.mxu0 %v1987
      %2811 = vmatpush1.bf16.msra.mxu0 %v1986
      %2812 = vmatprep.subr.bf16.mxu0 %v2005
      %2813 = vmatpush1.bf16.msra.mxu0 %v2004
      %2814 = vmatprep.subr.bf16.mxu0 %v2023
      %2815 = vmatpush1.bf16.msra.mxu0 %v2022
      %2816 = vmatprep.subr.bf16.mxu0 %v2041
      %2817 = vmatpush1.bf16.msra.mxu0 %v2040
      %2818 = vmatprep.subr.bf16.mxu0 %v2059
      %2819 = vmatpush1.bf16.msra.mxu0 %v2058
      %2820 = vmatprep.subr.bf16.mxu0 %v2077
      %2821 = vmatpush1.bf16.msra.mxu0 %v2076
      %2822 = vmatprep.mubr.bf16.mxu0 %v635
      %2823 = vmatmul.mubr.bf16.gmra.mrb[0].mxu0 %v634
      %v2824 = vpop.f32.mrb[0].mxu0
      %v2825 = vadd.f32 0.0, %v2824
      %v2826 = vpop.f32.mrb[0].mxu0
      %v2827 = vadd.f32 0.0, %v2826
      %v2828 = vpop.f32.mrb[0].mxu0
      %v2829 = vadd.f32 0.0, %v2828
      %v2830 = vpop.f32.mrb[0].mxu0
      %v2831 = vadd.f32 0.0, %v2830
      %2832 = vmatprep.mubr.bf16.mxu0 %v637
      %2833 = vmatmul.mubr.bf16.gmra.mrb[0].mxu0 %v636
      %v2834 = vpop.f32.mrb[0].mxu0
      %v2835 = vadd.f32 0.0, %v2834
      %v2836 = vpop.f32.mrb[0].mxu0
      %v2837 = vadd.f32 0.0, %v2836
      %v2838 = vpop.f32.mrb[0].mxu0
      %v2839 = vadd.f32 0.0, %v2838
      %v2840 = vpop.f32.mrb[0].mxu0
      %v2841 = vadd.f32 0.0, %v2840
      %2842 = vdwg.mxu0
      %v2843 = vpack.c.bf16 %v2405, %v2401
      %v2844 = vpack.c.bf16 %v2407, %v2403
      %v2845 = vpack.c.bf16 %v2458, %v2454
      %v2846 = vpack.c.bf16 %v2460, %v2456
      %v2847 = vpack.c.bf16 %v2511, %v2507
      %v2848 = vpack.c.bf16 %v2513, %v2509
      %v2849 = vpack.c.bf16 %v2564, %v2560
      %v2850 = vpack.c.bf16 %v2566, %v2562
      %v2851 = vpack.c.bf16 %v2617, %v2613
      %v2852 = vpack.c.bf16 %v2619, %v2615
      %v2853 = vpack.c.bf16 %v2670, %v2666
      %v2854 = vpack.c.bf16 %v2672, %v2668
      %v2855 = vpack.c.bf16 %v2723, %v2719
      %v2856 = vpack.c.bf16 %v2725, %v2721
      %v2857 = vpack.c.bf16 %v2776, %v2772
      %v2858 = vpack.c.bf16 %v2778, %v2774
      %v2859 = vpack.c.bf16 %v2829, %v2825
      %v2860 = vpack.c.bf16 %v2831, %v2827
      %v2861 = vpack.c.bf16 %v2415, %v2411
      %v2862 = vpack.c.bf16 %v2417, %v2413
      %v2863 = vpack.c.bf16 %v2468, %v2464
      %v2864 = vpack.c.bf16 %v2470, %v2466
      %v2865 = vpack.c.bf16 %v2521, %v2517
      %v2866 = vpack.c.bf16 %v2523, %v2519
      %v2867 = vpack.c.bf16 %v2574, %v2570
      %v2868 = vpack.c.bf16 %v2576, %v2572
      %v2869 = vpack.c.bf16 %v2627, %v2623
      %v2870 = vpack.c.bf16 %v2629, %v2625
      %v2871 = vpack.c.bf16 %v2680, %v2676
      %v2872 = vpack.c.bf16 %v2682, %v2678
      %v2873 = vpack.c.bf16 %v2733, %v2729
      %v2874 = vpack.c.bf16 %v2735, %v2731
      %v2875 = vpack.c.bf16 %v2786, %v2782
      %v2876 = vpack.c.bf16 %v2788, %v2784
      %v2877 = vpack.c.bf16 %v2839, %v2835
      %v2878 = vpack.c.bf16 %v2841, %v2837
      %v2879 = vld [vmem:[%s4] sm:$0xf]
      %v2880 = vld [vmem:[%s4 + $0x4] sm:$0xf]
      %v2881 = vld [vmem:[%s4 + $0x8] sm:$0xf]
      %v2882 = vld [vmem:[%s4 + $0xc] sm:$0xf]
      %v2883 = vld [vmem:[%s4 + $0x10] sm:$0xf]
      %v2884 = vld [vmem:[%s4 + $0x14] sm:$0xf]
      %v2885 = vld [vmem:[%s4 + $0x18] sm:$0xf]
      %v2886 = vld [vmem:[%s4 + $0x1c] sm:$0xf]
      %s2887 = scalar_lea.vmem %s4, 32
      %v2888 = vld [vmem:[%s2887] sm:$0xf]
      %v2889 = vld [vmem:[%s2887 + $0x4] sm:$0xf]
      %v2890 = vld [vmem:[%s2887 + $0x8] sm:$0xf]
      %v2891 = vld [vmem:[%s2887 + $0xc] sm:$0xf]
      %v2892 = vld [vmem:[%s2887 + $0x10] sm:$0xf]
      %v2893 = vld [vmem:[%s2887 + $0x14] sm:$0xf]
      %v2894 = vld [vmem:[%s2887 + $0x18] sm:$0xf]
      %v2895 = vld [vmem:[%s2887 + $0x1c] sm:$0xf]
      %v2904 = vunpack.c.l.b16 %v2888
      %v2905 = vunpack.c.l.b16 %v2889
      %v2906 = vunpack.c.l.b16 %v2890
      %v2907 = vunpack.c.l.b16 %v2891
      %v2908 = vunpack.c.l.b16 %v2892
      %v2909 = vunpack.c.l.b16 %v2893
      %v2910 = vunpack.c.l.b16 %v2894
      %v2911 = vunpack.c.l.b16 %v2895
      %v2912 = vpack.c.b16 %v2905, %v2904
      %v2913 = vpack.c.b16 %v2907, %v2906
      %v2914 = vpack.c.b16 %v2909, %v2908
      %v2915 = vpack.c.b16 %v2911, %v2910
      %vm2916 = vcmask 261120
      %v2918 = vsel %vm2916, %v2912, 0
      %v2921 = vsel %vm2916, %v2913, 0
      %v2924 = vsel %vm2916, %v2914, 0
      %v2927 = vsel %vm2916, %v2915, 0
      %2929 = vmatprep.subr.bf16.mxu0 %v2846
      %2930 = vmatpush1.bf16.msra.mxu0 %v2845
      %2931 = vmatprep.subr.bf16.mxu0 %v2864
      %2932 = vmatpush1.bf16.msra.mxu0 %v2863
      %2933 = vmatprep.subr.bf16.mxu0 0
      %2934 = vmatpush1.bf16.msra.mxu0 0
      %2935 = vmatprep.subr.bf16.mxu0 0
      %2936 = vmatpush1.bf16.msra.mxu0 0
      %2937 = vmatprep.subr.bf16.mxu0 0
      %2938 = vmatpush1.bf16.msra.mxu0 0
      %2939 = vmatprep.subr.bf16.mxu0 0
      %2940 = vmatpush1.bf16.msra.mxu0 0
      %2941 = vmatprep.subr.bf16.mxu0 0
      %2942 = vmatpush1.bf16.msra.mxu0 0
      %2943 = vmatprep.subr.bf16.mxu0 0
      %2944 = vmatpush1.bf16.msra.mxu0 0
      %2945 = vmatprep.subr.bf16.mxu0 0
      %2946 = vmatpush1.bf16.msra.mxu0 0
      %2947 = vmatprep.subr.bf16.mxu0 0
      %2948 = vmatpush1.bf16.msra.mxu0 0
      %2949 = vmatprep.subr.bf16.mxu0 0
      %2950 = vmatpush1.bf16.msra.mxu0 0
      %2951 = vmatprep.subr.bf16.mxu0 0
      %2952 = vmatpush1.bf16.msra.mxu0 0
      %2953 = vmatprep.subr.bf16.mxu0 0
      %2954 = vmatpush1.bf16.msra.mxu0 0
      %2955 = vmatprep.subr.bf16.mxu0 0
      %2956 = vmatpush1.bf16.msra.mxu0 0
      %2957 = vmatprep.subr.bf16.mxu0 0
      %2958 = vmatpush1.bf16.msra.mxu0 0
      %2959 = vmatprep.subr.bf16.mxu0 0
      %2960 = vmatpush1.bf16.msra.mxu0 0
      %2961 = vmatprep.mubr.bf16.mxu0 0
      %2962 = vmatmul.mubr.bf16.gmra.mrb[0].mxu0 %v2918
      %v2963 = vpop.f32.mrb[0].mxu0
      %v2964 = vadd.f32 0.0, %v2963
      %v2965 = vpop.f32.mrb[0].mxu0
      %v2966 = vadd.f32 0.0, %v2965
      %v2967 = vpop.f32.mrb[0].mxu0
      %v2968 = vadd.f32 0.0, %v2967
      %v2969 = vpop.f32.mrb[0].mxu0
      %v2970 = vadd.f32 0.0, %v2969
      %2971 = vmatprep.mubr.bf16.mxu0 0
      %2972 = vmatmul.mubr.bf16.gmra.mrb[0].mxu0 %v2921
      %v2973 = vpop.f32.mrb[0].mxu0
      %v2974 = vadd.f32 0.0, %v2973
      %v2975 = vpop.f32.mrb[0].mxu0
      %v2976 = vadd.f32 0.0, %v2975
      %v2977 = vpop.f32.mrb[0].mxu0
      %v2978 = vadd.f32 0.0, %v2977
      %v2979 = vpop.f32.mrb[0].mxu0
      %v2980 = vadd.f32 0.0, %v2979
      %2981 = vmatprep.mubr.bf16.mxu0 0
      %2982 = vmatmul.mubr.bf16.gmra.mrb[0].mxu0 %v2924
      %v2983 = vpop.f32.mrb[0].mxu0
      %v2984 = vadd.f32 0.0, %v2983
      %v2985 = vpop.f32.mrb[0].mxu0
      %v2986 = vadd.f32 0.0, %v2985
      %v2987 = vpop.f32.mrb[0].mxu0
      %v2988 = vadd.f32 0.0, %v2987
      %v2989 = vpop.f32.mrb[0].mxu0
      %v2990 = vadd.f32 0.0, %v2989
      %2991 = vmatprep.mubr.bf16.mxu0 0
      %2992 = vmatmul.mubr.bf16.gmra.mrb[0].mxu0 %v2927
      %v2993 = vpop.f32.mrb[0].mxu0
      %v2994 = vadd.f32 0.0, %v2993
      %v2995 = vpop.f32.mrb[0].mxu0
      %v2996 = vadd.f32 0.0, %v2995
      %v2997 = vpop.f32.mrb[0].mxu0
      %v2998 = vadd.f32 0.0, %v2997
      %v2999 = vpop.f32.mrb[0].mxu0
      %v3000 = vadd.f32 0.0, %v2999
      %3001 = vdwg.mxu0
      %v3010 = vunpack.c.l.b16 %v2879
      %v3011 = vunpack.c.l.b16 %v2880
      %v3012 = vunpack.c.l.b16 %v2881
      %v3013 = vunpack.c.l.b16 %v2882
      %v3014 = vunpack.c.l.b16 %v2883
      %v3015 = vunpack.c.l.b16 %v2884
      %v3016 = vunpack.c.l.b16 %v2885
      %v3017 = vunpack.c.l.b16 %v2886
      %v3018 = vpack.c.b16 %v3011, %v3010
      %v3019 = vpack.c.b16 %v3013, %v3012
      %v3020 = vpack.c.b16 %v3015, %v3014
      %v3021 = vpack.c.b16 %v3017, %v3016
      %v3023 = vsel %vm2916, %v3018, 0
      %v3026 = vsel %vm2916, %v3019, 0
      %v3029 = vsel %vm2916, %v3020, 0
      %v3032 = vsel %vm2916, %v3021, 0
      %3034 = vmatprep.subr.bf16.mxu0 %v2844
      %3035 = vmatpush1.bf16.msra.mxu0 %v2843
      %3036 = vmatprep.subr.bf16.mxu0 %v2862
      %3037 = vmatpush1.bf16.msra.mxu0 %v2861
      %3038 = vmatprep.subr.bf16.mxu0 0
      %3039 = vmatpush1.bf16.msra.mxu0 0
      %3040 = vmatprep.subr.bf16.mxu0 0
      %3041 = vmatpush1.bf16.msra.mxu0 0
      %3042 = vmatprep.subr.bf16.mxu0 0
      %3043 = vmatpush1.bf16.msra.mxu0 0
      %3044 = vmatprep.subr.bf16.mxu0 0
      %3045 = vmatpush1.bf16.msra.mxu0 0
      %3046 = vmatprep.subr.bf16.mxu0 0
      %3047 = vmatpush1.bf16.msra.mxu0 0
      %3048 = vmatprep.subr.bf16.mxu0 0
      %3049 = vmatpush1.bf16.msra.mxu0 0
      %3050 = vmatprep.subr.bf16.mxu0 0
      %3051 = vmatpush1.bf16.msra.mxu0 0
      %3052 = vmatprep.subr.bf16.mxu0 0
      %3053 = vmatpush1.bf16.msra.mxu0 0
      %3054 = vmatprep.subr.bf16.mxu0 0
      %3055 = vmatpush1.bf16.msra.mxu0 0
      %3056 = vmatprep.subr.bf16.mxu0 0
      %3057 = vmatpush1.bf16.msra.mxu0 0
      %3058 = vmatprep.subr.bf16.mxu0 0
      %3059 = vmatpush1.bf16.msra.mxu0 0
      %3060 = vmatprep.subr.bf16.mxu0 0
      %3061 = vmatpush1.bf16.msra.mxu0 0
      %3062 = vmatprep.subr.bf16.mxu0 0
      %3063 = vmatpush1.bf16.msra.mxu0 0
      %3064 = vmatprep.subr.bf16.mxu0 0
      %3065 = vmatpush1.bf16.msra.mxu0 0
      %3066 = vmatprep.mubr.bf16.mxu0 0
      %3067 = vmatmul.mubr.bf16.gmra.mrb[0].mxu0 %v3023
      %v3068 = vpop.f32.mrb[0].mxu0
      %v3069 = vadd.f32 %v2964, %v3068
      %v3070 = vpop.f32.mrb[0].mxu0
      %v3071 = vadd.f32 %v2966, %v3070
      %v3072 = vpop.f32.mrb[0].mxu0
      %v3073 = vadd.f32 %v2968, %v3072
      %v3074 = vpop.f32.mrb[0].mxu0
      %v3075 = vadd.f32 %v2970, %v3074
      %3076 = vmatprep.mubr.bf16.mxu0 0
      %3077 = vmatmul.mubr.bf16.gmra.mrb[0].mxu0 %v3026
      %v3078 = vpop.f32.mrb[0].mxu0
      %v3079 = vadd.f32 %v2974, %v3078
      %v3080 = vpop.f32.mrb[0].mxu0
      %v3081 = vadd.f32 %v2976, %v3080
      %v3082 = vpop.f32.mrb[0].mxu0
      %v3083 = vadd.f32 %v2978, %v3082
      %v3084 = vpop.f32.mrb[0].mxu0
      %v3085 = vadd.f32 %v2980, %v3084
      %3086 = vmatprep.mubr.bf16.mxu0 0
      %3087 = vmatmul.mubr.bf16.gmra.mrb[0].mxu0 %v3029
      %v3088 = vpop.f32.mrb[0].mxu0
      %v3089 = vadd.f32 %v2984, %v3088
      %v3090 = vpop.f32.mrb[0].mxu0
      %v3091 = vadd.f32 %v2986, %v3090
      %v3092 = vpop.f32.mrb[0].mxu0
      %v3093 = vadd.f32 %v2988, %v3092
      %v3094 = vpop.f32.mrb[0].mxu0
      %v3095 = vadd.f32 %v2990, %v3094
      %3096 = vmatprep.mubr.bf16.mxu0 0
      %3097 = vmatmul.mubr.bf16.gmra.mrb[0].mxu0 %v3032
      %v3098 = vpop.f32.mrb[0].mxu0
      %v3099 = vadd.f32 %v2994, %v3098
      %v3100 = vpop.f32.mrb[0].mxu0
      %v3101 = vadd.f32 %v2996, %v3100
      %v3102 = vpop.f32.mrb[0].mxu0
      %v3103 = vadd.f32 %v2998, %v3102
      %v3104 = vpop.f32.mrb[0].mxu0
      %v3105 = vadd.f32 %v3000, %v3104
      %3106 = vdwg.mxu0
      %s3107 = scalar_lea.vmem %s4, 64
      %v3108 = vld [vmem:[%s3107] sm:$0xf]
      %v3109 = vld [vmem:[%s3107 + $0x4] sm:$0xf]
      %v3110 = vld [vmem:[%s3107 + $0x8] sm:$0xf]
      %v3111 = vld [vmem:[%s3107 + $0xc] sm:$0xf]
      %v3112 = vld [vmem:[%s3107 + $0x10] sm:$0xf]
      %v3113 = vld [vmem:[%s3107 + $0x14] sm:$0xf]
      %v3114 = vld [vmem:[%s3107 + $0x18] sm:$0xf]
      %v3115 = vld [vmem:[%s3107 + $0x1c] sm:$0xf]
      %v3124 = vunpack.c.l.b16 %v3108
      %v3125 = vunpack.c.l.b16 %v3109
      %v3126 = vunpack.c.l.b16 %v3110
      %v3127 = vunpack.c.l.b16 %v3111
      %v3128 = vunpack.c.l.b16 %v3112
      %v3129 = vunpack.c.l.b16 %v3113
      %v3130 = vunpack.c.l.b16 %v3114
      %v3131 = vunpack.c.l.b16 %v3115
      %v3132 = vpack.c.b16 %v3125, %v3124
      %v3133 = vpack.c.b16 %v3127, %v3126
      %v3134 = vpack.c.b16 %v3129, %v3128
      %v3135 = vpack.c.b16 %v3131, %v3130
      %v3137 = vsel %vm2916, %v3132, 0
      %v3140 = vsel %vm2916, %v3133, 0
      %v3143 = vsel %vm2916, %v3134, 0
      %v3146 = vsel %vm2916, %v3135, 0
      %3148 = vmatprep.subr.bf16.mxu0 %v2848
      %3149 = vmatpush1.bf16.msra.mxu0 %v2847
      %3150 = vmatprep.subr.bf16.mxu0 %v2866
      %3151 = vmatpush1.bf16.msra.mxu0 %v2865
      %3152 = vmatprep.subr.bf16.mxu0 0
      %3153 = vmatpush1.bf16.msra.mxu0 0
      %3154 = vmatprep.subr.bf16.mxu0 0
      %3155 = vmatpush1.bf16.msra.mxu0 0
      %3156 = vmatprep.subr.bf16.mxu0 0
      %3157 = vmatpush1.bf16.msra.mxu0 0
      %3158 = vmatprep.subr.bf16.mxu0 0
      %3159 = vmatpush1.bf16.msra.mxu0 0
      %3160 = vmatprep.subr.bf16.mxu0 0
      %3161 = vmatpush1.bf16.msra.mxu0 0
      %3162 = vmatprep.subr.bf16.mxu0 0
      %3163 = vmatpush1.bf16.msra.mxu0 0
      %3164 = vmatprep.subr.bf16.mxu0 0
      %3165 = vmatpush1.bf16.msra.mxu0 0
      %3166 = vmatprep.subr.bf16.mxu0 0
      %3167 = vmatpush1.bf16.msra.mxu0 0
      %3168 = vmatprep.subr.bf16.mxu0 0
      %3169 = vmatpush1.bf16.msra.mxu0 0
      %3170 = vmatprep.subr.bf16.mxu0 0
      %3171 = vmatpush1.bf16.msra.mxu0 0
      %3172 = vmatprep.subr.bf16.mxu0 0
      %3173 = vmatpush1.bf16.msra.mxu0 0
      %3174 = vmatprep.subr.bf16.mxu0 0
      %3175 = vmatpush1.bf16.msra.mxu0 0
      %3176 = vmatprep.subr.bf16.mxu0 0
      %3177 = vmatpush1.bf16.msra.mxu0 0
      %3178 = vmatprep.subr.bf16.mxu0 0
      %3179 = vmatpush1.bf16.msra.mxu0 0
      %3180 = vmatprep.mubr.bf16.mxu0 0
      %3181 = vmatmul.mubr.bf16.gmra.mrb[0].mxu0 %v3137
      %v3182 = vpop.f32.mrb[0].mxu0
      %v3183 = vadd.f32 0.0, %v3182
      %v3184 = vpop.f32.mrb[0].mxu0
      %v3185 = vadd.f32 0.0, %v3184
      %v3186 = vpop.f32.mrb[0].mxu0
      %v3187 = vadd.f32 0.0, %v3186
      %v3188 = vpop.f32.mrb[0].mxu0
      %v3189 = vadd.f32 0.0, %v3188
      %3190 = vmatprep.mubr.bf16.mxu0 0
      %3191 = vmatmul.mubr.bf16.gmra.mrb[0].mxu0 %v3140
      %v3192 = vpop.f32.mrb[0].mxu0
      %v3193 = vadd.f32 0.0, %v3192
      %v3194 = vpop.f32.mrb[0].mxu0
      %v3195 = vadd.f32 0.0, %v3194
      %v3196 = vpop.f32.mrb[0].mxu0
      %v3197 = vadd.f32 0.0, %v3196
      %v3198 = vpop.f32.mrb[0].mxu0
      %v3199 = vadd.f32 0.0, %v3198
      %3200 = vmatprep.mubr.bf16.mxu0 0
      %3201 = vmatmul.mubr.bf16.gmra.mrb[0].mxu0 %v3143
      %v3202 = vpop.f32.mrb[0].mxu0
      %v3203 = vadd.f32 0.0, %v3202
      %v3204 = vpop.f32.mrb[0].mxu0
      %v3205 = vadd.f32 0.0, %v3204
      %v3206 = vpop.f32.mrb[0].mxu0
      %v3207 = vadd.f32 0.0, %v3206
      %v3208 = vpop.f32.mrb[0].mxu0
      %v3209 = vadd.f32 0.0, %v3208
      %3210 = vmatprep.mubr.bf16.mxu0 0
      %3211 = vmatmul.mubr.bf16.gmra.mrb[0].mxu0 %v3146
      %v3212 = vpop.f32.mrb[0].mxu0
      %v3213 = vadd.f32 0.0, %v3212
      %v3214 = vpop.f32.mrb[0].mxu0
      %v3215 = vadd.f32 0.0, %v3214
      %v3216 = vpop.f32.mrb[0].mxu0
      %v3217 = vadd.f32 0.0, %v3216
      %v3218 = vpop.f32.mrb[0].mxu0
      %v3219 = vadd.f32 0.0, %v3218
      %3220 = vdwg.mxu0
      %v3221 = vadd.f32 %v3069, %v3183
      %v3222 = vadd.f32 %v3071, %v3185
      %v3223 = vadd.f32 %v3073, %v3187
      %v3224 = vadd.f32 %v3075, %v3189
      %v3225 = vadd.f32 %v3079, %v3193
      %v3226 = vadd.f32 %v3081, %v3195
      %v3227 = vadd.f32 %v3083, %v3197
      %v3228 = vadd.f32 %v3085, %v3199
      %v3229 = vadd.f32 %v3089, %v3203
      %v3230 = vadd.f32 %v3091, %v3205
      %v3231 = vadd.f32 %v3093, %v3207
      %v3232 = vadd.f32 %v3095, %v3209
      %v3233 = vadd.f32 %v3099, %v3213
      %v3234 = vadd.f32 %v3101, %v3215
      %v3235 = vadd.f32 %v3103, %v3217
      %v3236 = vadd.f32 %v3105, %v3219
      %s3237 = scalar_lea.vmem %s4, 96
      %v3238 = vld [vmem:[%s3237] sm:$0xf]
      %v3239 = vld [vmem:[%s3237 + $0x4] sm:$0xf]
      %v3240 = vld [vmem:[%s3237 + $0x8] sm:$0xf]
      %v3241 = vld [vmem:[%s3237 + $0xc] sm:$0xf]
      %v3242 = vld [vmem:[%s3237 + $0x10] sm:$0xf]
      %v3243 = vld [vmem:[%s3237 + $0x14] sm:$0xf]
      %v3244 = vld [vmem:[%s3237 + $0x18] sm:$0xf]
      %v3245 = vld [vmem:[%s3237 + $0x1c] sm:$0xf]
      %v3254 = vunpack.c.l.b16 %v3238
      %v3255 = vunpack.c.l.b16 %v3239
      %v3256 = vunpack.c.l.b16 %v3240
      %v3257 = vunpack.c.l.b16 %v3241
      %v3258 = vunpack.c.l.b16 %v3242
      %v3259 = vunpack.c.l.b16 %v3243
      %v3260 = vunpack.c.l.b16 %v3244
      %v3261 = vunpack.c.l.b16 %v3245
      %v3262 = vpack.c.b16 %v3255, %v3254
      %v3263 = vpack.c.b16 %v3257, %v3256
      %v3264 = vpack.c.b16 %v3259, %v3258
      %v3265 = vpack.c.b16 %v3261, %v3260
      %v3267 = vsel %vm2916, %v3262, 0
      %v3270 = vsel %vm2916, %v3263, 0
      %v3273 = vsel %vm2916, %v3264, 0
      %v3276 = vsel %vm2916, %v3265, 0
      %3278 = vmatprep.subr.bf16.mxu0 %v2850
      %3279 = vmatpush1.bf16.msra.mxu0 %v2849
      %3280 = vmatprep.subr.bf16.mxu0 %v2868
      %3281 = vmatpush1.bf16.msra.mxu0 %v2867
      %3282 = vmatprep.subr.bf16.mxu0 0
      %3283 = vmatpush1.bf16.msra.mxu0 0
      %3284 = vmatprep.subr.bf16.mxu0 0
      %3285 = vmatpush1.bf16.msra.mxu0 0
      %3286 = vmatprep.subr.bf16.mxu0 0
      %3287 = vmatpush1.bf16.msra.mxu0 0
      %3288 = vmatprep.subr.bf16.mxu0 0
      %3289 = vmatpush1.bf16.msra.mxu0 0
      %3290 = vmatprep.subr.bf16.mxu0 0
      %3291 = vmatpush1.bf16.msra.mxu0 0
      %3292 = vmatprep.subr.bf16.mxu0 0
      %3293 = vmatpush1.bf16.msra.mxu0 0
      %3294 = vmatprep.subr.bf16.mxu0 0
      %3295 = vmatpush1.bf16.msra.mxu0 0
      %3296 = vmatprep.subr.bf16.mxu0 0
      %3297 = vmatpush1.bf16.msra.mxu0 0
      %3298 = vmatprep.subr.bf16.mxu0 0
      %3299 = vmatpush1.bf16.msra.mxu0 0
      %3300 = vmatprep.subr.bf16.mxu0 0
      %3301 = vmatpush1.bf16.msra.mxu0 0
      %3302 = vmatprep.subr.bf16.mxu0 0
      %3303 = vmatpush1.bf16.msra.mxu0 0
      %3304 = vmatprep.subr.bf16.mxu0 0
      %3305 = vmatpush1.bf16.msra.mxu0 0
      %3306 = vmatprep.subr.bf16.mxu0 0
      %3307 = vmatpush1.bf16.msra.mxu0 0
      %3308 = vmatprep.subr.bf16.mxu0 0
      %3309 = vmatpush1.bf16.msra.mxu0 0
      %3310 = vmatprep.mubr.bf16.mxu0 0
      %3311 = vmatmul.mubr.bf16.gmra.mrb[0].mxu0 %v3267
      %v3312 = vpop.f32.mrb[0].mxu0
      %v3313 = vadd.f32 0.0, %v3312
      %v3314 = vpop.f32.mrb[0].mxu0
      %v3315 = vadd.f32 0.0, %v3314
      %v3316 = vpop.f32.mrb[0].mxu0
      %v3317 = vadd.f32 0.0, %v3316
      %v3318 = vpop.f32.mrb[0].mxu0
      %v3319 = vadd.f32 0.0, %v3318
      %3320 = vmatprep.mubr.bf16.mxu0 0
      %3321 = vmatmul.mubr.bf16.gmra.mrb[0].mxu0 %v3270
      %v3322 = vpop.f32.mrb[0].mxu0
      %v3323 = vadd.f32 0.0, %v3322
      %v3324 = vpop.f32.mrb[0].mxu0
      %v3325 = vadd.f32 0.0, %v3324
      %v3326 = vpop.f32.mrb[0].mxu0
      %v3327 = vadd.f32 0.0, %v3326
      %v3328 = vpop.f32.mrb[0].mxu0
      %v3329 = vadd.f32 0.0, %v3328
      %3330 = vmatprep.mubr.bf16.mxu0 0
      %3331 = vmatmul.mubr.bf16.gmra.mrb[0].mxu0 %v3273
      %v3332 = vpop.f32.mrb[0].mxu0
      %v3333 = vadd.f32 0.0, %v3332
      %v3334 = vpop.f32.mrb[0].mxu0
      %v3335 = vadd.f32 0.0, %v3334
      %v3336 = vpop.f32.mrb[0].mxu0
      %v3337 = vadd.f32 0.0, %v3336
      %v3338 = vpop.f32.mrb[0].mxu0
      %v3339 = vadd.f32 0.0, %v3338
      %3340 = vmatprep.mubr.bf16.mxu0 0
      %3341 = vmatmul.mubr.bf16.gmra.mrb[0].mxu0 %v3276
      %v3342 = vpop.f32.mrb[0].mxu0
      %v3343 = vadd.f32 0.0, %v3342
      %v3344 = vpop.f32.mrb[0].mxu0
      %v3345 = vadd.f32 0.0, %v3344
      %v3346 = vpop.f32.mrb[0].mxu0
      %v3347 = vadd.f32 0.0, %v3346
      %v3348 = vpop.f32.mrb[0].mxu0
      %v3349 = vadd.f32 0.0, %v3348
      %3350 = vdwg.mxu0
      %v3351 = vadd.f32 %v3221, %v3313
      %v3352 = vadd.f32 %v3222, %v3315
      %v3353 = vadd.f32 %v3223, %v3317
      %v3354 = vadd.f32 %v3224, %v3319
      %v3355 = vadd.f32 %v3225, %v3323
      %v3356 = vadd.f32 %v3226, %v3325
      %v3357 = vadd.f32 %v3227, %v3327
      %v3358 = vadd.f32 %v3228, %v3329
      %v3359 = vadd.f32 %v3229, %v3333
      %v3360 = vadd.f32 %v3230, %v3335
      %v3361 = vadd.f32 %v3231, %v3337
      %v3362 = vadd.f32 %v3232, %v3339
      %v3363 = vadd.f32 %v3233, %v3343
      %v3364 = vadd.f32 %v3234, %v3345
      %v3365 = vadd.f32 %v3235, %v3347
      %v3366 = vadd.f32 %v3236, %v3349
      %s3367 = scalar_lea.vmem %s4, 128
      %v3368 = vld [vmem:[%s3367] sm:$0xf]
      %v3369 = vld [vmem:[%s3367 + $0x4] sm:$0xf]
      %v3370 = vld [vmem:[%s3367 + $0x8] sm:$0xf]
      %v3371 = vld [vmem:[%s3367 + $0xc] sm:$0xf]
      %v3372 = vld [vmem:[%s3367 + $0x10] sm:$0xf]
      %v3373 = vld [vmem:[%s3367 + $0x14] sm:$0xf]
      %v3374 = vld [vmem:[%s3367 + $0x18] sm:$0xf]
      %v3375 = vld [vmem:[%s3367 + $0x1c] sm:$0xf]
      %v3384 = vunpack.c.l.b16 %v3368
      %v3385 = vunpack.c.l.b16 %v3369
      %v3386 = vunpack.c.l.b16 %v3370
      %v3387 = vunpack.c.l.b16 %v3371
      %v3388 = vunpack.c.l.b16 %v3372
      %v3389 = vunpack.c.l.b16 %v3373
      %v3390 = vunpack.c.l.b16 %v3374
      %v3391 = vunpack.c.l.b16 %v3375
      %v3392 = vpack.c.b16 %v3385, %v3384
      %v3393 = vpack.c.b16 %v3387, %v3386
      %v3394 = vpack.c.b16 %v3389, %v3388
      %v3395 = vpack.c.b16 %v3391, %v3390
      %v3397 = vsel %vm2916, %v3392, 0
      %v3400 = vsel %vm2916, %v3393, 0
      %v3403 = vsel %vm2916, %v3394, 0
      %v3406 = vsel %vm2916, %v3395, 0
      %3408 = vmatprep.subr.bf16.mxu0 %v2852
      %3409 = vmatpush1.bf16.msra.mxu0 %v2851
      %3410 = vmatprep.subr.bf16.mxu0 %v2870
      %3411 = vmatpush1.bf16.msra.mxu0 %v2869
      %3412 = vmatprep.subr.bf16.mxu0 0
      %3413 = vmatpush1.bf16.msra.mxu0 0
      %3414 = vmatprep.subr.bf16.mxu0 0
      %3415 = vmatpush1.bf16.msra.mxu0 0
      %3416 = vmatprep.subr.bf16.mxu0 0
      %3417 = vmatpush1.bf16.msra.mxu0 0
      %3418 = vmatprep.subr.bf16.mxu0 0
      %3419 = vmatpush1.bf16.msra.mxu0 0
      %3420 = vmatprep.subr.bf16.mxu0 0
      %3421 = vmatpush1.bf16.msra.mxu0 0
      %3422 = vmatprep.subr.bf16.mxu0 0
      %3423 = vmatpush1.bf16.msra.mxu0 0
      %3424 = vmatprep.subr.bf16.mxu0 0
      %3425 = vmatpush1.bf16.msra.mxu0 0
      %3426 = vmatprep.subr.bf16.mxu0 0
      %3427 = vmatpush1.bf16.msra.mxu0 0
      %3428 = vmatprep.subr.bf16.mxu0 0
      %3429 = vmatpush1.bf16.msra.mxu0 0
      %3430 = vmatprep.subr.bf16.mxu0 0
      %3431 = vmatpush1.bf16.msra.mxu0 0
      %3432 = vmatprep.subr.bf16.mxu0 0
      %3433 = vmatpush1.bf16.msra.mxu0 0
      %3434 = vmatprep.subr.bf16.mxu0 0
      %3435 = vmatpush1.bf16.msra.mxu0 0
      %3436 = vmatprep.subr.bf16.mxu0 0
      %3437 = vmatpush1.bf16.msra.mxu0 0
      %3438 = vmatprep.subr.bf16.mxu0 0
      %3439 = vmatpush1.bf16.msra.mxu0 0
      %3440 = vmatprep.mubr.bf16.mxu0 0
      %3441 = vmatmul.mubr.bf16.gmra.mrb[0].mxu0 %v3397
      %v3442 = vpop.f32.mrb[0].mxu0
      %v3443 = vadd.f32 0.0, %v3442
      %v3444 = vpop.f32.mrb[0].mxu0
      %v3445 = vadd.f32 0.0, %v3444
      %v3446 = vpop.f32.mrb[0].mxu0
      %v3447 = vadd.f32 0.0, %v3446
      %v3448 = vpop.f32.mrb[0].mxu0
      %v3449 = vadd.f32 0.0, %v3448
      %3450 = vmatprep.mubr.bf16.mxu0 0
      %3451 = vmatmul.mubr.bf16.gmra.mrb[0].mxu0 %v3400
      %v3452 = vpop.f32.mrb[0].mxu0
      %v3453 = vadd.f32 0.0, %v3452
      %v3454 = vpop.f32.mrb[0].mxu0
      %v3455 = vadd.f32 0.0, %v3454
      %v3456 = vpop.f32.mrb[0].mxu0
      %v3457 = vadd.f32 0.0, %v3456
      %v3458 = vpop.f32.mrb[0].mxu0
      %v3459 = vadd.f32 0.0, %v3458
      %3460 = vmatprep.mubr.bf16.mxu0 0
      %3461 = vmatmul.mubr.bf16.gmra.mrb[0].mxu0 %v3403
      %v3462 = vpop.f32.mrb[0].mxu0
      %v3463 = vadd.f32 0.0, %v3462
      %v3464 = vpop.f32.mrb[0].mxu0
      %v3465 = vadd.f32 0.0, %v3464
      %v3466 = vpop.f32.mrb[0].mxu0
      %v3467 = vadd.f32 0.0, %v3466
      %v3468 = vpop.f32.mrb[0].mxu0
      %v3469 = vadd.f32 0.0, %v3468
      %3470 = vmatprep.mubr.bf16.mxu0 0
      %3471 = vmatmul.mubr.bf16.gmra.mrb[0].mxu0 %v3406
      %v3472 = vpop.f32.mrb[0].mxu0
      %v3473 = vadd.f32 0.0, %v3472
      %v3474 = vpop.f32.mrb[0].mxu0
      %v3475 = vadd.f32 0.0, %v3474
      %v3476 = vpop.f32.mrb[0].mxu0
      %v3477 = vadd.f32 0.0, %v3476
      %v3478 = vpop.f32.mrb[0].mxu0
      %v3479 = vadd.f32 0.0, %v3478
      %3480 = vdwg.mxu0
      %v3481 = vadd.f32 %v3351, %v3443
      %v3482 = vadd.f32 %v3352, %v3445
      %v3483 = vadd.f32 %v3353, %v3447
      %v3484 = vadd.f32 %v3354, %v3449
      %v3485 = vadd.f32 %v3355, %v3453
      %v3486 = vadd.f32 %v3356, %v3455
      %v3487 = vadd.f32 %v3357, %v3457
      %v3488 = vadd.f32 %v3358, %v3459
      %v3489 = vadd.f32 %v3359, %v3463
      %v3490 = vadd.f32 %v3360, %v3465
      %v3491 = vadd.f32 %v3361, %v3467
      %v3492 = vadd.f32 %v3362, %v3469
      %v3493 = vadd.f32 %v3363, %v3473
      %v3494 = vadd.f32 %v3364, %v3475
      %v3495 = vadd.f32 %v3365, %v3477
      %v3496 = vadd.f32 %v3366, %v3479
      %s3497 = scalar_lea.vmem %s4, 160
      %v3498 = vld [vmem:[%s3497] sm:$0xf]
      %v3499 = vld [vmem:[%s3497 + $0x4] sm:$0xf]
      %v3500 = vld [vmem:[%s3497 + $0x8] sm:$0xf]
      %v3501 = vld [vmem:[%s3497 + $0xc] sm:$0xf]
      %v3502 = vld [vmem:[%s3497 + $0x10] sm:$0xf]
      %v3503 = vld [vmem:[%s3497 + $0x14] sm:$0xf]
      %v3504 = vld [vmem:[%s3497 + $0x18] sm:$0xf]
      %v3505 = vld [vmem:[%s3497 + $0x1c] sm:$0xf]
      %v3514 = vunpack.c.l.b16 %v3498
      %v3515 = vunpack.c.l.b16 %v3499
      %v3516 = vunpack.c.l.b16 %v3500
      %v3517 = vunpack.c.l.b16 %v3501
      %v3518 = vunpack.c.l.b16 %v3502
      %v3519 = vunpack.c.l.b16 %v3503
      %v3520 = vunpack.c.l.b16 %v3504
      %v3521 = vunpack.c.l.b16 %v3505
      %v3522 = vpack.c.b16 %v3515, %v3514
      %v3523 = vpack.c.b16 %v3517, %v3516
      %v3524 = vpack.c.b16 %v3519, %v3518
      %v3525 = vpack.c.b16 %v3521, %v3520
      %v3527 = vsel %vm2916, %v3522, 0
      %v3530 = vsel %vm2916, %v3523, 0
      %v3533 = vsel %vm2916, %v3524, 0
      %v3536 = vsel %vm2916, %v3525, 0
      %3538 = vmatprep.subr.bf16.mxu0 %v2854
      %3539 = vmatpush1.bf16.msra.mxu0 %v2853
      %3540 = vmatprep.subr.bf16.mxu0 %v2872
      %3541 = vmatpush1.bf16.msra.mxu0 %v2871
      %3542 = vmatprep.subr.bf16.mxu0 0
      %3543 = vmatpush1.bf16.msra.mxu0 0
      %3544 = vmatprep.subr.bf16.mxu0 0
      %3545 = vmatpush1.bf16.msra.mxu0 0
      %3546 = vmatprep.subr.bf16.mxu0 0
      %3547 = vmatpush1.bf16.msra.mxu0 0
      %3548 = vmatprep.subr.bf16.mxu0 0
      %3549 = vmatpush1.bf16.msra.mxu0 0
      %3550 = vmatprep.subr.bf16.mxu0 0
      %3551 = vmatpush1.bf16.msra.mxu0 0
      %3552 = vmatprep.subr.bf16.mxu0 0
      %3553 = vmatpush1.bf16.msra.mxu0 0
      %3554 = vmatprep.subr.bf16.mxu0 0
      %3555 = vmatpush1.bf16.msra.mxu0 0
      %3556 = vmatprep.subr.bf16.mxu0 0
      %3557 = vmatpush1.bf16.msra.mxu0 0
      %3558 = vmatprep.subr.bf16.mxu0 0
      %3559 = vmatpush1.bf16.msra.mxu0 0
      %3560 = vmatprep.subr.bf16.mxu0 0
      %3561 = vmatpush1.bf16.msra.mxu0 0
      %3562 = vmatprep.subr.bf16.mxu0 0
      %3563 = vmatpush1.bf16.msra.mxu0 0
      %3564 = vmatprep.subr.bf16.mxu0 0
      %3565 = vmatpush1.bf16.msra.mxu0 0
      %3566 = vmatprep.subr.bf16.mxu0 0
      %3567 = vmatpush1.bf16.msra.mxu0 0
      %3568 = vmatprep.subr.bf16.mxu0 0
      %3569 = vmatpush1.bf16.msra.mxu0 0
      %3570 = vmatprep.mubr.bf16.mxu0 0
      %3571 = vmatmul.mubr.bf16.gmra.mrb[0].mxu0 %v3527
      %v3572 = vpop.f32.mrb[0].mxu0
      %v3573 = vadd.f32 0.0, %v3572
      %v3574 = vpop.f32.mrb[0].mxu0
      %v3575 = vadd.f32 0.0, %v3574
      %v3576 = vpop.f32.mrb[0].mxu0
      %v3577 = vadd.f32 0.0, %v3576
      %v3578 = vpop.f32.mrb[0].mxu0
      %v3579 = vadd.f32 0.0, %v3578
      %3580 = vmatprep.mubr.bf16.mxu0 0
      %3581 = vmatmul.mubr.bf16.gmra.mrb[0].mxu0 %v3530
      %v3582 = vpop.f32.mrb[0].mxu0
      %v3583 = vadd.f32 0.0, %v3582
      %v3584 = vpop.f32.mrb[0].mxu0
      %v3585 = vadd.f32 0.0, %v3584
      %v3586 = vpop.f32.mrb[0].mxu0
      %v3587 = vadd.f32 0.0, %v3586
      %v3588 = vpop.f32.mrb[0].mxu0
      %v3589 = vadd.f32 0.0, %v3588
      %3590 = vmatprep.mubr.bf16.mxu0 0
      %3591 = vmatmul.mubr.bf16.gmra.mrb[0].mxu0 %v3533
      %v3592 = vpop.f32.mrb[0].mxu0
      %v3593 = vadd.f32 0.0, %v3592
      %v3594 = vpop.f32.mrb[0].mxu0
      %v3595 = vadd.f32 0.0, %v3594
      %v3596 = vpop.f32.mrb[0].mxu0
      %v3597 = vadd.f32 0.0, %v3596
      %v3598 = vpop.f32.mrb[0].mxu0
      %v3599 = vadd.f32 0.0, %v3598
      %3600 = vmatprep.mubr.bf16.mxu0 0
      %3601 = vmatmul.mubr.bf16.gmra.mrb[0].mxu0 %v3536
      %v3602 = vpop.f32.mrb[0].mxu0
      %v3603 = vadd.f32 0.0, %v3602
      %v3604 = vpop.f32.mrb[0].mxu0
      %v3605 = vadd.f32 0.0, %v3604
      %v3606 = vpop.f32.mrb[0].mxu0
      %v3607 = vadd.f32 0.0, %v3606
      %v3608 = vpop.f32.mrb[0].mxu0
      %v3609 = vadd.f32 0.0, %v3608
      %3610 = vdwg.mxu0
      %v3611 = vadd.f32 %v3481, %v3573
      %v3612 = vadd.f32 %v3482, %v3575
      %v3613 = vadd.f32 %v3483, %v3577
      %v3614 = vadd.f32 %v3484, %v3579
      %v3615 = vadd.f32 %v3485, %v3583
      %v3616 = vadd.f32 %v3486, %v3585
      %v3617 = vadd.f32 %v3487, %v3587
      %v3618 = vadd.f32 %v3488, %v3589
      %v3619 = vadd.f32 %v3489, %v3593
      %v3620 = vadd.f32 %v3490, %v3595
      %v3621 = vadd.f32 %v3491, %v3597
      %v3622 = vadd.f32 %v3492, %v3599
      %v3623 = vadd.f32 %v3493, %v3603
      %v3624 = vadd.f32 %v3494, %v3605
      %v3625 = vadd.f32 %v3495, %v3607
      %v3626 = vadd.f32 %v3496, %v3609
      %s3627 = scalar_lea.vmem %s4, 192
      %v3628 = vld [vmem:[%s3627] sm:$0xf]
      %v3629 = vld [vmem:[%s3627 + $0x4] sm:$0xf]
      %v3630 = vld [vmem:[%s3627 + $0x8] sm:$0xf]
      %v3631 = vld [vmem:[%s3627 + $0xc] sm:$0xf]
      %v3632 = vld [vmem:[%s3627 + $0x10] sm:$0xf]
      %v3633 = vld [vmem:[%s3627 + $0x14] sm:$0xf]
      %v3634 = vld [vmem:[%s3627 + $0x18] sm:$0xf]
      %v3635 = vld [vmem:[%s3627 + $0x1c] sm:$0xf]
      %v3644 = vunpack.c.l.b16 %v3628
      %v3645 = vunpack.c.l.b16 %v3629
      %v3646 = vunpack.c.l.b16 %v3630
      %v3647 = vunpack.c.l.b16 %v3631
      %v3648 = vunpack.c.l.b16 %v3632
      %v3649 = vunpack.c.l.b16 %v3633
      %v3650 = vunpack.c.l.b16 %v3634
      %v3651 = vunpack.c.l.b16 %v3635
      %v3652 = vpack.c.b16 %v3645, %v3644
      %v3653 = vpack.c.b16 %v3647, %v3646
      %v3654 = vpack.c.b16 %v3649, %v3648
      %v3655 = vpack.c.b16 %v3651, %v3650
      %v3657 = vsel %vm2916, %v3652, 0
      %v3660 = vsel %vm2916, %v3653, 0
      %v3663 = vsel %vm2916, %v3654, 0
      %v3666 = vsel %vm2916, %v3655, 0
      %3668 = vmatprep.subr.bf16.mxu0 %v2856
      %3669 = vmatpush1.bf16.msra.mxu0 %v2855
      %3670 = vmatprep.subr.bf16.mxu0 %v2874
      %3671 = vmatpush1.bf16.msra.mxu0 %v2873
      %3672 = vmatprep.subr.bf16.mxu0 0
      %3673 = vmatpush1.bf16.msra.mxu0 0
      %3674 = vmatprep.subr.bf16.mxu0 0
      %3675 = vmatpush1.bf16.msra.mxu0 0
      %3676 = vmatprep.subr.bf16.mxu0 0
      %3677 = vmatpush1.bf16.msra.mxu0 0
      %3678 = vmatprep.subr.bf16.mxu0 0
      %3679 = vmatpush1.bf16.msra.mxu0 0
      %3680 = vmatprep.subr.bf16.mxu0 0
      %3681 = vmatpush1.bf16.msra.mxu0 0
      %3682 = vmatprep.subr.bf16.mxu0 0
      %3683 = vmatpush1.bf16.msra.mxu0 0
      %3684 = vmatprep.subr.bf16.mxu0 0
      %3685 = vmatpush1.bf16.msra.mxu0 0
      %3686 = vmatprep.subr.bf16.mxu0 0
      %3687 = vmatpush1.bf16.msra.mxu0 0
      %3688 = vmatprep.subr.bf16.mxu0 0
      %3689 = vmatpush1.bf16.msra.mxu0 0
      %3690 = vmatprep.subr.bf16.mxu0 0
      %3691 = vmatpush1.bf16.msra.mxu0 0
      %3692 = vmatprep.subr.bf16.mxu0 0
      %3693 = vmatpush1.bf16.msra.mxu0 0
      %3694 = vmatprep.subr.bf16.mxu0 0
      %3695 = vmatpush1.bf16.msra.mxu0 0
      %3696 = vmatprep.subr.bf16.mxu0 0
      %3697 = vmatpush1.bf16.msra.mxu0 0
      %3698 = vmatprep.subr.bf16.mxu0 0
      %3699 = vmatpush1.bf16.msra.mxu0 0
      %3700 = vmatprep.mubr.bf16.mxu0 0
      %3701 = vmatmul.mubr.bf16.gmra.mrb[0].mxu0 %v3657
      %v3702 = vpop.f32.mrb[0].mxu0
      %v3703 = vadd.f32 0.0, %v3702
      %v3704 = vpop.f32.mrb[0].mxu0
      %v3705 = vadd.f32 0.0, %v3704
      %v3706 = vpop.f32.mrb[0].mxu0
      %v3707 = vadd.f32 0.0, %v3706
      %v3708 = vpop.f32.mrb[0].mxu0
      %v3709 = vadd.f32 0.0, %v3708
      %3710 = vmatprep.mubr.bf16.mxu0 0
      %3711 = vmatmul.mubr.bf16.gmra.mrb[0].mxu0 %v3660
      %v3712 = vpop.f32.mrb[0].mxu0
      %v3713 = vadd.f32 0.0, %v3712
      %v3714 = vpop.f32.mrb[0].mxu0
      %v3715 = vadd.f32 0.0, %v3714
      %v3716 = vpop.f32.mrb[0].mxu0
      %v3717 = vadd.f32 0.0, %v3716
      %v3718 = vpop.f32.mrb[0].mxu0
      %v3719 = vadd.f32 0.0, %v3718
      %3720 = vmatprep.mubr.bf16.mxu0 0
      %3721 = vmatmul.mubr.bf16.gmra.mrb[0].mxu0 %v3663
      %v3722 = vpop.f32.mrb[0].mxu0
      %v3723 = vadd.f32 0.0, %v3722
      %v3724 = vpop.f32.mrb[0].mxu0
      %v3725 = vadd.f32 0.0, %v3724
      %v3726 = vpop.f32.mrb[0].mxu0
      %v3727 = vadd.f32 0.0, %v3726
      %v3728 = vpop.f32.mrb[0].mxu0
      %v3729 = vadd.f32 0.0, %v3728
      %3730 = vmatprep.mubr.bf16.mxu0 0
      %3731 = vmatmul.mubr.bf16.gmra.mrb[0].mxu0 %v3666
      %v3732 = vpop.f32.mrb[0].mxu0
      %v3733 = vadd.f32 0.0, %v3732
      %v3734 = vpop.f32.mrb[0].mxu0
      %v3735 = vadd.f32 0.0, %v3734
      %v3736 = vpop.f32.mrb[0].mxu0
      %v3737 = vadd.f32 0.0, %v3736
      %v3738 = vpop.f32.mrb[0].mxu0
      %v3739 = vadd.f32 0.0, %v3738
      %3740 = vdwg.mxu0
      %v3741 = vadd.f32 %v3611, %v3703
      %v3742 = vadd.f32 %v3612, %v3705
      %v3743 = vadd.f32 %v3613, %v3707
      %v3744 = vadd.f32 %v3614, %v3709
      %v3745 = vadd.f32 %v3615, %v3713
      %v3746 = vadd.f32 %v3616, %v3715
      %v3747 = vadd.f32 %v3617, %v3717
      %v3748 = vadd.f32 %v3618, %v3719
      %v3749 = vadd.f32 %v3619, %v3723
      %v3750 = vadd.f32 %v3620, %v3725
      %v3751 = vadd.f32 %v3621, %v3727
      %v3752 = vadd.f32 %v3622, %v3729
      %v3753 = vadd.f32 %v3623, %v3733
      %v3754 = vadd.f32 %v3624, %v3735
      %v3755 = vadd.f32 %v3625, %v3737
      %v3756 = vadd.f32 %v3626, %v3739
      %s3757 = scalar_lea.vmem %s4, 224
      %v3758 = vld [vmem:[%s3757] sm:$0xf]
      %v3759 = vld [vmem:[%s3757 + $0x4] sm:$0xf]
      %v3760 = vld [vmem:[%s3757 + $0x8] sm:$0xf]
      %v3761 = vld [vmem:[%s3757 + $0xc] sm:$0xf]
      %v3762 = vld [vmem:[%s3757 + $0x10] sm:$0xf]
      %v3763 = vld [vmem:[%s3757 + $0x14] sm:$0xf]
      %v3764 = vld [vmem:[%s3757 + $0x18] sm:$0xf]
      %v3765 = vld [vmem:[%s3757 + $0x1c] sm:$0xf]
      %v3774 = vunpack.c.l.b16 %v3758
      %v3775 = vunpack.c.l.b16 %v3759
      %v3776 = vunpack.c.l.b16 %v3760
      %v3777 = vunpack.c.l.b16 %v3761
      %v3778 = vunpack.c.l.b16 %v3762
      %v3779 = vunpack.c.l.b16 %v3763
      %v3780 = vunpack.c.l.b16 %v3764
      %v3781 = vunpack.c.l.b16 %v3765
      %v3782 = vpack.c.b16 %v3775, %v3774
      %v3783 = vpack.c.b16 %v3777, %v3776
      %v3784 = vpack.c.b16 %v3779, %v3778
      %v3785 = vpack.c.b16 %v3781, %v3780
      %v3787 = vsel %vm2916, %v3782, 0
      %v3790 = vsel %vm2916, %v3783, 0
      %v3793 = vsel %vm2916, %v3784, 0
      %v3796 = vsel %vm2916, %v3785, 0
      %3798 = vmatprep.subr.bf16.mxu0 %v2858
      %3799 = vmatpush1.bf16.msra.mxu0 %v2857
      %3800 = vmatprep.subr.bf16.mxu0 %v2876
      %3801 = vmatpush1.bf16.msra.mxu0 %v2875
      %3802 = vmatprep.subr.bf16.mxu0 0
      %3803 = vmatpush1.bf16.msra.mxu0 0
      %3804 = vmatprep.subr.bf16.mxu0 0
      %3805 = vmatpush1.bf16.msra.mxu0 0
      %3806 = vmatprep.subr.bf16.mxu0 0
      %3807 = vmatpush1.bf16.msra.mxu0 0
      %3808 = vmatprep.subr.bf16.mxu0 0
      %3809 = vmatpush1.bf16.msra.mxu0 0
      %3810 = vmatprep.subr.bf16.mxu0 0
      %3811 = vmatpush1.bf16.msra.mxu0 0
      %3812 = vmatprep.subr.bf16.mxu0 0
      %3813 = vmatpush1.bf16.msra.mxu0 0
      %3814 = vmatprep.subr.bf16.mxu0 0
      %3815 = vmatpush1.bf16.msra.mxu0 0
      %3816 = vmatprep.subr.bf16.mxu0 0
      %3817 = vmatpush1.bf16.msra.mxu0 0
      %3818 = vmatprep.subr.bf16.mxu0 0
      %3819 = vmatpush1.bf16.msra.mxu0 0
      %3820 = vmatprep.subr.bf16.mxu0 0
      %3821 = vmatpush1.bf16.msra.mxu0 0
      %3822 = vmatprep.subr.bf16.mxu0 0
      %3823 = vmatpush1.bf16.msra.mxu0 0
      %3824 = vmatprep.subr.bf16.mxu0 0
      %3825 = vmatpush1.bf16.msra.mxu0 0
      %3826 = vmatprep.subr.bf16.mxu0 0
      %3827 = vmatpush1.bf16.msra.mxu0 0
      %3828 = vmatprep.subr.bf16.mxu0 0
      %3829 = vmatpush1.bf16.msra.mxu0 0
      %3830 = vmatprep.mubr.bf16.mxu0 0
      %3831 = vmatmul.mubr.bf16.gmra.mrb[0].mxu0 %v3787
      %v3832 = vpop.f32.mrb[0].mxu0
      %v3833 = vadd.f32 0.0, %v3832
      %v3834 = vpop.f32.mrb[0].mxu0
      %v3835 = vadd.f32 0.0, %v3834
      %v3836 = vpop.f32.mrb[0].mxu0
      %v3837 = vadd.f32 0.0, %v3836
      %v3838 = vpop.f32.mrb[0].mxu0
      %v3839 = vadd.f32 0.0, %v3838
      %3840 = vmatprep.mubr.bf16.mxu0 0
      %3841 = vmatmul.mubr.bf16.gmra.mrb[0].mxu0 %v3790
      %v3842 = vpop.f32.mrb[0].mxu0
      %v3843 = vadd.f32 0.0, %v3842
      %v3844 = vpop.f32.mrb[0].mxu0
      %v3845 = vadd.f32 0.0, %v3844
      %v3846 = vpop.f32.mrb[0].mxu0
      %v3847 = vadd.f32 0.0, %v3846
      %v3848 = vpop.f32.mrb[0].mxu0
      %v3849 = vadd.f32 0.0, %v3848
      %3850 = vmatprep.mubr.bf16.mxu0 0
      %3851 = vmatmul.mubr.bf16.gmra.mrb[0].mxu0 %v3793
      %v3852 = vpop.f32.mrb[0].mxu0
      %v3853 = vadd.f32 0.0, %v3852
      %v3854 = vpop.f32.mrb[0].mxu0
      %v3855 = vadd.f32 0.0, %v3854
      %v3856 = vpop.f32.mrb[0].mxu0
      %v3857 = vadd.f32 0.0, %v3856
      %v3858 = vpop.f32.mrb[0].mxu0
      %v3859 = vadd.f32 0.0, %v3858
      %3860 = vmatprep.mubr.bf16.mxu0 0
      %3861 = vmatmul.mubr.bf16.gmra.mrb[0].mxu0 %v3796
      %v3862 = vpop.f32.mrb[0].mxu0
      %v3863 = vadd.f32 0.0, %v3862
      %v3864 = vpop.f32.mrb[0].mxu0
      %v3865 = vadd.f32 0.0, %v3864
      %v3866 = vpop.f32.mrb[0].mxu0
      %v3867 = vadd.f32 0.0, %v3866
      %v3868 = vpop.f32.mrb[0].mxu0
      %v3869 = vadd.f32 0.0, %v3868
      %3870 = vdwg.mxu0
      %v3871 = vadd.f32 %v3741, %v3833
      %v3872 = vadd.f32 %v3742, %v3835
      %v3873 = vadd.f32 %v3743, %v3837
      %v3874 = vadd.f32 %v3744, %v3839
      %v3875 = vadd.f32 %v3745, %v3843
      %v3876 = vadd.f32 %v3746, %v3845
      %v3877 = vadd.f32 %v3747, %v3847
      %v3878 = vadd.f32 %v3748, %v3849
      %v3879 = vadd.f32 %v3749, %v3853
      %v3880 = vadd.f32 %v3750, %v3855
      %v3881 = vadd.f32 %v3751, %v3857
      %v3882 = vadd.f32 %v3752, %v3859
      %v3883 = vadd.f32 %v3753, %v3863
      %v3884 = vadd.f32 %v3754, %v3865
      %v3885 = vadd.f32 %v3755, %v3867
      %v3886 = vadd.f32 %v3756, %v3869
      %s3887 = scalar_lea.vmem %s4, 256
      %v3888 = vld [vmem:[%s3887] sm:$0xf]
      %v3889 = vld [vmem:[%s3887 + $0x4] sm:$0xf]
      %v3890 = vld [vmem:[%s3887 + $0x8] sm:$0xf]
      %v3891 = vld [vmem:[%s3887 + $0xc] sm:$0xf]
      %v3892 = vld [vmem:[%s3887 + $0x10] sm:$0xf]
      %v3893 = vld [vmem:[%s3887 + $0x14] sm:$0xf]
      %v3894 = vld [vmem:[%s3887 + $0x18] sm:$0xf]
      %v3895 = vld [vmem:[%s3887 + $0x1c] sm:$0xf]
      %v3904 = vunpack.c.l.b16 %v3888
      %v3905 = vunpack.c.l.b16 %v3889
      %v3906 = vunpack.c.l.b16 %v3890
      %v3907 = vunpack.c.l.b16 %v3891
      %v3908 = vunpack.c.l.b16 %v3892
      %v3909 = vunpack.c.l.b16 %v3893
      %v3910 = vunpack.c.l.b16 %v3894
      %v3911 = vunpack.c.l.b16 %v3895
      %v3912 = vpack.c.b16 %v3905, %v3904
      %v3913 = vpack.c.b16 %v3907, %v3906
      %v3914 = vpack.c.b16 %v3909, %v3908
      %v3915 = vpack.c.b16 %v3911, %v3910
      %v3917 = vsel %vm2916, %v3912, 0
      %v3920 = vsel %vm2916, %v3913, 0
      %v3923 = vsel %vm2916, %v3914, 0
      %v3926 = vsel %vm2916, %v3915, 0
      %3928 = vmatprep.subr.bf16.mxu0 %v2860
      %3929 = vmatpush1.bf16.msra.mxu0 %v2859
      %3930 = vmatprep.subr.bf16.mxu0 %v2878
      %3931 = vmatpush1.bf16.msra.mxu0 %v2877
      %3932 = vmatprep.subr.bf16.mxu0 0
      %3933 = vmatpush1.bf16.msra.mxu0 0
      %3934 = vmatprep.subr.bf16.mxu0 0
      %3935 = vmatpush1.bf16.msra.mxu0 0
      %3936 = vmatprep.subr.bf16.mxu0 0
      %3937 = vmatpush1.bf16.msra.mxu0 0
      %3938 = vmatprep.subr.bf16.mxu0 0
      %3939 = vmatpush1.bf16.msra.mxu0 0
      %3940 = vmatprep.subr.bf16.mxu0 0
      %3941 = vmatpush1.bf16.msra.mxu0 0
      %3942 = vmatprep.subr.bf16.mxu0 0
      %3943 = vmatpush1.bf16.msra.mxu0 0
      %3944 = vmatprep.subr.bf16.mxu0 0
      %3945 = vmatpush1.bf16.msra.mxu0 0
      %3946 = vmatprep.subr.bf16.mxu0 0
      %3947 = vmatpush1.bf16.msra.mxu0 0
      %3948 = vmatprep.subr.bf16.mxu0 0
      %3949 = vmatpush1.bf16.msra.mxu0 0
      %3950 = vmatprep.subr.bf16.mxu0 0
      %3951 = vmatpush1.bf16.msra.mxu0 0
      %3952 = vmatprep.subr.bf16.mxu0 0
      %3953 = vmatpush1.bf16.msra.mxu0 0
      %3954 = vmatprep.subr.bf16.mxu0 0
      %3955 = vmatpush1.bf16.msra.mxu0 0
      %3956 = vmatprep.subr.bf16.mxu0 0
      %3957 = vmatpush1.bf16.msra.mxu0 0
      %3958 = vmatprep.subr.bf16.mxu0 0
      %3959 = vmatpush1.bf16.msra.mxu0 0
      %3960 = vmatprep.mubr.bf16.mxu0 0
      %3961 = vmatmul.mubr.bf16.gmra.mrb[0].mxu0 %v3917
      %v3962 = vpop.f32.mrb[0].mxu0
      %v3963 = vadd.f32 0.0, %v3962
      %v3964 = vpop.f32.mrb[0].mxu0
      %v3965 = vadd.f32 0.0, %v3964
      %v3966 = vpop.f32.mrb[0].mxu0
      %v3967 = vadd.f32 0.0, %v3966
      %v3968 = vpop.f32.mrb[0].mxu0
      %v3969 = vadd.f32 0.0, %v3968
      %3970 = vmatprep.mubr.bf16.mxu0 0
      %3971 = vmatmul.mubr.bf16.gmra.mrb[0].mxu0 %v3920
      %v3972 = vpop.f32.mrb[0].mxu0
      %v3973 = vadd.f32 0.0, %v3972
      %v3974 = vpop.f32.mrb[0].mxu0
      %v3975 = vadd.f32 0.0, %v3974
      %v3976 = vpop.f32.mrb[0].mxu0
      %v3977 = vadd.f32 0.0, %v3976
      %v3978 = vpop.f32.mrb[0].mxu0
      %v3979 = vadd.f32 0.0, %v3978
      %3980 = vmatprep.mubr.bf16.mxu0 0
      %3981 = vmatmul.mubr.bf16.gmra.mrb[0].mxu0 %v3923
      %v3982 = vpop.f32.mrb[0].mxu0
      %v3983 = vadd.f32 0.0, %v3982
      %v3984 = vpop.f32.mrb[0].mxu0
      %v3985 = vadd.f32 0.0, %v3984
      %v3986 = vpop.f32.mrb[0].mxu0
      %v3987 = vadd.f32 0.0, %v3986
      %v3988 = vpop.f32.mrb[0].mxu0
      %v3989 = vadd.f32 0.0, %v3988
      %3990 = vmatprep.mubr.bf16.mxu0 0
      %3991 = vmatmul.mubr.bf16.gmra.mrb[0].mxu0 %v3926
      %v3992 = vpop.f32.mrb[0].mxu0
      %v3993 = vadd.f32 0.0, %v3992
      %v3994 = vpop.f32.mrb[0].mxu0
      %v3995 = vadd.f32 0.0, %v3994
      %v3996 = vpop.f32.mrb[0].mxu0
      %v3997 = vadd.f32 0.0, %v3996
      %v3998 = vpop.f32.mrb[0].mxu0
      %v3999 = vadd.f32 0.0, %v3998
      %4000 = vdwg.mxu0
      %v4001 = vadd.f32 %v3871, %v3963
      %v4002 = vadd.f32 %v3872, %v3965
      %v4003 = vadd.f32 %v3873, %v3967
      %v4004 = vadd.f32 %v3874, %v3969
      %v4005 = vadd.f32 %v3875, %v3973
      %v4006 = vadd.f32 %v3876, %v3975
      %v4007 = vadd.f32 %v3877, %v3977
      %v4008 = vadd.f32 %v3878, %v3979
      %v4009 = vadd.f32 %v3879, %v3983
      %v4010 = vadd.f32 %v3880, %v3985
      %v4011 = vadd.f32 %v3881, %v3987
      %v4012 = vadd.f32 %v3882, %v3989
      %v4013 = vadd.f32 %v3883, %v3993
      %v4014 = vadd.f32 %v3884, %v3995
      %v4015 = vadd.f32 %v3885, %v3997
      %v4016 = vadd.f32 %v3886, %v3999
      %v4017 = vld [vmem:[%s5] sm:$0xff]
      %v4018 = vld [vmem:[%s5 + $0x8] sm:$0xff]
      %v4019 = vld [vmem:[%s5 + $0x10] sm:$0xff]
      %v4020 = vld [vmem:[%s5 + $0x18] sm:$0xff]
      %v4021 = vld [vmem:[%s5 + $0x20] sm:$0xff]
      %v4022 = vld [vmem:[%s5 + $0x28] sm:$0xff]
      %v4023 = vld [vmem:[%s5 + $0x30] sm:$0xff]
      %v4024 = vld [vmem:[%s5 + $0x38] sm:$0xff]
      %4026 = vset.pattern.permute.xlu0 0
      %4027 = vperm.xlu0 %4026, %v4017
      %v4028 = vpop.permute.xlu0 %4027
      %4031 = vset.pattern.permute.xlu0 0
      %4032 = vperm.xlu0 %4031, %v4018
      %v4033 = vpop.permute.xlu0 %4032
      %4036 = vset.pattern.permute.xlu0 0
      %4037 = vperm.xlu0 %4036, %v4019
      %v4038 = vpop.permute.xlu0 %4037
      %4041 = vset.pattern.permute.xlu0 0
      %4042 = vperm.xlu0 %4041, %v4020
      %v4043 = vpop.permute.xlu0 %4042
      %4046 = vset.pattern.permute.xlu0 0
      %4047 = vperm.xlu0 %4046, %v4021
      %v4048 = vpop.permute.xlu0 %4047
      %4051 = vset.pattern.permute.xlu0 0
      %4052 = vperm.xlu0 %4051, %v4022
      %v4053 = vpop.permute.xlu0 %4052
      %4056 = vset.pattern.permute.xlu0 0
      %4057 = vperm.xlu0 %4056, %v4023
      %v4058 = vpop.permute.xlu0 %4057
      %4061 = vset.pattern.permute.xlu0 0
      %4062 = vperm.xlu0 %4061, %v4024
      %v4063 = vpop.permute.xlu0 %4062
      %v4065 = vadd.f32 %v4001, %v4028
      %v4066 = vadd.f32 %v4002, %v4028
      %v4067 = vadd.f32 %v4003, %v4033
      %v4068 = vadd.f32 %v4004, %v4033
      %v4069 = vadd.f32 %v4005, %v4038
      %v4070 = vadd.f32 %v4006, %v4038
      %v4071 = vadd.f32 %v4007, %v4043
      %v4072 = vadd.f32 %v4008, %v4043
      %v4073 = vadd.f32 %v4009, %v4048
      %v4074 = vadd.f32 %v4010, %v4048
      %v4075 = vadd.f32 %v4011, %v4053
      %v4076 = vadd.f32 %v4012, %v4053
      %v4077 = vadd.f32 %v4013, %v4058
      %v4078 = vadd.f32 %v4014, %v4058
      %v4079 = vadd.f32 %v4015, %v4063
      %v4080 = vadd.f32 %v4016, %v4063
      %v4081 = vmax.f32 %v4065, 0.0
      %v4082 = vmax.f32 %v4066, 0.0
      %v4083 = vmax.f32 %v4067, 0.0
      %v4084 = vmax.f32 %v4068, 0.0
      %v4085 = vmax.f32 %v4069, 0.0
      %v4086 = vmax.f32 %v4070, 0.0
      %v4087 = vmax.f32 %v4071, 0.0
      %v4088 = vmax.f32 %v4072, 0.0
      %v4089 = vmax.f32 %v4073, 0.0
      %v4090 = vmax.f32 %v4074, 0.0
      %v4091 = vmax.f32 %v4075, 0.0
      %v4092 = vmax.f32 %v4076, 0.0
      %v4093 = vmax.f32 %v4077, 0.0
      %v4094 = vmax.f32 %v4078, 0.0
      %v4095 = vmax.f32 %v4079, 0.0
      %v4096 = vmax.f32 %v4080, 0.0
      %4105 = vrot.lane.b32.xlu0 %v4081, 64
      %v4106 = vpop.permute.xlu0 %4105
      %4107 = vrot.lane.b32.xlu0 %v4083, 64
      %v4108 = vpop.permute.xlu0 %4107
      %4109 = vrot.lane.b32.xlu0 %v4085, 64
      %v4110 = vpop.permute.xlu0 %4109
      %4111 = vrot.lane.b32.xlu0 %v4087, 64
      %v4112 = vpop.permute.xlu0 %4111
      %4113 = vrot.lane.b32.xlu0 %v4089, 64
      %v4114 = vpop.permute.xlu0 %4113
      %4115 = vrot.lane.b32.xlu0 %v4091, 64
      %v4116 = vpop.permute.xlu0 %4115
      %4117 = vrot.lane.b32.xlu0 %v4093, 64
      %v4118 = vpop.permute.xlu0 %4117
      %4119 = vrot.lane.b32.xlu0 %v4095, 64
      %v4120 = vpop.permute.xlu0 %4119
      %v4129 = vmax.f32 %v4081, %v4106
      %v4130 = vmax.f32 %v4083, %v4108
      %v4131 = vmax.f32 %v4085, %v4110
      %v4132 = vmax.f32 %v4087, %v4112
      %v4133 = vmax.f32 %v4089, %v4114
      %v4134 = vmax.f32 %v4091, %v4116
      %v4135 = vmax.f32 %v4093, %v4118
      %v4136 = vmax.f32 %v4095, %v4120
      %4145 = vrot.lane.b32.xlu0 %v4082, 64
      %v4146 = vpop.permute.xlu0 %4145
      %4147 = vrot.lane.b32.xlu0 %v4084, 64
      %v4148 = vpop.permute.xlu0 %4147
      %4149 = vrot.lane.b32.xlu0 %v4086, 64
      %v4150 = vpop.permute.xlu0 %4149
      %4151 = vrot.lane.b32.xlu0 %v4088, 64
      %v4152 = vpop.permute.xlu0 %4151
      %4153 = vrot.lane.b32.xlu0 %v4090, 64
      %v4154 = vpop.permute.xlu0 %4153
      %4155 = vrot.lane.b32.xlu0 %v4092, 64
      %v4156 = vpop.permute.xlu0 %4155
      %4157 = vrot.lane.b32.xlu0 %v4094, 64
      %v4158 = vpop.permute.xlu0 %4157
      %4159 = vrot.lane.b32.xlu0 %v4096, 64
      %v4160 = vpop.permute.xlu0 %4159
      %v4169 = vmax.f32 %v4082, %v4146
      %v4170 = vmax.f32 %v4084, %v4148
      %v4171 = vmax.f32 %v4086, %v4150
      %v4172 = vmax.f32 %v4088, %v4152
      %v4173 = vmax.f32 %v4090, %v4154
      %v4174 = vmax.f32 %v4092, %v4156
      %v4175 = vmax.f32 %v4094, %v4158
      %v4176 = vmax.f32 %v4096, %v4160
      %v4177 = vmax.f32 %v4129, %v4169
      %v4178 = vmax.f32 %v4130, %v4170
      %v4179 = vmax.f32 %v4131, %v4171
      %v4180 = vmax.f32 %v4132, %v4172
      %v4181 = vmax.f32 %v4133, %v4173
      %v4182 = vmax.f32 %v4134, %v4174
      %v4183 = vmax.f32 %v4135, %v4175
      %v4184 = vmax.f32 %v4136, %v4176
      %v4185 = vpack.c.bf16 %v4178, %v4177
      %v4186 = vpack.c.bf16 %v4180, %v4179
      %v4187 = vpack.c.bf16 %v4182, %v4181
      %v4188 = vpack.c.bf16 %v4184, %v4183
      %v4193 = vunpack.c.l.b16 %v4185
      %v4194 = vunpack.c.h.b16 %v4185
      %v4195 = vunpack.c.l.b16 %v4186
      %v4196 = vunpack.c.h.b16 %v4186
      %v4197 = vunpack.c.l.b16 %v4187
      %v4198 = vunpack.c.h.b16 %v4187
      %v4199 = vunpack.c.l.b16 %v4188
      %v4200 = vunpack.c.h.b16 %v4188
      %v4201 = vpack.c.b16 %v4193, %v4193
      %v4202 = vpack.c.b16 %v4194, %v4194
      %v4203 = vpack.c.b16 %v4195, %v4195
      %v4204 = vpack.c.b16 %v4196, %v4196
      %v4205 = vpack.c.b16 %v4197, %v4197
      %v4206 = vpack.c.b16 %v4198, %v4198
      %v4207 = vpack.c.b16 %v4199, %v4199
      %v4208 = vpack.c.b16 %v4200, %v4200
      %vm4217 = vcmask 519168
      %4218 = vst.msk [vmem:[%s251] sm:$0xf] %vm4217, %v4201
      %4219 = vst.msk [vmem:[%s251 + $0x4] sm:$0xf] %vm4217, %v4202
      %4220 = vst.msk [vmem:[%s251 + $0x8] sm:$0xf] %vm4217, %v4203
      %4221 = vst.msk [vmem:[%s251 + $0xc] sm:$0xf] %vm4217, %v4204
      %4222 = vst.msk [vmem:[%s251 + $0x10] sm:$0xf] %vm4217, %v4205
      %4223 = vst.msk [vmem:[%s251 + $0x14] sm:$0xf] %vm4217, %v4206
      %4224 = vst.msk [vmem:[%s251 + $0x18] sm:$0xf] %vm4217, %v4207
      %4225 = vst.msk [vmem:[%s251 + $0x1c] sm:$0xf] %vm4217, %v4208
      %p4226 = scmp.lt.s32.totalorder %s17, 1
      %s4227 = scalar_select %p4226, %s17, 1
      %s4228 = smul.addr %s4227, 8
      %s4229 = smul.addr %s4228, 4
      %s4230 = scalar_lea.vmem %s6, %s4229
      // Predicated region
      $region45: #{mynet_forward.2} parent=43 // pred_check
        %p4231 = pneg %p166
      $region46: #{mynet_forward.2} parent=43 // pred_check_branch
        %4233 = sbr.rel (%p4231) target = $region48
      $region47: #{mynet_forward.2} parent=43 // pred_region
        _
      $region48: #{mynet_forward.2} parent=43 // pred_fallthru
        _
    $region44: #{mynet_forward.2} parent=5 // pred_fallthru
      _
    %p4234 = scmp.le.s32.totalorder 2, %s12
    // Predicated region
    $region49: #{mynet_forward.2} parent=5 // pred_check
      %p4235 = pneg %p4234
    $region50: #{mynet_forward.2} parent=5 // pred_check_branch
      %4237 = sbr.rel (%p4235) target = $region52
    $region51: #{mynet_forward.2} parent=5 // pred_region
      %s4238 = ssub.s32 %s12, 2
      // Predicated region
      $region53: #{mynet_forward.2} parent=51 // pred_check
        %p4239 = pneg %p172
      $region54: #{mynet_forward.2} parent=51 // pred_check_branch
        %4241 = sbr.rel (%p4239) target = $region56
      $region55: #{mynet_forward.2} parent=51 // pred_region
        %p4242 = scmp.lt.s32.totalorder %s18, 1
        %s4243 = scalar_select %p4242, %s18, 1
        %s4244 = smul.addr %s4243, 8
        %s4245 = smul.addr %s4244, 4
        %s4246 = scalar_lea.vmem %s6, %s4245
      $region56: #{mynet_forward.2} parent=51 // pred_fallthru
        _
    $region52: #{mynet_forward.2} parent=5 // pred_fallthru
      _
  $region6: #{mynet_forward.2} parent=0 // loop_footer
    %s16 = sadd.s32 1, %s12
  $region7: #{mynet_forward.2} parent=0 // loop_footer_branch
    %11 = sbr.rel target = $region3
  $region8: #{mynet_forward.2} parent=0 // loop_exit
    _

</llo_original>
